<compile_context>
chip_gen: v6e
topology: v6e:2x2x1
jax: 0.10.0
libtpu: 0.0.40
codegen_flags: <defaults>
</compile_context>

<pallas_src>
import jax
import jax.numpy as jnp
from jax.experimental import pallas as pl
from jax.experimental.pallas import tpu as pltpu


# ----------------------------------------------------------------------------
# Fused bidirectional LSTM recurrence kernel (both directions of one pBLSTM).
# The x @ W_ih + b part is precomputed in XLA and streamed in per step.
# ----------------------------------------------------------------------------
def _bilstm_kernel(gx_ref, whh_ref, out_ref, h_ref, c_ref):
    t = pl.program_id(1)

    @pl.when(t == 0)
    def _():
        h_ref[...] = jnp.zeros_like(h_ref)
        c_ref[...] = jnp.zeros_like(c_ref)

    H = h_ref.shape[-1]
    gates = gx_ref[0, 0] + jnp.dot(h_ref[...], whh_ref[0],
                                   preferred_element_type=jnp.float32)   # (B, 4H)
    i = jax.nn.sigmoid(gates[:, 0 * H:1 * H])
    f = jax.nn.sigmoid(gates[:, 1 * H:2 * H])
    g = jnp.tanh(gates[:, 2 * H:3 * H])
    o = jax.nn.sigmoid(gates[:, 3 * H:4 * H])
    c_new = f * c_ref[...] + i * g
    h_new = o * jnp.tanh(c_new)
    c_ref[...] = c_new
    h_ref[...] = h_new
    out_ref[0, 0] = h_new


def _bilstm_recurrence(gates, whh):
    """gates: (2, T, B, 4H) precomputed x@Wih+b per direction (original time
    order); whh: (2, H, 4H).  Returns hidden states (2, T, B, H) with both
    directions stored in original time order."""
    _, T, B, G = gates.shape
    H = whh.shape[1]

    def io_map(d, t):
        # direction 0: step t <-> time t;  direction 1: step t <-> time T-1-t.
        return (d, d * (T - 1) + (1 - 2 * d) * t, 0, 0)

    return pl.pallas_call(
        _bilstm_kernel,
        out_shape=jax.ShapeDtypeStruct((2, T, B, H), jnp.float32),
        grid=(2, T),
        in_specs=[
            pl.BlockSpec((1, 1, B, G), io_map),
            pl.BlockSpec((1, H, G), lambda d, t: (d, 0, 0)),
        ],
        out_specs=pl.BlockSpec((1, 1, B, H), io_map),
        scratch_shapes=[pltpu.VMEM((B, H), jnp.float32),
                        pltpu.VMEM((B, H), jnp.float32)],
        compiler_params=pltpu.CompilerParams(
            dimension_semantics=("parallel", "arbitrary")),
    )(gates, whh)


def pblstm_layer(x_btd, p):
    """pBLSTMLayer: (B, T, D) -> (B, T//2, 2H). Halves time, doubles features,
    then a bidirectional LSTM (dropout inactive: num_layers=1)."""
    B, T, D = x_btd.shape
    T2 = T // 2
    H = p["whh_f"].shape[1]
    x_tbd = jnp.transpose(x_btd.reshape(B, T2, 2 * D), (1, 0, 2))    # (T2, B, 2D)
    x2d = x_tbd.reshape(T2 * B, 2 * D)
    # Hoisted input-to-hidden matmuls: one big parallel matmul per direction.
    gx_f = (x2d @ p["wih_f"].T + p["b_f"]).reshape(T2, B, 4 * H)
    gx_b = (x2d @ p["wih_b"].T + p["b_b"]).reshape(T2, B, 4 * H)
    gates = jnp.stack([gx_f, gx_b], axis=0)                          # (2, T2, B, 4H)
    whh = jnp.stack([p["whh_f"].T, p["whh_b"].T], axis=0)            # (2, H, 4H)
    out = _bilstm_recurrence(gates, whh)                             # (2, T2, B, H)
    out = jnp.concatenate([out[0], out[1]], axis=-1)                 # (T2, B, 2H)
    return jnp.transpose(out, (1, 0, 2))                             # (B, T2, 2H)


# ----------------------------------------------------------------------------
# Speller2 decode kernel: attention + 2 LSTMCells + fused output heads / step.
# ----------------------------------------------------------------------------
def _speller_kernel(yg_ref, hproj_ref,
                    ws_ref, bs_ref, wfc_ref, bfc_ref,
                    wih0c_ref, whh0_ref,
                    wih1_ref, whh1_ref, b1_ref,
                    wouth_ref, woutc_ref, bout_ref,
                    out_ref,
                    h0_ref, c0_ref, h1_ref, c1_ref):
    step = pl.program_id(0)

    @pl.when(step == 0)
    def _():
        h0_ref[...] = jnp.zeros_like(h0_ref)
        c0_ref[...] = jnp.zeros_like(c0_ref)
        h1_ref[...] = jnp.zeros_like(h1_ref)
        c1_ref[...] = jnp.zeros_like(c1_ref)

    H = h0_ref.shape[-1]
    hproj = hproj_ref[...]                                           # (B, Tf, Dm)

    # AttentionBlock: query = s_matrix(previous top hidden); keys/vals = hproj.
    s = (jnp.dot(h1_ref[...], ws_ref[...], preferred_element_type=jnp.float32)
         + bs_ref[...])                                              # (B, Dm)
    scores = jnp.einsum('bqd,bkd->bqk', s[:, None, :], hproj,
                        preferred_element_type=jnp.float32)          # (B, 1, Tf)
    scores = scores - jnp.max(scores, axis=-1, keepdims=True)
    e = jnp.exp(scores)
    attn = e * pl.reciprocal(jnp.sum(e, axis=-1, keepdims=True), approx=True)
    ctx = jnp.einsum('bqk,bkd->bqd', attn, hproj,
                     preferred_element_type=jnp.float32)[:, 0, :]    # (B, Dm)
    ctx = (jnp.dot(ctx, wfc_ref[...], preferred_element_type=jnp.float32)
           + bfc_ref[...])                                           # fc1

    def gates_to_hc(gates, c_prev):
        i = jax.nn.sigmoid(gates[:, 0 * H:1 * H])
        f = jax.nn.sigmoid(gates[:, 1 * H:2 * H])
        g = jnp.tanh(gates[:, 2 * H:3 * H])
        o = jax.nn.sigmoid(gates[:, 3 * H:4 * H])
        c_new = f * c_prev + i * g
        return o * jnp.tanh(c_new), c_new

    # LSTMCell 0: input = concat([y_t, ctx]) expressed as split matmuls; the
    # y_t-half (+ bias) was hoisted out of the loop into yg_ref.
    gates0 = (yg_ref[0]
              + jnp.dot(ctx, wih0c_ref[...], preferred_element_type=jnp.float32)
              + jnp.dot(h0_ref[...], whh0_ref[...], preferred_element_type=jnp.float32))
    h0, c0 = gates_to_hc(gates0, c0_ref[...])
    # LSTMCell 1: input = new h0.
    gates1 = (jnp.dot(h0, wih1_ref[...], preferred_element_type=jnp.float32)
              + jnp.dot(h1_ref[...], whh1_ref[...], preferred_element_type=jnp.float32)
              + b1_ref[...])
    h1, c1 = gates_to_hc(gates1, c1_ref[...])
    h0_ref[...] = h0
    c0_ref[...] = c0
    h1_ref[...] = h1
    c1_ref[...] = c1

    # Both output heads fused into one lane-dense 128-padded projection of
    # concat([h1, ctx]) (split matmuls, single full-vreg store).
    out_ref[0] = (jnp.dot(h1, wouth_ref[...], preferred_element_type=jnp.float32)
                  + jnp.dot(ctx, woutc_ref[...], preferred_element_type=jnp.float32)
                  + bout_ref[...])


def speller_forward(sp, listener_feature, trg):
    """Speller2 teacher-forcing decode.  listener_feature: (B, Tf, 2H);
    trg: (B, L) int32.  Returns (logits1 (B, L, C1), logits2 (B, L, C2))."""
    B, Tf, Feat = listener_feature.shape
    L = trg.shape[1]
    H = sp["whh0"].shape[1]
    Dm = sp["ws"].shape[0]
    E = sp["embed"].shape[1]
    C1 = sp["wout1"].shape[0]
    C2 = sp["wout2"].shape[0]
    Cpad = ((C1 + C2 + 127) // 128) * 128

    # Embedding lookup + hoisted y-half of the cell-0 gates (step-independent).
    y_emb = jnp.take(sp["embed"], trg, axis=0)                       # (B, L, E)
    wih0_y = sp["wih0"][:, :E]                                       # (4H, E)
    wih0_c = sp["wih0"][:, E:]                                       # (4H, Dm)
    ygates = (y_emb.reshape(B * L, E) @ wih0_y.T + sp["b0"]).reshape(B, L, 4 * H)
    ygates = jnp.transpose(ygates, (1, 0, 2))                        # (L, B, 4H)

    # Hoisted h_matrix projection of listener features (step-invariant).
    hproj = (listener_feature.reshape(B * Tf, Feat) @ sp["wh"].T
             + sp["bh"]).reshape(B, Tf, Dm)

    # Fuse the two heads and pad to a lane-dense 128-wide logits slab.
    wout = jnp.concatenate([sp["wout1"], sp["wout2"]], axis=0)       # (C1+C2, H+Dm)
    bout = jnp.concatenate([sp["bout1"], sp["bout2"]], axis=0)       # (C1+C2,)
    wout = jnp.pad(wout, ((0, Cpad - (C1 + C2)), (0, 0)))
    bout = jnp.pad(bout, (0, Cpad - (C1 + C2)))
    wout_h = wout[:, :H].T                                           # (H, Cpad)
    wout_c = wout[:, H:].T                                           # (Dm, Cpad)

    logits = pl.pallas_call(
        _speller_kernel,
        out_shape=jax.ShapeDtypeStruct((L, B, Cpad), jnp.float32),
        grid=(L,),
        in_specs=[
            pl.BlockSpec((1, B, 4 * H), lambda s: (s, 0, 0)),        # hoisted y-gates
            pl.BlockSpec((B, Tf, Dm), lambda s: (0, 0, 0)),          # hproj (resident)
            pl.BlockSpec((H, Dm), lambda s: (0, 0)),                 # s_matrix W
            pl.BlockSpec((1, Dm), lambda s: (0, 0)),
            pl.BlockSpec((Dm, Dm), lambda s: (0, 0)),                # fc1 W
            pl.BlockSpec((1, Dm), lambda s: (0, 0)),
            pl.BlockSpec((Dm, 4 * H), lambda s: (0, 0)),             # wih0 ctx half
            pl.BlockSpec((H, 4 * H), lambda s: (0, 0)),              # whh0
            pl.BlockSpec((H, 4 * H), lambda s: (0, 0)),              # wih1
            pl.BlockSpec((H, 4 * H), lambda s: (0, 0)),              # whh1
            pl.BlockSpec((1, 4 * H), lambda s: (0, 0)),
            pl.BlockSpec((H, Cpad), lambda s: (0, 0)),               # heads, h1 half
            pl.BlockSpec((Dm, Cpad), lambda s: (0, 0)),              # heads, ctx half
            pl.BlockSpec((1, Cpad), lambda s: (0, 0)),
        ],
        out_specs=pl.BlockSpec((1, B, Cpad), lambda s: (s, 0, 0)),
        scratch_shapes=[pltpu.VMEM((B, H), jnp.float32) for _ in range(4)],
        compiler_params=pltpu.CompilerParams(dimension_semantics=("arbitrary",)),
    )(ygates, hproj,
      sp["ws"].T, sp["bs"].reshape(1, Dm),
      sp["wfc"].T, sp["bfc"].reshape(1, Dm),
      wih0_c.T, sp["whh0"].T,
      sp["wih1"].T, sp["whh1"].T, sp["b1"].reshape(1, 4 * H),
      wout_h, wout_c, bout.reshape(1, Cpad))

    logits = jnp.transpose(logits, (1, 0, 2))                        # (B, L, Cpad)
    return logits[..., :C1], logits[..., C1:C1 + C2]


# ----------------------------------------------------------------------------
# Full puncLAS2 forward (teacher forcing, infer=False).
# ----------------------------------------------------------------------------
@jax.jit
def punc_las_forward(params, x_tokens, trg_input, trg_input2):
    # trg_input2 is unused by the reference forward (Speller2 decodes from
    # trg_input only and applies both output heads to the same states).
    del trg_input2
    B = x_tokens.shape[0]
    Bp = ((B + 7) // 8) * 8                          # pad batch to fill sublanes
    if Bp != B:
        x_tokens = jnp.pad(x_tokens, ((0, Bp - B), (0, 0)))
        trg_input = jnp.pad(trg_input, ((0, Bp - B), (0, 0)))
    x = jnp.take(params["embed"], x_tokens, axis=0)                  # (Bp, T, E)
    x = pblstm_layer(x, params["l1"])
    x = pblstm_layer(x, params["l2"])
    x = pblstm_layer(x, params["l3"])                                # (Bp, T//8, 2H)
    x1, x2 = speller_forward(params["sp"], x, trg_input)
    return x1[:B], x2[:B]


# ----------------------------------------------------------------------------
# Deterministic synthetic parameter initialization.
# (PyTorch LSTM/LSTMCell has b_ih and b_hh; a single bias per cell here
#  corresponds to their sum — sum the two biases in glue for real checkpoints.)
# ----------------------------------------------------------------------------
def init_params(key, vocab, E, H, C1, C2, d_model=64):
    keys = iter(jax.random.split(key, 48))

    def nrm(shape, scale=0.1):
        return jax.random.normal(next(keys), shape, dtype=jnp.float32) * scale

    def blstm(din):  # din = LSTM input size (already time-concat doubled)
        return {
            "wih_f": nrm((4 * H, din)), "whh_f": nrm((4 * H, H)), "b_f": nrm((4 * H,)),
            "wih_b": nrm((4 * H, din)), "whh_b": nrm((4 * H, H)), "b_b": nrm((4 * H,)),
        }

    E_sp = H  # puncLAS2 passes embed_dim = listener_hidden_size to Speller2
    sp = {
        "embed": nrm((C1, E_sp)),
        "ws": nrm((d_model, H)), "bs": nrm((d_model,)),
        "wh": nrm((d_model, 2 * H)), "bh": nrm((d_model,)),
        "wfc": nrm((d_model, d_model)), "bfc": nrm((d_model,)),
        "wih0": nrm((4 * H, E_sp + d_model)), "whh0": nrm((4 * H, H)), "b0": nrm((4 * H,)),
        "wih1": nrm((4 * H, H)), "whh1": nrm((4 * H, H)), "b1": nrm((4 * H,)),
        "wout1": nrm((C1, H + d_model)), "bout1": nrm((C1,)),
        "wout2": nrm((C2, H + d_model)), "bout2": nrm((C2,)),
    }
    return {
        "embed": nrm((vocab, E)),
        "l1": blstm(2 * E),
        "l2": blstm(4 * H),
        "l3": blstm(4 * H),
        "sp": sp,
    }


if __name__ == "__main__":
    VOCAB, E, H = 50, 16, 32
    C1, C2 = 10, 7
    B, T, L = 2, 32, 8               # T must be divisible by 8 (3 pyramid layers)

    root = jax.random.PRNGKey(0)
    kp, kx, k1, k2 = jax.random.split(root, 4)

    params = init_params(kp, VOCAB, E, H, C1, C2)
    x_tokens = jax.random.randint(kx, (B, T), 0, VOCAB, dtype=jnp.int32)
    trg1 = jax.random.randint(k1, (B, L), 0, C1, dtype=jnp.int32)
    trg2 = jax.random.randint(k2, (B, L), 0, C2, dtype=jnp.int32)  # unused (matches reference)

    x1, x2 = punc_las_forward(params, x_tokens, trg1, trg2)
    jax.block_until_ready((x1, x2))

    assert x1.shape == (B, L, C1), x1.shape
    assert x2.shape == (B, L, C2), x2.shape
    assert bool(jnp.all(jnp.isfinite(x1))) and bool(jnp.all(jnp.isfinite(x2)))
    print("KERNEL_OK")
</pallas_src>

<mosaic_0001>
module attributes {stable_mosaic.version = 11 : i64} {
  func.func @_bilstm_kernel(%arg0: i32, %arg1: i32, %arg2: memref<1x1x8x128xf32, #tpu.memory_space<vmem>>, %arg3: memref<1x32x128xf32, #tpu.memory_space<vmem>>, %arg4: memref<1x1x8x32xf32, #tpu.memory_space<vmem>>, %arg5: memref<8x32xf32, #tpu.memory_space<vmem>>, %arg6: memref<8x32xf32, #tpu.memory_space<vmem>>) attributes {dimension_semantics = [#tpu.dimension_semantics<parallel>, #tpu.dimension_semantics<arbitrary>], iteration_bounds = array<i64: 2, 16>, scalar_prefetch = 0 : i64, scratch_operands = 2 : i64, tpu.core_type = #tpu.core_type<tc>, window_params = [{transform_indices = @transform_0, window_bounds = array<i64: 1, 1, 8, 128>}, {transform_indices = @transform_1, window_bounds = array<i64: 1, 32, 128>}, {transform_indices = @transform_2, window_bounds = array<i64: 1, 1, 8, 32>}]} {
    %c0_i32 = arith.constant 0 : i32
    %0 = arith.cmpi eq, %arg1, %c0_i32 : i32
    %1 = arith.extui %0 : i1 to i32
    %c0_i32_0 = arith.constant 0 : i32
    %2 = arith.cmpi ne, %1, %c0_i32_0 : i32
    scf.if %2 {
      %cst_22 = arith.constant 0.000000e+00 : f32
      %41 = vector.broadcast %cst_22 : f32 to vector<8x32xf32>
      %c0_23 = arith.constant 0 : index
      %c0_24 = arith.constant 0 : index
      %42 = vector.load %arg5[%c0_23, %c0_24] : memref<8x32xf32, #tpu.memory_space<vmem>>, vector<8x32xf32>
      tpu.vector_store %arg5[%c0_23, %c0_24], %41 {strides = array<i32>} : memref<8x32xf32, #tpu.memory_space<vmem>>, vector<8x32xf32>,
      %cst_25 = arith.constant 0.000000e+00 : f32
      %43 = vector.broadcast %cst_25 : f32 to vector<8x32xf32>
      %c0_26 = arith.constant 0 : index
      %c0_27 = arith.constant 0 : index
      %44 = vector.load %arg6[%c0_26, %c0_27] : memref<8x32xf32, #tpu.memory_space<vmem>>, vector<8x32xf32>
      tpu.vector_store %arg6[%c0_26, %c0_27], %43 {strides = array<i32>} : memref<8x32xf32, #tpu.memory_space<vmem>>, vector<8x32xf32>,
    } else {
    }
    %c0 = arith.constant 0 : index
    %c0_1 = arith.constant 0 : index
    %c0_2 = arith.constant 0 : index
    %c0_3 = arith.constant 0 : index
    %3 = vector.load %arg2[%c0, %c0_1, %c0_2, %c0_3] : memref<1x1x8x128xf32, #tpu.memory_space<vmem>>, vector<1x1x8x128xf32>
    %4 = vector.shape_cast %3 : vector<1x1x8x128xf32> to vector<8x128xf32>
    %c0_4 = arith.constant 0 : index
    %c0_5 = arith.constant 0 : index
    %5 = vector.load %arg5[%c0_4, %c0_5] : memref<8x32xf32, #tpu.memory_space<vmem>>, vector<8x32xf32>
    %c0_6 = arith.constant 0 : index
    %c0_7 = arith.constant 0 : index
    %c0_8 = arith.constant 0 : index
    %6 = vector.load %arg3[%c0_6, %c0_7, %c0_8] : memref<1x32x128xf32, #tpu.memory_space<vmem>>, vector<1x32x128xf32>
    %7 = vector.shape_cast %6 : vector<1x32x128xf32> to vector<32x128xf32>
    %cst = arith.constant dense<0.000000e+00> : vector<8x128xf32>
    %8 = tpu.matmul %5, %7, %cst {dimension_numbers = #tpu.dot_dimension_numbers<[1], [0], [0], [1], [0, 0, 1, 1], [], []>} : vector<8x32xf32>, vector<32x128xf32>, vector<8x128xf32> -> vector<8x128xf32>
    %9 = arith.addf %4, %8 : vector<8x128xf32>
    %10 = vector.extract_strided_slice %9 {offsets = [0, 0], sizes = [8, 32], strides = [1, 1]} : vector<8x128xf32> to vector<8x32xf32>
    %11 = arith.negf %10 : vector<8x32xf32>
    %12 = math.exp %11 : vector<8x32xf32>
    %cst_9 = arith.constant 1.000000e+00 : f32
    %13 = vector.broadcast %cst_9 : f32 to vector<8x32xf32>
    %14 = arith.addf %13, %12 : vector<8x32xf32>
    %15 = arith.divf %13, %14 : vector<8x32xf32>
    %16 = vector.extract_strided_slice %9 {offsets = [0, 32], sizes = [8, 32], strides = [1, 1]} : vector<8x128xf32> to vector<8x32xf32>
    %17 = arith.negf %16 : vector<8x32xf32>
    %18 = math.exp %17 : vector<8x32xf32>
    %cst_10 = arith.constant 1.000000e+00 : f32
    %19 = vector.broadcast %cst_10 : f32 to vector<8x32xf32>
    %20 = arith.addf %19, %18 : vector<8x32xf32>
    %21 = arith.divf %19, %20 : vector<8x32xf32>
    %22 = vector.extract_strided_slice %9 {offsets = [0, 64], sizes = [8, 32], strides = [1, 1]} : vector<8x128xf32> to vector<8x32xf32>
    %23 = math.tanh %22 : vector<8x32xf32>
    %24 = vector.extract_strided_slice %9 {offsets = [0, 96], sizes = [8, 32], strides = [1, 1]} : vector<8x128xf32> to vector<8x32xf32>
    %25 = arith.negf %24 : vector<8x32xf32>
    %26 = math.exp %25 : vector<8x32xf32>
    %cst_11 = arith.constant 1.000000e+00 : f32
    %27 = vector.broadcast %cst_11 : f32 to vector<8x32xf32>
    %28 = arith.addf %27, %26 : vector<8x32xf32>
    %29 = arith.divf %27, %28 : vector<8x32xf32>
    %c0_12 = arith.constant 0 : index
    %c0_13 = arith.constant 0 : index
    %30 = vector.load %arg6[%c0_12, %c0_13] : memref<8x32xf32, #tpu.memory_space<vmem>>, vector<8x32xf32>
    %31 = arith.mulf %21, %30 : vector<8x32xf32>
    %32 = arith.mulf %15, %23 : vector<8x32xf32>
    %33 = arith.addf %31, %32 : vector<8x32xf32>
    %34 = math.tanh %33 : vector<8x32xf32>
    %35 = arith.mulf %29, %34 : vector<8x32xf32>
    %c0_14 = arith.constant 0 : index
    %c0_15 = arith.constant 0 : index
    %36 = vector.load %arg6[%c0_14, %c0_15] : memref<8x32xf32, #tpu.memory_space<vmem>>, vector<8x32xf32>
    tpu.vector_store %arg6[%c0_14, %c0_15], %33 {strides = array<i32>} : memref<8x32xf32, #tpu.memory_space<vmem>>, vector<8x32xf32>,
    %c0_16 = arith.constant 0 : index
    %c0_17 = arith.constant 0 : index
    %37 = vector.load %arg5[%c0_16, %c0_17] : memref<8x32xf32, #tpu.memory_space<vmem>>, vector<8x32xf32>
    tpu.vector_store %arg5[%c0_16, %c0_17], %35 {strides = array<i32>} : memref<8x32xf32, #tpu.memory_space<vmem>>, vector<8x32xf32>,
    %c0_18 = arith.constant 0 : index
    %c0_19 = arith.constant 0 : index
    %c0_20 = arith.constant 0 : index
    %c0_21 = arith.constant 0 : index
    %38 = vector.load %arg4[%c0_18, %c0_19, %c0_20, %c0_21] : memref<1x1x8x32xf32, #tpu.memory_space<vmem>>, vector<1x1x8x32xf32>
    %39 = vector.shape_cast %38 : vector<1x1x8x32xf32> to vector<8x32xf32>
    %40 = vector.shape_cast %35 : vector<8x32xf32> to vector<1x1x8x32xf32>
    tpu.vector_store %arg4[%c0_18, %c0_19, %c0_20, %c0_21], %40 {strides = array<i32>} : memref<1x1x8x32xf32, #tpu.memory_space<vmem>>, vector<1x1x8x32xf32>,
    return
  }
  func.func @transform_0(%arg0: i32, %arg1: i32) -> (i32, i32, i32, i32) {
    %c15_i32 = arith.constant 15 : i32
    %0 = arith.muli %arg0, %c15_i32 : i32
    %c2_i32 = arith.constant 2 : i32
    %1 = arith.muli %c2_i32, %arg0 : i32
    %c1_i32 = arith.constant 1 : i32
    %2 = arith.subi %c1_i32, %1 : i32
    %3 = arith.muli %2, %arg1 : i32
    %4 = arith.addi %0, %3 : i32
    %c0_i32 = arith.constant 0 : i32
    %c0_i32_0 = arith.constant 0 : i32
    %c0_i32_1 = arith.constant 0 : i32
    return %arg0, %4, %c0_i32, %c0_i32_0 : i32, i32, i32, i32
  }
  func.func @transform_1(%arg0: i32, %arg1: i32) -> (i32, i32, i32) {
    %c0_i32 = arith.constant 0 : i32
    %c0_i32_0 = arith.constant 0 : i32
    %c0_i32_1 = arith.constant 0 : i32
    return %arg0, %c0_i32, %c0_i32_0 : i32, i32, i32
  }
  func.func @transform_2(%arg0: i32, %arg1: i32) -> (i32, i32, i32, i32) {
    %c15_i32 = arith.constant 15 : i32
    %0 = arith.muli %arg0, %c15_i32 : i32
    %c2_i32 = arith.constant 2 : i32
    %1 = arith.muli %c2_i32, %arg0 : i32
    %c1_i32 = arith.constant 1 : i32
    %2 = arith.subi %c1_i32, %1 : i32
    %3 = arith.muli %2, %arg1 : i32
    %4 = arith.addi %0, %3 : i32
    %c0_i32 = arith.constant 0 : i32
    %c0_i32_0 = arith.constant 0 : i32
    %c0_i32_1 = arith.constant 0 : i32
    return %arg0, %4, %c0_i32, %c0_i32_0 : i32, i32, i32, i32
  }
}

module attributes {stable_mosaic.version = 11 : i64} {
  func.func @_bilstm_kernel(%arg0: i32, %arg1: i32, %arg2: memref<1x1x8x128xf32, #tpu.memory_space<vmem>>, %arg3: memref<1x32x128xf32, #tpu.memory_space<vmem>>, %arg4: memref<1x1x8x32xf32, #tpu.memory_space<vmem>>, %arg5: memref<8x32xf32, #tpu.memory_space<vmem>>, %arg6: memref<8x32xf32, #tpu.memory_space<vmem>>) attributes {dimension_semantics = [#tpu.dimension_semantics<parallel>, #tpu.dimension_semantics<arbitrary>], iteration_bounds = array<i64: 2, 8>, scalar_prefetch = 0 : i64, scratch_operands = 2 : i64, tpu.core_type = #tpu.core_type<tc>, window_params = [{transform_indices = @transform_0, window_bounds = array<i64: 1, 1, 8, 128>}, {transform_indices = @transform_1, window_bounds = array<i64: 1, 32, 128>}, {transform_indices = @transform_2, window_bounds = array<i64: 1, 1, 8, 32>}]} {
    %c0_i32 = arith.constant 0 : i32
    %0 = arith.cmpi eq, %arg1, %c0_i32 : i32
    %1 = arith.extui %0 : i1 to i32
    %c0_i32_0 = arith.constant 0 : i32
    %2 = arith.cmpi ne, %1, %c0_i32_0 : i32
    scf.if %2 {
      %cst_22 = arith.constant 0.000000e+00 : f32
      %41 = vector.broadcast %cst_22 : f32 to vector<8x32xf32>
      %c0_23 = arith.constant 0 : index
      %c0_24 = arith.constant 0 : index
      %42 = vector.load %arg5[%c0_23, %c0_24] : memref<8x32xf32, #tpu.memory_space<vmem>>, vector<8x32xf32>
      tpu.vector_store %arg5[%c0_23, %c0_24], %41 {strides = array<i32>} : memref<8x32xf32, #tpu.memory_space<vmem>>, vector<8x32xf32>,
      %cst_25 = arith.constant 0.000000e+00 : f32
      %43 = vector.broadcast %cst_25 : f32 to vector<8x32xf32>
      %c0_26 = arith.constant 0 : index
      %c0_27 = arith.constant 0 : index
      %44 = vector.load %arg6[%c0_26, %c0_27] : memref<8x32xf32, #tpu.memory_space<vmem>>, vector<8x32xf32>
      tpu.vector_store %arg6[%c0_26, %c0_27], %43 {strides = array<i32>} : memref<8x32xf32, #tpu.memory_space<vmem>>, vector<8x32xf32>,
    } else {
    }
    %c0 = arith.constant 0 : index
    %c0_1 = arith.constant 0 : index
    %c0_2 = arith.constant 0 : index
    %c0_3 = arith.constant 0 : index
    %3 = vector.load %arg2[%c0, %c0_1, %c0_2, %c0_3] : memref<1x1x8x128xf32, #tpu.memory_space<vmem>>, vector<1x1x8x128xf32>
    %4 = vector.shape_cast %3 : vector<1x1x8x128xf32> to vector<8x128xf32>
    %c0_4 = arith.constant 0 : index
    %c0_5 = arith.constant 0 : index
    %5 = vector.load %arg5[%c0_4, %c0_5] : memref<8x32xf32, #tpu.memory_space<vmem>>, vector<8x32xf32>
    %c0_6 = arith.constant 0 : index
    %c0_7 = arith.constant 0 : index
    %c0_8 = arith.constant 0 : index
    %6 = vector.load %arg3[%c0_6, %c0_7, %c0_8] : memref<1x32x128xf32, #tpu.memory_space<vmem>>, vector<1x32x128xf32>
    %7 = vector.shape_cast %6 : vector<1x32x128xf32> to vector<32x128xf32>
    %cst = arith.constant dense<0.000000e+00> : vector<8x128xf32>
    %8 = tpu.matmul %5, %7, %cst {dimension_numbers = #tpu.dot_dimension_numbers<[1], [0], [0], [1], [0, 0, 1, 1], [], []>} : vector<8x32xf32>, vector<32x128xf32>, vector<8x128xf32> -> vector<8x128xf32>
    %9 = arith.addf %4, %8 : vector<8x128xf32>
    %10 = vector.extract_strided_slice %9 {offsets = [0, 0], sizes = [8, 32], strides = [1, 1]} : vector<8x128xf32> to vector<8x32xf32>
    %11 = arith.negf %10 : vector<8x32xf32>
    %12 = math.exp %11 : vector<8x32xf32>
    %cst_9 = arith.constant 1.000000e+00 : f32
    %13 = vector.broadcast %cst_9 : f32 to vector<8x32xf32>
    %14 = arith.addf %13, %12 : vector<8x32xf32>
    %15 = arith.divf %13, %14 : vector<8x32xf32>
    %16 = vector.extract_strided_slice %9 {offsets = [0, 32], sizes = [8, 32], strides = [1, 1]} : vector<8x128xf32> to vector<8x32xf32>
    %17 = arith.negf %16 : vector<8x32xf32>
    %18 = math.exp %17 : vector<8x32xf32>
    %cst_10 = arith.constant 1.000000e+00 : f32
    %19 = vector.broadcast %cst_10 : f32 to vector<8x32xf32>
    %20 = arith.addf %19, %18 : vector<8x32xf32>
    %21 = arith.divf %19, %20 : vector<8x32xf32>
    %22 = vector.extract_strided_slice %9 {offsets = [0, 64], sizes = [8, 32], strides = [1, 1]} : vector<8x128xf32> to vector<8x32xf32>
    %23 = math.tanh %22 : vector<8x32xf32>
    %24 = vector.extract_strided_slice %9 {offsets = [0, 96], sizes = [8, 32], strides = [1, 1]} : vector<8x128xf32> to vector<8x32xf32>
    %25 = arith.negf %24 : vector<8x32xf32>
    %26 = math.exp %25 : vector<8x32xf32>
    %cst_11 = arith.constant 1.000000e+00 : f32
    %27 = vector.broadcast %cst_11 : f32 to vector<8x32xf32>
    %28 = arith.addf %27, %26 : vector<8x32xf32>
    %29 = arith.divf %27, %28 : vector<8x32xf32>
    %c0_12 = arith.constant 0 : index
    %c0_13 = arith.constant 0 : index
    %30 = vector.load %arg6[%c0_12, %c0_13] : memref<8x32xf32, #tpu.memory_space<vmem>>, vector<8x32xf32>
    %31 = arith.mulf %21, %30 : vector<8x32xf32>
    %32 = arith.mulf %15, %23 : vector<8x32xf32>
    %33 = arith.addf %31, %32 : vector<8x32xf32>
    %34 = math.tanh %33 : vector<8x32xf32>
    %35 = arith.mulf %29, %34 : vector<8x32xf32>
    %c0_14 = arith.constant 0 : index
    %c0_15 = arith.constant 0 : index
    %36 = vector.load %arg6[%c0_14, %c0_15] : memref<8x32xf32, #tpu.memory_space<vmem>>, vector<8x32xf32>
    tpu.vector_store %arg6[%c0_14, %c0_15], %33 {strides = array<i32>} : memref<8x32xf32, #tpu.memory_space<vmem>>, vector<8x32xf32>,
    %c0_16 = arith.constant 0 : index
    %c0_17 = arith.constant 0 : index
    %37 = vector.load %arg5[%c0_16, %c0_17] : memref<8x32xf32, #tpu.memory_space<vmem>>, vector<8x32xf32>
    tpu.vector_store %arg5[%c0_16, %c0_17], %35 {strides = array<i32>} : memref<8x32xf32, #tpu.memory_space<vmem>>, vector<8x32xf32>,
    %c0_18 = arith.constant 0 : index
    %c0_19 = arith.constant 0 : index
    %c0_20 = arith.constant 0 : index
    %c0_21 = arith.constant 0 : index
    %38 = vector.load %arg4[%c0_18, %c0_19, %c0_20, %c0_21] : memref<1x1x8x32xf32, #tpu.memory_space<vmem>>, vector<1x1x8x32xf32>
    %39 = vector.shape_cast %38 : vector<1x1x8x32xf32> to vector<8x32xf32>
    %40 = vector.shape_cast %35 : vector<8x32xf32> to vector<1x1x8x32xf32>
    tpu.vector_store %arg4[%c0_18, %c0_19, %c0_20, %c0_21], %40 {strides = array<i32>} : memref<1x1x8x32xf32, #tpu.memory_space<vmem>>, vector<1x1x8x32xf32>,
    return
  }
  func.func @transform_0(%arg0: i32, %arg1: i32) -> (i32, i32, i32, i32) {
    %c7_i32 = arith.constant 7 : i32
    %0 = arith.muli %arg0, %c7_i32 : i32
    %c2_i32 = arith.constant 2 : i32
    %1 = arith.muli %c2_i32, %arg0 : i32
    %c1_i32 = arith.constant 1 : i32
    %2 = arith.subi %c1_i32, %1 : i32
    %3 = arith.muli %2, %arg1 : i32
    %4 = arith.addi %0, %3 : i32
    %c0_i32 = arith.constant 0 : i32
    %c0_i32_0 = arith.constant 0 : i32
    %c0_i32_1 = arith.constant 0 : i32
    return %arg0, %4, %c0_i32, %c0_i32_0 : i32, i32, i32, i32
  }
  func.func @transform_1(%arg0: i32, %arg1: i32) -> (i32, i32, i32) {
    %c0_i32 = arith.constant 0 : i32
    %c0_i32_0 = arith.constant 0 : i32
    %c0_i32_1 = arith.constant 0 : i32
    return %arg0, %c0_i32, %c0_i32_0 : i32, i32, i32
  }
  func.func @transform_2(%arg0: i32, %arg1: i32) -> (i32, i32, i32, i32) {
    %c7_i32 = arith.constant 7 : i32
    %0 = arith.muli %arg0, %c7_i32 : i32
    %c2_i32 = arith.constant 2 : i32
    %1 = arith.muli %c2_i32, %arg0 : i32
    %c1_i32 = arith.constant 1 : i32
    %2 = arith.subi %c1_i32, %1 : i32
    %3 = arith.muli %2, %arg1 : i32
    %4 = arith.addi %0, %3 : i32
    %c0_i32 = arith.constant 0 : i32
    %c0_i32_0 = arith.constant 0 : i32
    %c0_i32_1 = arith.constant 0 : i32
    return %arg0, %4, %c0_i32, %c0_i32_0 : i32, i32, i32, i32
  }
}

module attributes {stable_mosaic.version = 11 : i64} {
  func.func @_bilstm_kernel(%arg0: i32, %arg1: i32, %arg2: memref<1x1x8x128xf32, #tpu.memory_space<vmem>>, %arg3: memref<1x32x128xf32, #tpu.memory_space<vmem>>, %arg4: memref<1x1x8x32xf32, #tpu.memory_space<vmem>>, %arg5: memref<8x32xf32, #tpu.memory_space<vmem>>, %arg6: memref<8x32xf32, #tpu.memory_space<vmem>>) attributes {dimension_semantics = [#tpu.dimension_semantics<parallel>, #tpu.dimension_semantics<arbitrary>], iteration_bounds = array<i64: 2, 4>, scalar_prefetch = 0 : i64, scratch_operands = 2 : i64, tpu.core_type = #tpu.core_type<tc>, window_params = [{transform_indices = @transform_0, window_bounds = array<i64: 1, 1, 8, 128>}, {transform_indices = @transform_1, window_bounds = array<i64: 1, 32, 128>}, {transform_indices = @transform_2, window_bounds = array<i64: 1, 1, 8, 32>}]} {
    %c0_i32 = arith.constant 0 : i32
    %0 = arith.cmpi eq, %arg1, %c0_i32 : i32
    %1 = arith.extui %0 : i1 to i32
    %c0_i32_0 = arith.constant 0 : i32
    %2 = arith.cmpi ne, %1, %c0_i32_0 : i32
    scf.if %2 {
      %cst_22 = arith.constant 0.000000e+00 : f32
      %41 = vector.broadcast %cst_22 : f32 to vector<8x32xf32>
      %c0_23 = arith.constant 0 : index
      %c0_24 = arith.constant 0 : index
      %42 = vector.load %arg5[%c0_23, %c0_24] : memref<8x32xf32, #tpu.memory_space<vmem>>, vector<8x32xf32>
      tpu.vector_store %arg5[%c0_23, %c0_24], %41 {strides = array<i32>} : memref<8x32xf32, #tpu.memory_space<vmem>>, vector<8x32xf32>,
      %cst_25 = arith.constant 0.000000e+00 : f32
      %43 = vector.broadcast %cst_25 : f32 to vector<8x32xf32>
      %c0_26 = arith.constant 0 : index
      %c0_27 = arith.constant 0 : index
      %44 = vector.load %arg6[%c0_26, %c0_27] : memref<8x32xf32, #tpu.memory_space<vmem>>, vector<8x32xf32>
      tpu.vector_store %arg6[%c0_26, %c0_27], %43 {strides = array<i32>} : memref<8x32xf32, #tpu.memory_space<vmem>>, vector<8x32xf32>,
    } else {
    }
    %c0 = arith.constant 0 : index
    %c0_1 = arith.constant 0 : index
    %c0_2 = arith.constant 0 : index
    %c0_3 = arith.constant 0 : index
    %3 = vector.load %arg2[%c0, %c0_1, %c0_2, %c0_3] : memref<1x1x8x128xf32, #tpu.memory_space<vmem>>, vector<1x1x8x128xf32>
    %4 = vector.shape_cast %3 : vector<1x1x8x128xf32> to vector<8x128xf32>
    %c0_4 = arith.constant 0 : index
    %c0_5 = arith.constant 0 : index
    %5 = vector.load %arg5[%c0_4, %c0_5] : memref<8x32xf32, #tpu.memory_space<vmem>>, vector<8x32xf32>
    %c0_6 = arith.constant 0 : index
    %c0_7 = arith.constant 0 : index
    %c0_8 = arith.constant 0 : index
    %6 = vector.load %arg3[%c0_6, %c0_7, %c0_8] : memref<1x32x128xf32, #tpu.memory_space<vmem>>, vector<1x32x128xf32>
    %7 = vector.shape_cast %6 : vector<1x32x128xf32> to vector<32x128xf32>
    %cst = arith.constant dense<0.000000e+00> : vector<8x128xf32>
    %8 = tpu.matmul %5, %7, %cst {dimension_numbers = #tpu.dot_dimension_numbers<[1], [0], [0], [1], [0, 0, 1, 1], [], []>} : vector<8x32xf32>, vector<32x128xf32>, vector<8x128xf32> -> vector<8x128xf32>
    %9 = arith.addf %4, %8 : vector<8x128xf32>
    %10 = vector.extract_strided_slice %9 {offsets = [0, 0], sizes = [8, 32], strides = [1, 1]} : vector<8x128xf32> to vector<8x32xf32>
    %11 = arith.negf %10 : vector<8x32xf32>
    %12 = math.exp %11 : vector<8x32xf32>
    %cst_9 = arith.constant 1.000000e+00 : f32
    %13 = vector.broadcast %cst_9 : f32 to vector<8x32xf32>
    %14 = arith.addf %13, %12 : vector<8x32xf32>
    %15 = arith.divf %13, %14 : vector<8x32xf32>
    %16 = vector.extract_strided_slice %9 {offsets = [0, 32], sizes = [8, 32], strides = [1, 1]} : vector<8x128xf32> to vector<8x32xf32>
    %17 = arith.negf %16 : vector<8x32xf32>
    %18 = math.exp %17 : vector<8x32xf32>
    %cst_10 = arith.constant 1.000000e+00 : f32
    %19 = vector.broadcast %cst_10 : f32 to vector<8x32xf32>
    %20 = arith.addf %19, %18 : vector<8x32xf32>
    %21 = arith.divf %19, %20 : vector<8x32xf32>
    %22 = vector.extract_strided_slice %9 {offsets = [0, 64], sizes = [8, 32], strides = [1, 1]} : vector<8x128xf32> to vector<8x32xf32>
    %23 = math.tanh %22 : vector<8x32xf32>
    %24 = vector.extract_strided_slice %9 {offsets = [0, 96], sizes = [8, 32], strides = [1, 1]} : vector<8x128xf32> to vector<8x32xf32>
    %25 = arith.negf %24 : vector<8x32xf32>
    %26 = math.exp %25 : vector<8x32xf32>
    %cst_11 = arith.constant 1.000000e+00 : f32
    %27 = vector.broadcast %cst_11 : f32 to vector<8x32xf32>
    %28 = arith.addf %27, %26 : vector<8x32xf32>
    %29 = arith.divf %27, %28 : vector<8x32xf32>
    %c0_12 = arith.constant 0 : index
    %c0_13 = arith.constant 0 : index
    %30 = vector.load %arg6[%c0_12, %c0_13] : memref<8x32xf32, #tpu.memory_space<vmem>>, vector<8x32xf32>
    %31 = arith.mulf %21, %30 : vector<8x32xf32>
    %32 = arith.mulf %15, %23 : vector<8x32xf32>
    %33 = arith.addf %31, %32 : vector<8x32xf32>
    %34 = math.tanh %33 : vector<8x32xf32>
    %35 = arith.mulf %29, %34 : vector<8x32xf32>
    %c0_14 = arith.constant 0 : index
    %c0_15 = arith.constant 0 : index
    %36 = vector.load %arg6[%c0_14, %c0_15] : memref<8x32xf32, #tpu.memory_space<vmem>>, vector<8x32xf32>
    tpu.vector_store %arg6[%c0_14, %c0_15], %33 {strides = array<i32>} : memref<8x32xf32, #tpu.memory_space<vmem>>, vector<8x32xf32>,
    %c0_16 = arith.constant 0 : index
    %c0_17 = arith.constant 0 : index
    %37 = vector.load %arg5[%c0_16, %c0_17] : memref<8x32xf32, #tpu.memory_space<vmem>>, vector<8x32xf32>
    tpu.vector_store %arg5[%c0_16, %c0_17], %35 {strides = array<i32>} : memref<8x32xf32, #tpu.memory_space<vmem>>, vector<8x32xf32>,
    %c0_18 = arith.constant 0 : index
    %c0_19 = arith.constant 0 : index
    %c0_20 = arith.constant 0 : index
    %c0_21 = arith.constant 0 : index
    %38 = vector.load %arg4[%c0_18, %c0_19, %c0_20, %c0_21] : memref<1x1x8x32xf32, #tpu.memory_space<vmem>>, vector<1x1x8x32xf32>
    %39 = vector.shape_cast %38 : vector<1x1x8x32xf32> to vector<8x32xf32>
    %40 = vector.shape_cast %35 : vector<8x32xf32> to vector<1x1x8x32xf32>
    tpu.vector_store %arg4[%c0_18, %c0_19, %c0_20, %c0_21], %40 {strides = array<i32>} : memref<1x1x8x32xf32, #tpu.memory_space<vmem>>, vector<1x1x8x32xf32>,
    return
  }
  func.func @transform_0(%arg0: i32, %arg1: i32) -> (i32, i32, i32, i32) {
    %c3_i32 = arith.constant 3 : i32
    %0 = arith.muli %arg0, %c3_i32 : i32
    %c2_i32 = arith.constant 2 : i32
    %1 = arith.muli %c2_i32, %arg0 : i32
    %c1_i32 = arith.constant 1 : i32
    %2 = arith.subi %c1_i32, %1 : i32
    %3 = arith.muli %2, %arg1 : i32
    %4 = arith.addi %0, %3 : i32
    %c0_i32 = arith.constant 0 : i32
    %c0_i32_0 = arith.constant 0 : i32
    %c0_i32_1 = arith.constant 0 : i32
    return %arg0, %4, %c0_i32, %c0_i32_0 : i32, i32, i32, i32
  }
  func.func @transform_1(%arg0: i32, %arg1: i32) -> (i32, i32, i32) {
    %c0_i32 = arith.constant 0 : i32
    %c0_i32_0 = arith.constant 0 : i32
    %c0_i32_1 = arith.constant 0 : i32
    return %arg0, %c0_i32, %c0_i32_0 : i32, i32, i32
  }
  func.func @transform_2(%arg0: i32, %arg1: i32) -> (i32, i32, i32, i32) {
    %c3_i32 = arith.constant 3 : i32
    %0 = arith.muli %arg0, %c3_i32 : i32
    %c2_i32 = arith.constant 2 : i32
    %1 = arith.muli %c2_i32, %arg0 : i32
    %c1_i32 = arith.constant 1 : i32
    %2 = arith.subi %c1_i32, %1 : i32
    %3 = arith.muli %2, %arg1 : i32
    %4 = arith.addi %0, %3 : i32
    %c0_i32 = arith.constant 0 : i32
    %c0_i32_0 = arith.constant 0 : i32
    %c0_i32_1 = arith.constant 0 : i32
    return %arg0, %4, %c0_i32, %c0_i32_0 : i32, i32, i32, i32
  }
}

module attributes {stable_mosaic.version = 11 : i64} {
  func.func @_speller_kernel(%arg0: i32, %arg1: memref<1x8x128xf32, #tpu.memory_space<vmem>>, %arg2: memref<8x4x64xf32, #tpu.memory_space<vmem>>, %arg3: memref<32x64xf32, #tpu.memory_space<vmem>>, %arg4: memref<1x64xf32, #tpu.memory_space<vmem>>, %arg5: memref<64x64xf32, #tpu.memory_space<vmem>>, %arg6: memref<1x64xf32, #tpu.memory_space<vmem>>, %arg7: memref<64x128xf32, #tpu.memory_space<vmem>>, %arg8: memref<32x128xf32, #tpu.memory_space<vmem>>, %arg9: memref<32x128xf32, #tpu.memory_space<vmem>>, %arg10: memref<32x128xf32, #tpu.memory_space<vmem>>, %arg11: memref<1x128xf32, #tpu.memory_space<vmem>>, %arg12: memref<32x128xf32, #tpu.memory_space<vmem>>, %arg13: memref<64x128xf32, #tpu.memory_space<vmem>>, %arg14: memref<1x128xf32, #tpu.memory_space<vmem>>, %arg15: memref<1x8x128xf32, #tpu.memory_space<vmem>>, %arg16: memref<8x32xf32, #tpu.memory_space<vmem>>, %arg17: memref<8x32xf32, #tpu.memory_space<vmem>>, %arg18: memref<8x32xf32, #tpu.memory_space<vmem>>, %arg19: memref<8x32xf32, #tpu.memory_space<vmem>>) attributes {dimension_semantics = [#tpu.dimension_semantics<arbitrary>], iteration_bounds = array<i64: 8>, scalar_prefetch = 0 : i64, scratch_operands = 4 : i64, tpu.core_type = #tpu.core_type<tc>, window_params = [{transform_indices = @transform_0, window_bounds = array<i64: 1, 8, 128>}, {pipeline_mode = #tpu.pipeline_mode<synchronous>, transform_indices = @transform_1, window_bounds = array<i64: 8, 4, 64>}, {pipeline_mode = #tpu.pipeline_mode<synchronous>, transform_indices = @transform_2, window_bounds = array<i64: 32, 64>}, {pipeline_mode = #tpu.pipeline_mode<synchronous>, transform_indices = @transform_3, window_bounds = array<i64: 1, 64>}, {pipeline_mode = #tpu.pipeline_mode<synchronous>, transform_indices = @transform_4, window_bounds = array<i64: 64, 64>}, {pipeline_mode = #tpu.pipeline_mode<synchronous>, transform_indices = @transform_5, window_bounds = array<i64: 1, 64>}, {pipeline_mode = #tpu.pipeline_mode<synchronous>, transform_indices = @transform_6, window_bounds = array<i64: 64, 128>}, {pipeline_mode = #tpu.pipeline_mode<synchronous>, transform_indices = @transform_7, window_bounds = array<i64: 32, 128>}, {pipeline_mode = #tpu.pipeline_mode<synchronous>, transform_indices = @transform_8, window_bounds = array<i64: 32, 128>}, {pipeline_mode = #tpu.pipeline_mode<synchronous>, transform_indices = @transform_9, window_bounds = array<i64: 32, 128>}, {pipeline_mode = #tpu.pipeline_mode<synchronous>, transform_indices = @transform_10, window_bounds = array<i64: 1, 128>}, {pipeline_mode = #tpu.pipeline_mode<synchronous>, transform_indices = @transform_11, window_bounds = array<i64: 32, 128>}, {pipeline_mode = #tpu.pipeline_mode<synchronous>, transform_indices = @transform_12, window_bounds = array<i64: 64, 128>}, {pipeline_mode = #tpu.pipeline_mode<synchronous>, transform_indices = @transform_13, window_bounds = array<i64: 1, 128>}, {transform_indices = @transform_14, window_bounds = array<i64: 1, 8, 128>}]} {
    %c0_i32 = arith.constant 0 : i32
    %0 = arith.cmpi eq, %arg0, %c0_i32 : i32
    %1 = arith.extui %0 : i1 to i32
    %c0_i32_0 = arith.constant 0 : i32
    %2 = arith.cmpi ne, %1, %c0_i32_0 : i32
    scf.if %2 {
      %cst_68 = arith.constant 0.000000e+00 : f32
      %114 = vector.broadcast %cst_68 : f32 to vector<8x32xf32>
      %c0_69 = arith.constant 0 : index
      %c0_70 = arith.constant 0 : index
      %115 = vector.load %arg16[%c0_69, %c0_70] : memref<8x32xf32, #tpu.memory_space<vmem>>, vector<8x32xf32>
      tpu.vector_store %arg16[%c0_69, %c0_70], %114 {strides = array<i32>} : memref<8x32xf32, #tpu.memory_space<vmem>>, vector<8x32xf32>,
      %cst_71 = arith.constant 0.000000e+00 : f32
      %116 = vector.broadcast %cst_71 : f32 to vector<8x32xf32>
      %c0_72 = arith.constant 0 : index
      %c0_73 = arith.constant 0 : index
      %117 = vector.load %arg17[%c0_72, %c0_73] : memref<8x32xf32, #tpu.memory_space<vmem>>, vector<8x32xf32>
      tpu.vector_store %arg17[%c0_72, %c0_73], %116 {strides = array<i32>} : memref<8x32xf32, #tpu.memory_space<vmem>>, vector<8x32xf32>,
      %cst_74 = arith.constant 0.000000e+00 : f32
      %118 = vector.broadcast %cst_74 : f32 to vector<8x32xf32>
      %c0_75 = arith.constant 0 : index
      %c0_76 = arith.constant 0 : index
      %119 = vector.load %arg18[%c0_75, %c0_76] : memref<8x32xf32, #tpu.memory_space<vmem>>, vector<8x32xf32>
      tpu.vector_store %arg18[%c0_75, %c0_76], %118 {strides = array<i32>} : memref<8x32xf32, #tpu.memory_space<vmem>>, vector<8x32xf32>,
      %cst_77 = arith.constant 0.000000e+00 : f32
      %120 = vector.broadcast %cst_77 : f32 to vector<8x32xf32>
      %c0_78 = arith.constant 0 : index
      %c0_79 = arith.constant 0 : index
      %121 = vector.load %arg19[%c0_78, %c0_79] : memref<8x32xf32, #tpu.memory_space<vmem>>, vector<8x32xf32>
      tpu.vector_store %arg19[%c0_78, %c0_79], %120 {strides = array<i32>} : memref<8x32xf32, #tpu.memory_space<vmem>>, vector<8x32xf32>,
    } else {
    }
    %c0 = arith.constant 0 : index
    %c0_1 = arith.constant 0 : index
    %c0_2 = arith.constant 0 : index
    %3 = vector.load %arg2[%c0, %c0_1, %c0_2] : memref<8x4x64xf32, #tpu.memory_space<vmem>>, vector<8x4x64xf32>
    %c0_3 = arith.constant 0 : index
    %c0_4 = arith.constant 0 : index
    %4 = vector.load %arg18[%c0_3, %c0_4] : memref<8x32xf32, #tpu.memory_space<vmem>>, vector<8x32xf32>
    %c0_5 = arith.constant 0 : index
    %c0_6 = arith.constant 0 : index
    %5 = vector.load %arg3[%c0_5, %c0_6] : memref<32x64xf32, #tpu.memory_space<vmem>>, vector<32x64xf32>
    %cst = arith.constant dense<0.000000e+00> : vector<8x64xf32>
    %6 = tpu.matmul %4, %5, %cst {dimension_numbers = #tpu.dot_dimension_numbers<[1], [0], [0], [1], [0, 0, 1, 1], [], []>} : vector<8x32xf32>, vector<32x64xf32>, vector<8x64xf32> -> vector<8x64xf32>
    %c0_7 = arith.constant 0 : index
    %c0_8 = arith.constant 0 : index
    %7 = vector.load %arg4[%c0_7, %c0_8] : memref<1x64xf32, #tpu.memory_space<vmem>>, vector<1x64xf32>
    %8 = vector.broadcast %7 : vector<1x64xf32> to vector<8x64xf32>
    %9 = arith.addf %6, %8 : vector<8x64xf32>
    %10 = vector.shape_cast %9 : vector<8x64xf32> to vector<8x1x64xf32>
    "tpu.trace_start"() <{level = 10 : i32, message = "bqd,bkd->bqk"}> : () -> ()
    %cst_9 = arith.constant dense<0.000000e+00> : vector<8x1x4xf32>
    %11 = tpu.matmul %10, %3, %cst_9 {dimension_numbers = #tpu.dot_dimension_numbers<[2], [2], [1], [1], [0, 0, 0, 1, 1, 1], [0], [0]>} : vector<8x1x64xf32>, vector<8x4x64xf32>, vector<8x1x4xf32> -> vector<8x1x4xf32>
    "tpu.trace_stop"() : () -> ()
    %cst_10 = arith.constant dense<0xFF800000> : vector<8x1xf32>
    %12 = vector.multi_reduction <maximumf>, %11, %cst_10 [2] : vector<8x1x4xf32> to vector<8x1xf32>
    %13 = vector.shape_cast %12 : vector<8x1xf32> to vector<8x1x1xf32>
    %14 = vector.broadcast %13 : vector<8x1x1xf32> to vector<8x1x4xf32>
    %15 = arith.subf %11, %14 : vector<8x1x4xf32>
    %16 = math.exp %15 : vector<8x1x4xf32>
    %cst_11 = arith.constant dense<0.000000e+00> : vector<8x1xf32>
    %17 = vector.multi_reduction <add>, %16, %cst_11 [2] : vector<8x1x4xf32> to vector<8x1xf32>
    %18 = vector.shape_cast %17 : vector<8x1xf32> to vector<8x1x1xf32>
    %19 = tpu.reciprocal %18 {approx = true} : vector<8x1x1xf32> -> vector<8x1x1xf32>
    %20 = vector.broadcast %19 : vector<8x1x1xf32> to vector<8x1x4xf32>
    %21 = arith.mulf %16, %20 : vector<8x1x4xf32>
    "tpu.trace_start"() <{level = 10 : i32, message = "bqk,bkd->bqd"}> : () -> ()
    %cst_12 = arith.constant dense<0.000000e+00> : vector<8x1x64xf32>
    %22 = tpu.matmul %21, %3, %cst_12 {dimension_numbers = #tpu.dot_dimension_numbers<[2], [1], [1], [2], [0, 0, 0, 1, 1, 2], [0], [0]>} : vector<8x1x4xf32>, vector<8x4x64xf32>, vector<8x1x64xf32> -> vector<8x1x64xf32>
    "tpu.trace_stop"() : () -> ()
    %23 = vector.shape_cast %22 : vector<8x1x64xf32> to vector<8x64xf32>
    %c0_13 = arith.constant 0 : index
    %c0_14 = arith.constant 0 : index
    %24 = vector.load %arg5[%c0_13, %c0_14] : memref<64x64xf32, #tpu.memory_space<vmem>>, vector<64x64xf32>
    %cst_15 = arith.constant dense<0.000000e+00> : vector<8x64xf32>
    %25 = tpu.matmul %23, %24, %cst_15 {dimension_numbers = #tpu.dot_dimension_numbers<[1], [0], [0], [1], [0, 0, 1, 1], [], []>} : vector<8x64xf32>, vector<64x64xf32>, vector<8x64xf32> -> vector<8x64xf32>
    %c0_16 = arith.constant 0 : index
    %c0_17 = arith.constant 0 : index
    %26 = vector.load %arg6[%c0_16, %c0_17] : memref<1x64xf32, #tpu.memory_space<vmem>>, vector<1x64xf32>
    %27 = vector.broadcast %26 : vector<1x64xf32> to vector<8x64xf32>
    %28 = arith.addf %25, %27 : vector<8x64xf32>
    %c0_18 = arith.constant 0 : index
    %c0_19 = arith.constant 0 : index
    %c0_20 = arith.constant 0 : index
    %29 = vector.load %arg1[%c0_18, %c0_19, %c0_20] : memref<1x8x128xf32, #tpu.memory_space<vmem>>, vector<1x8x128xf32>
    %30 = vector.shape_cast %29 : vector<1x8x128xf32> to vector<8x128xf32>
    %c0_21 = arith.constant 0 : index
    %c0_22 = arith.constant 0 : index
    %31 = vector.load %arg7[%c0_21, %c0_22] : memref<64x128xf32, #tpu.memory_space<vmem>>, vector<64x128xf32>
    %cst_23 = arith.constant dense<0.000000e+00> : vector<8x128xf32>
    %32 = tpu.matmul %28, %31, %cst_23 {dimension_numbers = #tpu.dot_dimension_numbers<[1], [0], [0], [1], [0, 0, 1, 1], [], []>} : vector<8x64xf32>, vector<64x128xf32>, vector<8x128xf32> -> vector<8x128xf32>
    %33 = arith.addf %30, %32 : vector<8x128xf32>
    %c0_24 = arith.constant 0 : index
    %c0_25 = arith.constant 0 : index
    %34 = vector.load %arg16[%c0_24, %c0_25] : memref<8x32xf32, #tpu.memory_space<vmem>>, vector<8x32xf32>
    %c0_26 = arith.constant 0 : index
    %c0_27 = arith.constant 0 : index
    %35 = vector.load %arg8[%c0_26, %c0_27] : memref<32x128xf32, #tpu.memory_space<vmem>>, vector<32x128xf32>
    %cst_28 = arith.constant dense<0.000000e+00> : vector<8x128xf32>
    %36 = tpu.matmul %34, %35, %cst_28 {dimension_numbers = #tpu.dot_dimension_numbers<[1], [0], [0], [1], [0, 0, 1, 1], [], []>} : vector<8x32xf32>, vector<32x128xf32>, vector<8x128xf32> -> vector<8x128xf32>
    %37 = arith.addf %33, %36 : vector<8x128xf32>
    %c0_29 = arith.constant 0 : index
    %c0_30 = arith.constant 0 : index
    %38 = vector.load %arg17[%c0_29, %c0_30] : memref<8x32xf32, #tpu.memory_space<vmem>>, vector<8x32xf32>
    %39 = vector.extract_strided_slice %37 {offsets = [0, 0], sizes = [8, 32], strides = [1, 1]} : vector<8x128xf32> to vector<8x32xf32>
    %40 = arith.negf %39 : vector<8x32xf32>
    %41 = math.exp %40 : vector<8x32xf32>
    %cst_31 = arith.constant 1.000000e+00 : f32
    %42 = vector.broadcast %cst_31 : f32 to vector<8x32xf32>
    %43 = arith.addf %42, %41 : vector<8x32xf32>
    %44 = arith.divf %42, %43 : vector<8x32xf32>
    %45 = vector.extract_strided_slice %37 {offsets = [0, 32], sizes = [8, 32], strides = [1, 1]} : vector<8x128xf32> to vector<8x32xf32>
    %46 = arith.negf %45 : vector<8x32xf32>
    %47 = math.exp %46 : vector<8x32xf32>
    %cst_32 = arith.constant 1.000000e+00 : f32
    %48 = vector.broadcast %cst_32 : f32 to vector<8x32xf32>
    %49 = arith.addf %48, %47 : vector<8x32xf32>
    %50 = arith.divf %48, %49 : vector<8x32xf32>
    %51 = vector.extract_strided_slice %37 {offsets = [0, 64], sizes = [8, 32], strides = [1, 1]} : vector<8x128xf32> to vector<8x32xf32>
    %52 = math.tanh %51 : vector<8x32xf32>
    %53 = vector.extract_strided_slice %37 {offsets = [0, 96], sizes = [8, 32], strides = [1, 1]} : vector<8x128xf32> to vector<8x32xf32>
    %54 = arith.negf %53 : vector<8x32xf32>
    %55 = math.exp %54 : vector<8x32xf32>
    %cst_33 = arith.constant 1.000000e+00 : f32
    %56 = vector.broadcast %cst_33 : f32 to vector<8x32xf32>
    %57 = arith.addf %56, %55 : vector<8x32xf32>
    %58 = arith.divf %56, %57 : vector<8x32xf32>
    %59 = arith.mulf %50, %38 : vector<8x32xf32>
    %60 = arith.mulf %44, %52 : vector<8x32xf32>
    %61 = arith.addf %59, %60 : vector<8x32xf32>
    %62 = math.tanh %61 : vector<8x32xf32>
    %63 = arith.mulf %58, %62 : vector<8x32xf32>
    %c0_34 = arith.constant 0 : index
    %c0_35 = arith.constant 0 : index
    %64 = vector.load %arg9[%c0_34, %c0_35] : memref<32x128xf32, #tpu.memory_space<vmem>>, vector<32x128xf32>
    %cst_36 = arith.constant dense<0.000000e+00> : vector<8x128xf32>
    %65 = tpu.matmul %63, %64, %cst_36 {dimension_numbers = #tpu.dot_dimension_numbers<[1], [0], [0], [1], [0, 0, 1, 1], [], []>} : vector<8x32xf32>, vector<32x128xf32>, vector<8x128xf32> -> vector<8x128xf32>
    %c0_37 = arith.constant 0 : index
    %c0_38 = arith.constant 0 : index
    %66 = vector.load %arg18[%c0_37, %c0_38] : memref<8x32xf32, #tpu.memory_space<vmem>>, vector<8x32xf32>
    %c0_39 = arith.constant 0 : index
    %c0_40 = arith.constant 0 : index
    %67 = vector.load %arg10[%c0_39, %c0_40] : memref<32x128xf32, #tpu.memory_space<vmem>>, vector<32x128xf32>
    %cst_41 = arith.constant dense<0.000000e+00> : vector<8x128xf32>
    %68 = tpu.matmul %66, %67, %cst_41 {dimension_numbers = #tpu.dot_dimension_numbers<[1], [0], [0], [1], [0, 0, 1, 1], [], []>} : vector<8x32xf32>, vector<32x128xf32>, vector<8x128xf32> -> vector<8x128xf32>
    %69 = arith.addf %65, %68 : vector<8x128xf32>
    %c0_42 = arith.constant 0 : index
    %c0_43 = arith.constant 0 : index
    %70 = vector.load %arg11[%c0_42, %c0_43] : memref<1x128xf32, #tpu.memory_space<vmem>>, vector<1x128xf32>
    %71 = vector.broadcast %70 : vector<1x128xf32> to vector<8x128xf32>
    %72 = arith.addf %69, %71 : vector<8x128xf32>
    %c0_44 = arith.constant 0 : index
    %c0_45 = arith.constant 0 : index
    %73 = vector.load %arg19[%c0_44, %c0_45] : memref<8x32xf32, #tpu.memory_space<vmem>>, vector<8x32xf32>
    %74 = vector.extract_strided_slice %72 {offsets = [0, 0], sizes = [8, 32], strides = [1, 1]} : vector<8x128xf32> to vector<8x32xf32>
    %75 = arith.negf %74 : vector<8x32xf32>
    %76 = math.exp %75 : vector<8x32xf32>
    %cst_46 = arith.constant 1.000000e+00 : f32
    %77 = vector.broadcast %cst_46 : f32 to vector<8x32xf32>
    %78 = arith.addf %77, %76 : vector<8x32xf32>
    %79 = arith.divf %77, %78 : vector<8x32xf32>
    %80 = vector.extract_strided_slice %72 {offsets = [0, 32], sizes = [8, 32], strides = [1, 1]} : vector<8x128xf32> to vector<8x32xf32>
    %81 = arith.negf %80 : vector<8x32xf32>
    %82 = math.exp %81 : vector<8x32xf32>
    %cst_47 = arith.constant 1.000000e+00 : f32
    %83 = vector.broadcast %cst_47 : f32 to vector<8x32xf32>
    %84 = arith.addf %83, %82 : vector<8x32xf32>
    %85 = arith.divf %83, %84 : vector<8x32xf32>
    %86 = vector.extract_strided_slice %72 {offsets = [0, 64], sizes = [8, 32], strides = [1, 1]} : vector<8x128xf32> to vector<8x32xf32>
    %87 = math.tanh %86 : vector<8x32xf32>
    %88 = vector.extract_strided_slice %72 {offsets = [0, 96], sizes = [8, 32], strides = [1, 1]} : vector<8x128xf32> to vector<8x32xf32>
    %89 = arith.negf %88 : vector<8x32xf32>
    %90 = math.exp %89 : vector<8x32xf32>
    %cst_48 = arith.constant 1.000000e+00 : f32
    %91 = vector.broadcast %cst_48 : f32 to vector<8x32xf32>
    %92 = arith.addf %91, %90 : vector<8x32xf32>
    %93 = arith.divf %91, %92 : vector<8x32xf32>
    %94 = arith.mulf %85, %73 : vector<8x32xf32>
    %95 = arith.mulf %79, %87 : vector<8x32xf32>
    %96 = arith.addf %94, %95 : vector<8x32xf32>
    %97 = math.tanh %96 : vector<8x32xf32>
    %98 = arith.mulf %93, %97 : vector<8x32xf32>
    %c0_49 = arith.constant 0 : index
    %c0_50 = arith.constant 0 : index
    %99 = vector.load %arg16[%c0_49, %c0_50] : memref<8x32xf32, #tpu.memory_space<vmem>>, vector<8x32xf32>
    tpu.vector_store %arg16[%c0_49, %c0_50], %63 {strides = array<i32>} : memref<8x32xf32, #tpu.memory_space<vmem>>, vector<8x32xf32>,
    %c0_51 = arith.constant 0 : index
    %c0_52 = arith.constant 0 : index
    %100 = vector.load %arg17[%c0_51, %c0_52] : memref<8x32xf32, #tpu.memory_space<vmem>>, vector<8x32xf32>
    tpu.vector_store %arg17[%c0_51, %c0_52], %61 {strides = array<i32>} : memref<8x32xf32, #tpu.memory_space<vmem>>, vector<8x32xf32>,
    %c0_53 = arith.constant 0 : index
    %c0_54 = arith.constant 0 : index
    %101 = vector.load %arg18[%c0_53, %c0_54] : memref<8x32xf32, #tpu.memory_space<vmem>>, vector<8x32xf32>
    tpu.vector_store %arg18[%c0_53, %c0_54], %98 {strides = array<i32>} : memref<8x32xf32, #tpu.memory_space<vmem>>, vector<8x32xf32>,
    %c0_55 = arith.constant 0 : index
    %c0_56 = arith.constant 0 : index
    %102 = vector.load %arg19[%c0_55, %c0_56] : memref<8x32xf32, #tpu.memory_space<vmem>>, vector<8x32xf32>
    tpu.vector_store %arg19[%c0_55, %c0_56], %96 {strides = array<i32>} : memref<8x32xf32, #tpu.memory_space<vmem>>, vector<8x32xf32>,
    %c0_57 = arith.constant 0 : index
    %c0_58 = arith.constant 0 : index
    %103 = vector.load %arg12[%c0_57, %c0_58] : memref<32x128xf32, #tpu.memory_space<vmem>>, vector<32x128xf32>
    %cst_59 = arith.constant dense<0.000000e+00> : vector<8x128xf32>
    %104 = tpu.matmul %98, %103, %cst_59 {dimension_numbers = #tpu.dot_dimension_numbers<[1], [0], [0], [1], [0, 0, 1, 1], [], []>} : vector<8x32xf32>, vector<32x128xf32>, vector<8x128xf32> -> vector<8x128xf32>
    %c0_60 = arith.constant 0 : index
    %c0_61 = arith.constant 0 : index
    %105 = vector.load %arg13[%c0_60, %c0_61] : memref<64x128xf32, #tpu.memory_space<vmem>>, vector<64x128xf32>
    %cst_62 = arith.constant dense<0.000000e+00> : vector<8x128xf32>
    %106 = tpu.matmul %28, %105, %cst_62 {dimension_numbers = #tpu.dot_dimension_numbers<[1], [0], [0], [1], [0, 0, 1, 1], [], []>} : vector<8x64xf32>, vector<64x128xf32>, vector<8x128xf32> -> vector<8x128xf32>
    %107 = arith.addf %104, %106 : vector<8x128xf32>
    %c0_63 = arith.constant 0 : index
    %c0_64 = arith.constant 0 : index
    %108 = vector.load %arg14[%c0_63, %c0_64] : memref<1x128xf32, #tpu.memory_space<vmem>>, vector<1x128xf32>
    %109 = vector.broadcast %108 : vector<1x128xf32> to vector<8x128xf32>
    %110 = arith.addf %107, %109 : vector<8x128xf32>
    %c0_65 = arith.constant 0 : index
    %c0_66 = arith.constant 0 : index
    %c0_67 = arith.constant 0 : index
    %111 = vector.load %arg15[%c0_65, %c0_66, %c0_67] : memref<1x8x128xf32, #tpu.memory_space<vmem>>, vector<1x8x128xf32>
    %112 = vector.shape_cast %111 : vector<1x8x128xf32> to vector<8x128xf32>
    %113 = vector.shape_cast %110 : vector<8x128xf32> to vector<1x8x128xf32>
    tpu.vector_store %arg15[%c0_65, %c0_66, %c0_67], %113 {strides = array<i32>} : memref<1x8x128xf32, #tpu.memory_space<vmem>>, vector<1x8x128xf32>,
    return
  }
  func.func @transform_0(%arg0: i32) -> (i32, i32, i32) {
    %c0_i32 = arith.constant 0 : i32
    %c0_i32_0 = arith.constant 0 : i32
    %c0_i32_1 = arith.constant 0 : i32
    return %arg0, %c0_i32, %c0_i32_0 : i32, i32, i32
  }
  func.func @transform_1(%arg0: i32) -> (i32, i32, i32) {
    %c0_i32 = arith.constant 0 : i32
    %c0_i32_0 = arith.constant 0 : i32
    %c0_i32_1 = arith.constant 0 : i32
    %c0_i32_2 = arith.constant 0 : i32
    return %c0_i32, %c0_i32_0, %c0_i32_1 : i32, i32, i32
  }
  func.func @transform_2(%arg0: i32) -> (i32, i32) {
    %c0_i32 = arith.constant 0 : i32
    %c0_i32_0 = arith.constant 0 : i32
    %c0_i32_1 = arith.constant 0 : i32
    return %c0_i32, %c0_i32_0 : i32, i32
  }
  func.func @transform_3(%arg0: i32) -> (i32, i32) {
    %c0_i32 = arith.constant 0 : i32
    %c0_i32_0 = arith.constant 0 : i32
    %c0_i32_1 = arith.constant 0 : i32
    return %c0_i32, %c0_i32_0 : i32, i32
  }
  func.func @transform_4(%arg0: i32) -> (i32, i32) {
    %c0_i32 = arith.constant 0 : i32
    %c0_i32_0 = arith.constant 0 : i32
    %c0_i32_1 = arith.constant 0 : i32
    return %c0_i32, %c0_i32_0 : i32, i32
  }
  func.func @transform_5(%arg0: i32) -> (i32, i32) {
    %c0_i32 = arith.constant 0 : i32
    %c0_i32_0 = arith.constant 0 : i32
    %c0_i32_1 = arith.constant 0 : i32
    return %c0_i32, %c0_i32_0 : i32, i32
  }
  func.func @transform_6(%arg0: i32) -> (i32, i32) {
    %c0_i32 = arith.constant 0 : i32
    %c0_i32_0 = arith.constant 0 : i32
    %c0_i32_1 = arith.constant 0 : i32
    return %c0_i32, %c0_i32_0 : i32, i32
  }
  func.func @transform_7(%arg0: i32) -> (i32, i32) {
    %c0_i32 = arith.constant 0 : i32
    %c0_i32_0 = arith.constant 0 : i32
    %c0_i32_1 = arith.constant 0 : i32
    return %c0_i32, %c0_i32_0 : i32, i32
  }
  func.func @transform_8(%arg0: i32) -> (i32, i32) {
    %c0_i32 = arith.constant 0 : i32
    %c0_i32_0 = arith.constant 0 : i32
    %c0_i32_1 = arith.constant 0 : i32
    return %c0_i32, %c0_i32_0 : i32, i32
  }
  func.func @transform_9(%arg0: i32) -> (i32, i32) {
    %c0_i32 = arith.constant 0 : i32
    %c0_i32_0 = arith.constant 0 : i32
    %c0_i32_1 = arith.constant 0 : i32
    return %c0_i32, %c0_i32_0 : i32, i32
  }
  func.func @transform_10(%arg0: i32) -> (i32, i32) {
    %c0_i32 = arith.constant 0 : i32
    %c0_i32_0 = arith.constant 0 : i32
    %c0_i32_1 = arith.constant 0 : i32
    return %c0_i32, %c0_i32_0 : i32, i32
  }
  func.func @transform_11(%arg0: i32) -> (i32, i32) {
    %c0_i32 = arith.constant 0 : i32
    %c0_i32_0 = arith.constant 0 : i32
    %c0_i32_1 = arith.constant 0 : i32
    return %c0_i32, %c0_i32_0 : i32, i32
  }
  func.func @transform_12(%arg0: i32) -> (i32, i32) {
    %c0_i32 = arith.constant 0 : i32
    %c0_i32_0 = arith.constant 0 : i32
    %c0_i32_1 = arith.constant 0 : i32
    return %c0_i32, %c0_i32_0 : i32, i32
  }
  func.func @transform_13(%arg0: i32) -> (i32, i32) {
    %c0_i32 = arith.constant 0 : i32
    %c0_i32_0 = arith.constant 0 : i32
    %c0_i32_1 = arith.constant 0 : i32
    return %c0_i32, %c0_i32_0 : i32, i32
  }
  func.func @transform_14(%arg0: i32) -> (i32, i32, i32) {
    %c0_i32 = arith.constant 0 : i32
    %c0_i32_0 = arith.constant 0 : i32
    %c0_i32_1 = arith.constant 0 : i32
    return %arg0, %c0_i32, %c0_i32_0 : i32, i32, i32
  }
}

</mosaic_0001>

<llo_original>
// kernel: punc_las_forward.5
$region0: #{punc_las_forward.5}
  #allocation0 [shape = 'u32[]', space=smem, size = 0x4, offset = 0x4, fixed_abs, tag = 'smem constant byte address 0x4 - core index']
  #allocation1 [shape = 'u32[144,128]{1,0:T(1,128)}', space=vmem, size = 0x12000, scoped, tag = 'internal scratch']
  #allocation2 [shape = 'f32[8,32]{1,0:T(8,128)}', space=vmem, size = 0x1000, scoped, tag = 'scratch operand']
  #allocation3 [shape = 'f32[8,32]{1,0:T(8,128)}', space=vmem, size = 0x1000, scoped, tag = 'scratch operand']
  %s0 = inlined_call_operand.vmem [shape: f32[2,8,8,128], index: 0, kind: input, shape index: {}]
  %s1 = inlined_call_operand.vmem [shape: f32[2,32,128], index: 1, kind: input, shape index: {}]
  %s2 = inlined_call_operand.vmem [shape: f32[2,8,8,32], index: 2, kind: output, shape index: {}]
  %s3 = sld [smem:[#allocation0]]
  $region45: #{punc_las_forward.5} parent=0
    _
  %s5 = ssub.s32 1, %s3
  %s6 = scalar_select 0, %s5, %s3
  loop: start=0, step=1, limit=18
  $region2: #{punc_las_forward.5} parent=0 // loop_pre_header
    _
  $region3: #{punc_las_forward.5} parent=0 // loop_header
    %s8 = sphi 0, %s12
    %p9 = scmp.ge.s32.totalorder %s8, 18
    %s15 = sphi 0, %s27
    %s16 = sphi 0, %s23
    %s17 = sphi 0, %s15
    %s18 = sphi 0, %s16
    %s19 = sphi 0, %s17
    %s20 = sphi 0, %s18
    %s42 = sphi 0, %s44
    %s45 = sphi 0, %s42
    %s46 = sphi 0, %s45
    %s62 = sphi 0, %s46
    %s68 = sphi 0, %s70
    %s71 = sphi 0, %s68
    %s72 = sphi 0, %s71
    %s88 = sphi 0, %s72
    %s106 = sphi 0, %s108
    %s109 = sphi 0, %s106
    %s110 = sphi 0, %s109
    %s126 = sphi 0, %s110
  $region4: #{punc_las_forward.5} parent=0 // loop_header_branch
    %11 = sbr.rel (%p9) target = $region8
  $region5: #{punc_las_forward.5} parent=0 // loop_body
    %s13 = ssub.s32 %s8, 1
    %s14 = ssub.s32 %s8, 2
    %s21 = sadd.s32 1, %s16
    %p22 = scmp.ge.s32.totalorder %s21, 8
    %s23 = scalar_select %p22, 0, %s21
    %s24 = sadd.s32 1, %s15
    %s25 = scalar_select %p22, %s24, %s15
    %p26 = scmp.ge.s32.totalorder %s25, 2
    %s27 = scalar_select %p26, 0, %s25
    %s28 = smul.u32 %s15, 7
    %s29 = smul.u32 %s15, 2
    %s30 = ssub.s32 1, %s29
    %s31 = smul.u32 %s30, %s16
    %s32 = sadd.s32 %s28, %s31
    %s33 = smul.u32 %s27, 7
    %s34 = smul.u32 %s27, 2
    %s35 = ssub.s32 1, %s34
    %s36 = smul.u32 %s35, %s23
    %s37 = sadd.s32 %s33, %s36
    %s38 = ssub.s32 %s15, %s27
    %s39 = ssub.s32 %s32, %s37
    %s40 = sor.u32 %s38, %s39
    %p41 = scmp.eq.s32.totalorder %s40, 0
    %s43 = sadd.s32 %s42, 1
    %s44 = scalar_select %p41, %s42, %s43
    %p47 = pneg %p41
    %p48 = scmp.eq.s32.totalorder %s8, 15
    %p49 = por %p47, %p48
    %p50 = scmp.ne.s32.totalorder %s42, %s45
    %p51 = scmp.eq.s32.totalorder %s8, 0
    %p52 = por %p50, %p51
    %p53 = scmp.ne.s32.totalorder %s42, %s45
    %p54 = scmp.eq.s32.totalorder %s13, 15
    %p55 = por %p53, %p54
    %p56 = scmp.ne.s32.totalorder %s45, %s46
    %p57 = scmp.eq.s32.totalorder %s13, 0
    %p58 = por %p56, %p57
    %p59 = scmp.ne.s32.totalorder %s45, %s46
    %p60 = scmp.eq.s32.totalorder %s14, 15
    %p61 = por %p59, %p60
    %p63 = scmp.ne.s32.totalorder %s46, %s62
    %p64 = scmp.eq.s32.totalorder %s14, 0
    %p65 = por %p63, %p64
    %s66 = ssub.s32 %s15, %s27
    %p67 = scmp.eq.s32.totalorder %s66, 0
    %s69 = sadd.s32 %s68, 1
    %s70 = scalar_select %p67, %s68, %s69
    %p73 = pneg %p67
    %p74 = scmp.eq.s32.totalorder %s8, 15
    %p75 = por %p73, %p74
    %p76 = scmp.ne.s32.totalorder %s68, %s71
    %p77 = scmp.eq.s32.totalorder %s8, 0
    %p78 = por %p76, %p77
    %p79 = scmp.ne.s32.totalorder %s68, %s71
    %p80 = scmp.eq.s32.totalorder %s13, 15
    %p81 = por %p79, %p80
    %p82 = scmp.ne.s32.totalorder %s71, %s72
    %p83 = scmp.eq.s32.totalorder %s13, 0
    %p84 = por %p82, %p83
    %p85 = scmp.ne.s32.totalorder %s71, %s72
    %p86 = scmp.eq.s32.totalorder %s14, 15
    %p87 = por %p85, %p86
    %p89 = scmp.ne.s32.totalorder %s72, %s88
    %p90 = scmp.eq.s32.totalorder %s14, 0
    %p91 = por %p89, %p90
    %s92 = smul.u32 %s15, 7
    %s93 = smul.u32 %s15, 2
    %s94 = ssub.s32 1, %s93
    %s95 = smul.u32 %s94, %s16
    %s96 = sadd.s32 %s92, %s95
    %s97 = smul.u32 %s27, 7
    %s98 = smul.u32 %s27, 2
    %s99 = ssub.s32 1, %s98
    %s100 = smul.u32 %s99, %s23
    %s101 = sadd.s32 %s97, %s100
    %s102 = ssub.s32 %s15, %s27
    %s103 = ssub.s32 %s96, %s101
    %s104 = sor.u32 %s102, %s103
    %p105 = scmp.eq.s32.totalorder %s104, 0
    %s107 = sadd.s32 %s106, 1
    %s108 = scalar_select %p105, %s106, %s107
    %p111 = pneg %p105
    %p112 = scmp.eq.s32.totalorder %s8, 15
    %p113 = por %p111, %p112
    %p114 = scmp.ne.s32.totalorder %s106, %s109
    %p115 = scmp.eq.s32.totalorder %s8, 0
    %p116 = por %p114, %p115
    %p117 = scmp.ne.s32.totalorder %s106, %s109
    %p118 = scmp.eq.s32.totalorder %s13, 15
    %p119 = por %p117, %p118
    %p120 = scmp.ne.s32.totalorder %s109, %s110
    %p121 = scmp.eq.s32.totalorder %s13, 0
    %p122 = por %p120, %p121
    %p123 = scmp.ne.s32.totalorder %s109, %s110
    %p124 = scmp.eq.s32.totalorder %s14, 15
    %p125 = por %p123, %p124
    %p127 = scmp.ne.s32.totalorder %s110, %s126
    %p128 = scmp.eq.s32.totalorder %s14, 0
    %p129 = por %p127, %p128
    %p130 = scmp.le.s32.totalorder 1, %s8
    %p131 = scmp.lt.s32.totalorder %s8, 17
    %p132 = pnand %p130, %p131
    %p133 = pneg %p132
    // Predicated region
    $region9: #{punc_las_forward.5} parent=5 // pred_check
      _
    $region10: #{punc_las_forward.5} parent=5 // pred_check_branch
      %135 = sbr.rel (%p132) target = $region12
    $region11: #{punc_las_forward.5} parent=5 // pred_region
      %s136 = ssub.s32 %s8, 1
    $region12: #{punc_las_forward.5} parent=5 // pred_fallthru
      _
    %p137 = scmp.lt.s32.totalorder %s8, 16
    // Predicated region
    $region13: #{punc_las_forward.5} parent=5 // pred_check
      %p138 = pneg %p137
    $region14: #{punc_las_forward.5} parent=5 // pred_check_branch
      %140 = sbr.rel (%p138) target = $region16
    $region15: #{punc_las_forward.5} parent=5 // pred_region
      // Predicated region
      $region17: #{punc_las_forward.5} parent=15 // pred_check
        %p141 = pneg %p52
      $region18: #{punc_las_forward.5} parent=15 // pred_check_branch
        %143 = sbr.rel (%p141) target = $region20
      $region19: #{punc_las_forward.5} parent=15 // pred_region
        %s144 = smul.u32 %s15, 7
        %s145 = smul.u32 %s15, 2
        %s146 = ssub.s32 1, %s145
        %s147 = smul.u32 %s146, %s16
        %s148 = sadd.s32 %s144, %s147
        %p149 = scmp.lt.s32.totalorder %s15, 1
        %s150 = scalar_select %p149, %s15, 1
        %p151 = scmp.lt.s32.totalorder %s148, 7
        %s152 = scalar_select %p151, %s148, 7
        %s153 = smul.addr %s150, 8
        %s154 = sadd.s32 %s152, %s153
        %s155 = smul.addr %s154, 8
        %s156 = scalar_lea.vmem %s0, %s155
        %s157 = smul.u32 %s15, 7
        %s158 = smul.u32 %s15, 2
        %s159 = ssub.s32 1, %s158
        %s160 = smul.u32 %s159, %s16
        %s161 = sadd.s32 %s157, %s160
      $region20: #{punc_las_forward.5} parent=15 // pred_fallthru
        _
      // Predicated region
      $region21: #{punc_las_forward.5} parent=15 // pred_check
        %p162 = pneg %p78
      $region22: #{punc_las_forward.5} parent=15 // pred_check_branch
        %164 = sbr.rel (%p162) target = $region24
      $region23: #{punc_las_forward.5} parent=15 // pred_region
        %p165 = scmp.lt.s32.totalorder %s15, 1
        %s166 = scalar_select %p165, %s15, 1
        %s167 = smul.addr %s166, 4
        %s168 = smul.addr %s167, 8
        %s169 = scalar_lea.vmem %s1, %s168
      $region24: #{punc_las_forward.5} parent=15 // pred_fallthru
        _
    $region16: #{punc_las_forward.5} parent=5 // pred_fallthru
      _
    %p170 = scmp.le.s32.totalorder 1, %s8
    %p171 = scmp.lt.s32.totalorder %s8, 17
    %p172 = pnand %p170, %p171
    %p173 = pneg %p172
    // Predicated region
    $region25: #{punc_las_forward.5} parent=5 // pred_check
      _
    $region26: #{punc_las_forward.5} parent=5 // pred_check_branch
      %175 = sbr.rel (%p172) target = $region28
    $region27: #{punc_las_forward.5} parent=5 // pred_region
      %s176 = ssub.s32 %s8, 1
      %s177 = smul.u32 %s17, 7
      %s178 = smul.u32 %s17, 2
      %s179 = ssub.s32 1, %s178
      %s180 = smul.u32 %s179, %s18
      %s181 = sadd.s32 %s177, %s180
      %p182 = scmp.lt.s32.totalorder %s17, 1
      %s183 = scalar_select %p182, %s17, 1
      %p184 = scmp.lt.s32.totalorder %s181, 7
      %s185 = scalar_select %p184, %s181, 7
      %s186 = smul.addr %s183, 8
      %s187 = sadd.s32 %s185, %s186
      %s188 = smul.addr %s187, 8
      %s189 = scalar_lea.vmem %s0, %s188
      %p190 = pneg %p58
      %p191 = pneg %p55
      %p192 = scmp.lt.s32.totalorder %s17, 1
      %s193 = scalar_select %p192, %s17, 1
      %s194 = smul.addr %s193, 4
      %s195 = smul.addr %s194, 8
      %s196 = scalar_lea.vmem %s1, %s195
      %p197 = pneg %p84
      %p198 = pneg %p81
      %p199 = pneg %p122
      %p200 = pneg %p119
      %s201 = smul.u32 %s17, 7
      %s202 = smul.u32 %s17, 2
      %s203 = ssub.s32 1, %s202
      %s204 = smul.u32 %s203, %s18
      %s205 = sadd.s32 %s201, %s204
      %p206 = scmp.lt.s32.totalorder %s17, 1
      %s207 = scalar_select %p206, %s17, 1
      %p208 = scmp.lt.s32.totalorder %s205, 7
      %s209 = scalar_select %p208, %s205, 7
      %s210 = smul.addr %s207, 8
      %s211 = sadd.s32 %s209, %s210
      %s212 = smul.addr %s211, 8
      %s213 = scalar_lea.vmem %s2, %s212
      %s214 = smul.u32 %s17, 7
      %s215 = smul.u32 %s17, 2
      %s216 = ssub.s32 1, %s215
      %s217 = smul.u32 %s216, %s18
      %s218 = sadd.s32 %s214, %s217
      %p219 = scmp.lt.s32.totalorder %s17, 1
      %s220 = scalar_select %p219, %s17, 1
      %p221 = scmp.lt.s32.totalorder %s218, 7
      %s222 = scalar_select %p221, %s218, 7
      %s223 = smul.addr %s220, 8
      %s224 = sadd.s32 %s222, %s223
      %s225 = smul.addr %s224, 8
      %s226 = scalar_lea.vmem %s0, %s225
      %s227 = smul.u32 %s17, 7
      %s228 = smul.u32 %s17, 2
      %s229 = ssub.s32 1, %s228
      %s230 = smul.u32 %s229, %s18
      %s231 = sadd.s32 %s227, %s230
      %p232 = scmp.lt.s32.totalorder %s17, 1
      %s233 = scalar_select %p232, %s17, 1
      %s234 = smul.addr %s233, 4
      %s235 = smul.addr %s234, 8
      %s236 = scalar_lea.vmem %s1, %s235
      %s237 = smul.u32 %s17, 7
      %s238 = smul.u32 %s17, 2
      %s239 = ssub.s32 1, %s238
      %s240 = smul.u32 %s239, %s18
      %s241 = sadd.s32 %s237, %s240
      %p242 = scmp.lt.s32.totalorder %s17, 1
      %s243 = scalar_select %p242, %s17, 1
      %p244 = scmp.lt.s32.totalorder %s241, 7
      %s245 = scalar_select %p244, %s241, 7
      %s246 = smul.addr %s243, 8
      %s247 = sadd.s32 %s245, %s246
      %s248 = smul.addr %s247, 8
      %s249 = scalar_lea.vmem %s2, %s248
      %s250 = smul.u32 %s17, 7
      %s251 = smul.u32 %s17, 2
      %s252 = ssub.s32 1, %s251
      %s253 = smul.u32 %s252, %s18
      %s254 = sadd.s32 %s250, %s253
      %p255 = scmp.eq.s32.totalorder %s18, 0
      // Predicated region
      $region29: #{punc_las_forward.5} parent=27 // pred_check
        %p256 = pneg %p255
      $region30: #{punc_las_forward.5} parent=27 // pred_check_branch
        %258 = sbr.rel (%p256) target = $region32
      $region31: #{punc_las_forward.5} parent=27 // pred_region
        %vm259 = vcmask 261120
        %260 = vst.msk [vmem:[#allocation2] sm:$0xff] %vm259, 0.0
        %261 = vst.msk [vmem:[#allocation3] sm:$0xff] %vm259, 0.0
      $region32: #{punc_las_forward.5} parent=27 // pred_fallthru
        _
      %v262 = vld [vmem:[%s226] sm:$0xff]
      %v263 = vld [vmem:[#allocation2] sm:$0xff]
      %v264 = vld [vmem:[%s236] sm:$0xff]
      %v265 = vld [vmem:[%s236 + $0x8] sm:$0xff]
      %v266 = vld [vmem:[%s236 + $0x10] sm:$0xff]
      %v267 = vld [vmem:[%s236 + $0x18] sm:$0xff]
      %vm268 = vcmask 261120
      %v270 = vsel %vm268, %v263, 0
      %272 = vmatprep.subr.mxu0 0.0
      %273 = vmatpush1.msra.mxu0 0.0
      %274 = vmatprep.subr.mxu0 0.0
      %275 = vmatpush1.msra.mxu0 0.0
      %276 = vmatprep.subr.mxu0 0.0
      %277 = vmatpush1.msra.mxu0 0.0
      %278 = vmatprep.subr.mxu0 0.0
      %279 = vmatpush1.msra.mxu0 0.0
      %280 = vmatprep.subr.mxu0 0.0
      %281 = vmatpush1.msra.mxu0 0.0
      %282 = vmatprep.subr.mxu0 0.0
      %283 = vmatpush1.msra.mxu0 0.0
      %284 = vmatprep.subr.mxu0 0.0
      %285 = vmatpush1.msra.mxu0 0.0
      %286 = vmatprep.subr.mxu0 0.0
      %287 = vmatpush1.msra.mxu0 0.0
      %288 = vmatprep.subr.mxu0 0.0
      %289 = vmatpush1.msra.mxu0 0.0
      %290 = vmatprep.subr.mxu0 0.0
      %291 = vmatpush1.msra.mxu0 0.0
      %292 = vmatprep.subr.mxu0 0.0
      %293 = vmatpush1.msra.mxu0 0.0
      %294 = vmatprep.subr.mxu0 0.0
      %295 = vmatpush1.msra.mxu0 0.0
      %296 = vmatprep.subr.mxu0 0.0
      %297 = vmatpush1.msra.mxu0 %v267
      %298 = vmatprep.subr.mxu0 0.0
      %299 = vmatpush1.msra.mxu0 %v266
      %300 = vmatprep.subr.mxu0 0.0
      %301 = vmatpush1.msra.mxu0 %v265
      %302 = vmatprep.subr.mxu0 0.0
      %303 = vmatpush1.msra.mxu0 %v264
      %304 = vmatprep.subr.mxu0 0.0
      %305 = vmatpush2.msra.mxu0 0.0
      %306 = vmatprep.subr.mxu0 0.0
      %307 = vmatpush2.msra.mxu0 0.0
      %308 = vmatprep.subr.mxu0 0.0
      %309 = vmatpush2.msra.mxu0 0.0
      %310 = vmatprep.subr.mxu0 0.0
      %311 = vmatpush2.msra.mxu0 0.0
      %312 = vmatprep.subr.mxu0 0.0
      %313 = vmatpush2.msra.mxu0 0.0
      %314 = vmatprep.subr.mxu0 0.0
      %315 = vmatpush2.msra.mxu0 0.0
      %316 = vmatprep.subr.mxu0 0.0
      %317 = vmatpush2.msra.mxu0 0.0
      %318 = vmatprep.subr.mxu0 0.0
      %319 = vmatpush2.msra.mxu0 0.0
      %320 = vmatprep.subr.mxu0 0.0
      %321 = vmatpush2.msra.mxu0 0.0
      %322 = vmatprep.subr.mxu0 0.0
      %323 = vmatpush2.msra.mxu0 0.0
      %324 = vmatprep.subr.mxu0 0.0
      %325 = vmatpush2.msra.mxu0 0.0
      %326 = vmatprep.subr.mxu0 0.0
      %327 = vmatpush2.msra.mxu0 0.0
      %328 = vmatprep.subr.mxu0 0.0
      %329 = vmatpush2.msra.mxu0 0.0
      %330 = vmatprep.subr.mxu0 0.0
      %331 = vmatpush2.msra.mxu0 0.0
      %332 = vmatprep.subr.mxu0 0.0
      %333 = vmatpush2.msra.mxu0 0.0
      %334 = vmatprep.subr.mxu0 0.0
      %335 = vmatpush2.msra.mxu0 0.0
      %336 = vmatprep.mubr.f32.mxu0 0.0
      %337 = vmatmul.mubr.f32.gmra.mxu0 %v270
      %v338 = vpop.f32.mrf.mxu0
      %v339 = vadd.f32 0.0, %v338
      %v340 = vpop.f32.mrf.mxu0
      %341 = vdwg.mxu0
      %v342 = vadd.f32 %v262, %v339
      %v343 = vxor.u32 %v342, 2147483648
      %v344 = vmul.f32 %v343, 1.442695
      %v345 = vpow.pop %v344
      %v346 = vadd.f32 %v345, 1.0
      %v347 = vrcp.pop %v346
      %v348 = vmul.f32 1.0, %v347
      %v349 = vtanh.pop %v342
      %v350 = vld [vmem:[#allocation3] sm:$0xff]
      %352 = vrot.lane.b32.xlu0 %v350, 32
      %v353 = vpop.permute.xlu0 %352
      %v355 = vmul.f32 %v348, %v353
      %357 = vrot.lane.b32.xlu0 %v349, 64
      %v358 = vpop.permute.xlu0 %357
      %v360 = vmul.f32 %v348, %v358
      %362 = vrot.lane.b32.xlu0 %v360, 32
      %v363 = vpop.permute.xlu0 %362
      %v365 = vadd.f32 %v355, %v363
      %v366 = vtanh.pop %v365
      %368 = vrot.lane.b32.xlu0 %v366, 64
      %v369 = vpop.permute.xlu0 %368
      %v371 = vmul.f32 %v348, %v369
      %373 = vrot.lane.b32.xlu0 %v365, 96
      %v374 = vpop.permute.xlu0 %373
      %376 = vst.msk [vmem:[#allocation3] sm:$0xff] %vm268, %v374
      %378 = vrot.lane.b32.xlu0 %v371, 32
      %v379 = vpop.permute.xlu0 %378
      %381 = vst.msk [vmem:[#allocation2] sm:$0xff] %vm268, %v379
      %382 = vst.msk [vmem:[%s249] sm:$0xff] %vm268, %v379
      %s383 = smul.u32 %s17, 7
      %s384 = smul.u32 %s17, 2
      %s385 = ssub.s32 1, %s384
      %s386 = smul.u32 %s385, %s18
      %s387 = sadd.s32 %s383, %s386
      %p388 = scmp.lt.s32.totalorder %s17, 1
      %s389 = scalar_select %p388, %s17, 1
      %p390 = scmp.lt.s32.totalorder %s387, 7
      %s391 = scalar_select %p390, %s387, 7
      %s392 = smul.addr %s389, 8
      %s393 = sadd.s32 %s391, %s392
      %s394 = smul.addr %s393, 8
      %s395 = scalar_lea.vmem %s2, %s394
      // Predicated region
      $region33: #{punc_las_forward.5} parent=27 // pred_check
        %p396 = pneg %p119
      $region34: #{punc_las_forward.5} parent=27 // pred_check_branch
        %398 = sbr.rel (%p396) target = $region36
      $region35: #{punc_las_forward.5} parent=27 // pred_region
        %s399 = smul.u32 %s17, 7
        %s400 = smul.u32 %s17, 2
        %s401 = ssub.s32 1, %s400
        %s402 = smul.u32 %s401, %s18
        %s403 = sadd.s32 %s399, %s402
      $region36: #{punc_las_forward.5} parent=27 // pred_fallthru
        _
    $region28: #{punc_las_forward.5} parent=5 // pred_fallthru
      _
    %p404 = scmp.le.s32.totalorder 2, %s8
    // Predicated region
    $region37: #{punc_las_forward.5} parent=5 // pred_check
      %p405 = pneg %p404
    $region38: #{punc_las_forward.5} parent=5 // pred_check_branch
      %407 = sbr.rel (%p405) target = $region40
    $region39: #{punc_las_forward.5} parent=5 // pred_region
      %s408 = ssub.s32 %s8, 2
      // Predicated region
      $region41: #{punc_las_forward.5} parent=39 // pred_check
        %p409 = pneg %p125
      $region42: #{punc_las_forward.5} parent=39 // pred_check_branch
        %411 = sbr.rel (%p409) target = $region44
      $region43: #{punc_las_forward.5} parent=39 // pred_region
        %s412 = smul.u32 %s19, 7
        %s413 = smul.u32 %s19, 2
        %s414 = ssub.s32 1, %s413
        %s415 = smul.u32 %s414, %s20
        %s416 = sadd.s32 %s412, %s415
        %p417 = scmp.lt.s32.totalorder %s19, 1
        %s418 = scalar_select %p417, %s19, 1
        %p419 = scmp.lt.s32.totalorder %s416, 7
        %s420 = scalar_select %p419, %s416, 7
        %s421 = smul.addr %s418, 8
        %s422 = sadd.s32 %s420, %s421
        %s423 = smul.addr %s422, 8
        %s424 = scalar_lea.vmem %s2, %s423
      $region44: #{punc_las_forward.5} parent=39 // pred_fallthru
        _
    $region40: #{punc_las_forward.5} parent=5 // pred_fallthru
      _
  $region6: #{punc_las_forward.5} parent=0 // loop_footer
    %s12 = sadd.s32 1, %s8
  $region7: #{punc_las_forward.5} parent=0 // loop_footer_branch
    %7 = sbr.rel target = $region3
  $region8: #{punc_las_forward.5} parent=0 // loop_exit
    _

// kernel: punc_las_forward.4
$region0: #{punc_las_forward.4}
  #allocation0 [shape = 'u32[]', space=smem, size = 0x4, offset = 0x4, fixed_abs, tag = 'smem constant byte address 0x4 - core index']
  #allocation1 [shape = 'u32[144,128]{1,0:T(1,128)}', space=vmem, size = 0x12000, scoped, tag = 'internal scratch']
  #allocation2 [shape = 'f32[8,32]{1,0:T(8,128)}', space=vmem, size = 0x1000, scoped, tag = 'scratch operand']
  #allocation3 [shape = 'f32[8,32]{1,0:T(8,128)}', space=vmem, size = 0x1000, scoped, tag = 'scratch operand']
  %s0 = inlined_call_operand.vmem [shape: f32[2,16,8,128], index: 0, kind: input, shape index: {}]
  %s1 = inlined_call_operand.vmem [shape: f32[2,32,128], index: 1, kind: input, shape index: {}]
  %s2 = inlined_call_operand.vmem [shape: f32[2,16,8,32], index: 2, kind: output, shape index: {}]
  %s3 = sld [smem:[#allocation0]]
  $region45: #{punc_las_forward.4} parent=0
    _
  %s5 = ssub.s32 1, %s3
  %s6 = scalar_select 0, %s5, %s3
  loop: start=0, step=1, limit=34
  $region2: #{punc_las_forward.4} parent=0 // loop_pre_header
    _
  $region3: #{punc_las_forward.4} parent=0 // loop_header
    %s8 = sphi 0, %s12
    %p9 = scmp.ge.s32.totalorder %s8, 34
    %s15 = sphi 0, %s27
    %s16 = sphi 0, %s23
    %s17 = sphi 0, %s15
    %s18 = sphi 0, %s16
    %s19 = sphi 0, %s17
    %s20 = sphi 0, %s18
    %s42 = sphi 0, %s44
    %s45 = sphi 0, %s42
    %s46 = sphi 0, %s45
    %s62 = sphi 0, %s46
    %s68 = sphi 0, %s70
    %s71 = sphi 0, %s68
    %s72 = sphi 0, %s71
    %s88 = sphi 0, %s72
    %s106 = sphi 0, %s108
    %s109 = sphi 0, %s106
    %s110 = sphi 0, %s109
    %s126 = sphi 0, %s110
  $region4: #{punc_las_forward.4} parent=0 // loop_header_branch
    %11 = sbr.rel (%p9) target = $region8
  $region5: #{punc_las_forward.4} parent=0 // loop_body
    %s13 = ssub.s32 %s8, 1
    %s14 = ssub.s32 %s8, 2
    %s21 = sadd.s32 1, %s16
    %p22 = scmp.ge.s32.totalorder %s21, 16
    %s23 = scalar_select %p22, 0, %s21
    %s24 = sadd.s32 1, %s15
    %s25 = scalar_select %p22, %s24, %s15
    %p26 = scmp.ge.s32.totalorder %s25, 2
    %s27 = scalar_select %p26, 0, %s25
    %s28 = smul.u32 %s15, 15
    %s29 = smul.u32 %s15, 2
    %s30 = ssub.s32 1, %s29
    %s31 = smul.u32 %s30, %s16
    %s32 = sadd.s32 %s28, %s31
    %s33 = smul.u32 %s27, 15
    %s34 = smul.u32 %s27, 2
    %s35 = ssub.s32 1, %s34
    %s36 = smul.u32 %s35, %s23
    %s37 = sadd.s32 %s33, %s36
    %s38 = ssub.s32 %s15, %s27
    %s39 = ssub.s32 %s32, %s37
    %s40 = sor.u32 %s38, %s39
    %p41 = scmp.eq.s32.totalorder %s40, 0
    %s43 = sadd.s32 %s42, 1
    %s44 = scalar_select %p41, %s42, %s43
    %p47 = pneg %p41
    %p48 = scmp.eq.s32.totalorder %s8, 31
    %p49 = por %p47, %p48
    %p50 = scmp.ne.s32.totalorder %s42, %s45
    %p51 = scmp.eq.s32.totalorder %s8, 0
    %p52 = por %p50, %p51
    %p53 = scmp.ne.s32.totalorder %s42, %s45
    %p54 = scmp.eq.s32.totalorder %s13, 31
    %p55 = por %p53, %p54
    %p56 = scmp.ne.s32.totalorder %s45, %s46
    %p57 = scmp.eq.s32.totalorder %s13, 0
    %p58 = por %p56, %p57
    %p59 = scmp.ne.s32.totalorder %s45, %s46
    %p60 = scmp.eq.s32.totalorder %s14, 31
    %p61 = por %p59, %p60
    %p63 = scmp.ne.s32.totalorder %s46, %s62
    %p64 = scmp.eq.s32.totalorder %s14, 0
    %p65 = por %p63, %p64
    %s66 = ssub.s32 %s15, %s27
    %p67 = scmp.eq.s32.totalorder %s66, 0
    %s69 = sadd.s32 %s68, 1
    %s70 = scalar_select %p67, %s68, %s69
    %p73 = pneg %p67
    %p74 = scmp.eq.s32.totalorder %s8, 31
    %p75 = por %p73, %p74
    %p76 = scmp.ne.s32.totalorder %s68, %s71
    %p77 = scmp.eq.s32.totalorder %s8, 0
    %p78 = por %p76, %p77
    %p79 = scmp.ne.s32.totalorder %s68, %s71
    %p80 = scmp.eq.s32.totalorder %s13, 31
    %p81 = por %p79, %p80
    %p82 = scmp.ne.s32.totalorder %s71, %s72
    %p83 = scmp.eq.s32.totalorder %s13, 0
    %p84 = por %p82, %p83
    %p85 = scmp.ne.s32.totalorder %s71, %s72
    %p86 = scmp.eq.s32.totalorder %s14, 31
    %p87 = por %p85, %p86
    %p89 = scmp.ne.s32.totalorder %s72, %s88
    %p90 = scmp.eq.s32.totalorder %s14, 0
    %p91 = por %p89, %p90
    %s92 = smul.u32 %s15, 15
    %s93 = smul.u32 %s15, 2
    %s94 = ssub.s32 1, %s93
    %s95 = smul.u32 %s94, %s16
    %s96 = sadd.s32 %s92, %s95
    %s97 = smul.u32 %s27, 15
    %s98 = smul.u32 %s27, 2
    %s99 = ssub.s32 1, %s98
    %s100 = smul.u32 %s99, %s23
    %s101 = sadd.s32 %s97, %s100
    %s102 = ssub.s32 %s15, %s27
    %s103 = ssub.s32 %s96, %s101
    %s104 = sor.u32 %s102, %s103
    %p105 = scmp.eq.s32.totalorder %s104, 0
    %s107 = sadd.s32 %s106, 1
    %s108 = scalar_select %p105, %s106, %s107
    %p111 = pneg %p105
    %p112 = scmp.eq.s32.totalorder %s8, 31
    %p113 = por %p111, %p112
    %p114 = scmp.ne.s32.totalorder %s106, %s109
    %p115 = scmp.eq.s32.totalorder %s8, 0
    %p116 = por %p114, %p115
    %p117 = scmp.ne.s32.totalorder %s106, %s109
    %p118 = scmp.eq.s32.totalorder %s13, 31
    %p119 = por %p117, %p118
    %p120 = scmp.ne.s32.totalorder %s109, %s110
    %p121 = scmp.eq.s32.totalorder %s13, 0
    %p122 = por %p120, %p121
    %p123 = scmp.ne.s32.totalorder %s109, %s110
    %p124 = scmp.eq.s32.totalorder %s14, 31
    %p125 = por %p123, %p124
    %p127 = scmp.ne.s32.totalorder %s110, %s126
    %p128 = scmp.eq.s32.totalorder %s14, 0
    %p129 = por %p127, %p128
    %p130 = scmp.le.s32.totalorder 1, %s8
    %p131 = scmp.lt.s32.totalorder %s8, 33
    %p132 = pnand %p130, %p131
    %p133 = pneg %p132
    // Predicated region
    $region9: #{punc_las_forward.4} parent=5 // pred_check
      _
    $region10: #{punc_las_forward.4} parent=5 // pred_check_branch
      %135 = sbr.rel (%p132) target = $region12
    $region11: #{punc_las_forward.4} parent=5 // pred_region
      %s136 = ssub.s32 %s8, 1
    $region12: #{punc_las_forward.4} parent=5 // pred_fallthru
      _
    %p137 = scmp.lt.s32.totalorder %s8, 32
    // Predicated region
    $region13: #{punc_las_forward.4} parent=5 // pred_check
      %p138 = pneg %p137
    $region14: #{punc_las_forward.4} parent=5 // pred_check_branch
      %140 = sbr.rel (%p138) target = $region16
    $region15: #{punc_las_forward.4} parent=5 // pred_region
      // Predicated region
      $region17: #{punc_las_forward.4} parent=15 // pred_check
        %p141 = pneg %p52
      $region18: #{punc_las_forward.4} parent=15 // pred_check_branch
        %143 = sbr.rel (%p141) target = $region20
      $region19: #{punc_las_forward.4} parent=15 // pred_region
        %s144 = smul.u32 %s15, 15
        %s145 = smul.u32 %s15, 2
        %s146 = ssub.s32 1, %s145
        %s147 = smul.u32 %s146, %s16
        %s148 = sadd.s32 %s144, %s147
        %p149 = scmp.lt.s32.totalorder %s15, 1
        %s150 = scalar_select %p149, %s15, 1
        %p151 = scmp.lt.s32.totalorder %s148, 15
        %s152 = scalar_select %p151, %s148, 15
        %s153 = smul.addr %s150, 16
        %s154 = sadd.s32 %s152, %s153
        %s155 = smul.addr %s154, 8
        %s156 = scalar_lea.vmem %s0, %s155
        %s157 = smul.u32 %s15, 15
        %s158 = smul.u32 %s15, 2
        %s159 = ssub.s32 1, %s158
        %s160 = smul.u32 %s159, %s16
        %s161 = sadd.s32 %s157, %s160
      $region20: #{punc_las_forward.4} parent=15 // pred_fallthru
        _
      // Predicated region
      $region21: #{punc_las_forward.4} parent=15 // pred_check
        %p162 = pneg %p78
      $region22: #{punc_las_forward.4} parent=15 // pred_check_branch
        %164 = sbr.rel (%p162) target = $region24
      $region23: #{punc_las_forward.4} parent=15 // pred_region
        %p165 = scmp.lt.s32.totalorder %s15, 1
        %s166 = scalar_select %p165, %s15, 1
        %s167 = smul.addr %s166, 4
        %s168 = smul.addr %s167, 8
        %s169 = scalar_lea.vmem %s1, %s168
      $region24: #{punc_las_forward.4} parent=15 // pred_fallthru
        _
    $region16: #{punc_las_forward.4} parent=5 // pred_fallthru
      _
    %p170 = scmp.le.s32.totalorder 1, %s8
    %p171 = scmp.lt.s32.totalorder %s8, 33
    %p172 = pnand %p170, %p171
    %p173 = pneg %p172
    // Predicated region
    $region25: #{punc_las_forward.4} parent=5 // pred_check
      _
    $region26: #{punc_las_forward.4} parent=5 // pred_check_branch
      %175 = sbr.rel (%p172) target = $region28
    $region27: #{punc_las_forward.4} parent=5 // pred_region
      %s176 = ssub.s32 %s8, 1
      %s177 = smul.u32 %s17, 15
      %s178 = smul.u32 %s17, 2
      %s179 = ssub.s32 1, %s178
      %s180 = smul.u32 %s179, %s18
      %s181 = sadd.s32 %s177, %s180
      %p182 = scmp.lt.s32.totalorder %s17, 1
      %s183 = scalar_select %p182, %s17, 1
      %p184 = scmp.lt.s32.totalorder %s181, 15
      %s185 = scalar_select %p184, %s181, 15
      %s186 = smul.addr %s183, 16
      %s187 = sadd.s32 %s185, %s186
      %s188 = smul.addr %s187, 8
      %s189 = scalar_lea.vmem %s0, %s188
      %p190 = pneg %p58
      %p191 = pneg %p55
      %p192 = scmp.lt.s32.totalorder %s17, 1
      %s193 = scalar_select %p192, %s17, 1
      %s194 = smul.addr %s193, 4
      %s195 = smul.addr %s194, 8
      %s196 = scalar_lea.vmem %s1, %s195
      %p197 = pneg %p84
      %p198 = pneg %p81
      %p199 = pneg %p122
      %p200 = pneg %p119
      %s201 = smul.u32 %s17, 15
      %s202 = smul.u32 %s17, 2
      %s203 = ssub.s32 1, %s202
      %s204 = smul.u32 %s203, %s18
      %s205 = sadd.s32 %s201, %s204
      %p206 = scmp.lt.s32.totalorder %s17, 1
      %s207 = scalar_select %p206, %s17, 1
      %p208 = scmp.lt.s32.totalorder %s205, 15
      %s209 = scalar_select %p208, %s205, 15
      %s210 = smul.addr %s207, 16
      %s211 = sadd.s32 %s209, %s210
      %s212 = smul.addr %s211, 8
      %s213 = scalar_lea.vmem %s2, %s212
      %s214 = smul.u32 %s17, 15
      %s215 = smul.u32 %s17, 2
      %s216 = ssub.s32 1, %s215
      %s217 = smul.u32 %s216, %s18
      %s218 = sadd.s32 %s214, %s217
      %p219 = scmp.lt.s32.totalorder %s17, 1
      %s220 = scalar_select %p219, %s17, 1
      %p221 = scmp.lt.s32.totalorder %s218, 15
      %s222 = scalar_select %p221, %s218, 15
      %s223 = smul.addr %s220, 16
      %s224 = sadd.s32 %s222, %s223
      %s225 = smul.addr %s224, 8
      %s226 = scalar_lea.vmem %s0, %s225
      %s227 = smul.u32 %s17, 15
      %s228 = smul.u32 %s17, 2
      %s229 = ssub.s32 1, %s228
      %s230 = smul.u32 %s229, %s18
      %s231 = sadd.s32 %s227, %s230
      %p232 = scmp.lt.s32.totalorder %s17, 1
      %s233 = scalar_select %p232, %s17, 1
      %s234 = smul.addr %s233, 4
      %s235 = smul.addr %s234, 8
      %s236 = scalar_lea.vmem %s1, %s235
      %s237 = smul.u32 %s17, 15
      %s238 = smul.u32 %s17, 2
      %s239 = ssub.s32 1, %s238
      %s240 = smul.u32 %s239, %s18
      %s241 = sadd.s32 %s237, %s240
      %p242 = scmp.lt.s32.totalorder %s17, 1
      %s243 = scalar_select %p242, %s17, 1
      %p244 = scmp.lt.s32.totalorder %s241, 15
      %s245 = scalar_select %p244, %s241, 15
      %s246 = smul.addr %s243, 16
      %s247 = sadd.s32 %s245, %s246
      %s248 = smul.addr %s247, 8
      %s249 = scalar_lea.vmem %s2, %s248
      %s250 = smul.u32 %s17, 15
      %s251 = smul.u32 %s17, 2
      %s252 = ssub.s32 1, %s251
      %s253 = smul.u32 %s252, %s18
      %s254 = sadd.s32 %s250, %s253
      %p255 = scmp.eq.s32.totalorder %s18, 0
      // Predicated region
      $region29: #{punc_las_forward.4} parent=27 // pred_check
        %p256 = pneg %p255
      $region30: #{punc_las_forward.4} parent=27 // pred_check_branch
        %258 = sbr.rel (%p256) target = $region32
      $region31: #{punc_las_forward.4} parent=27 // pred_region
        %vm259 = vcmask 261120
        %260 = vst.msk [vmem:[#allocation2] sm:$0xff] %vm259, 0.0
        %261 = vst.msk [vmem:[#allocation3] sm:$0xff] %vm259, 0.0
      $region32: #{punc_las_forward.4} parent=27 // pred_fallthru
        _
      %v262 = vld [vmem:[%s226] sm:$0xff]
      %v263 = vld [vmem:[#allocation2] sm:$0xff]
      %v264 = vld [vmem:[%s236] sm:$0xff]
      %v265 = vld [vmem:[%s236 + $0x8] sm:$0xff]
      %v266 = vld [vmem:[%s236 + $0x10] sm:$0xff]
      %v267 = vld [vmem:[%s236 + $0x18] sm:$0xff]
      %vm268 = vcmask 261120
      %v270 = vsel %vm268, %v263, 0
      %272 = vmatprep.subr.mxu0 0.0
      %273 = vmatpush1.msra.mxu0 0.0
      %274 = vmatprep.subr.mxu0 0.0
      %275 = vmatpush1.msra.mxu0 0.0
      %276 = vmatprep.subr.mxu0 0.0
      %277 = vmatpush1.msra.mxu0 0.0
      %278 = vmatprep.subr.mxu0 0.0
      %279 = vmatpush1.msra.mxu0 0.0
      %280 = vmatprep.subr.mxu0 0.0
      %281 = vmatpush1.msra.mxu0 0.0
      %282 = vmatprep.subr.mxu0 0.0
      %283 = vmatpush1.msra.mxu0 0.0
      %284 = vmatprep.subr.mxu0 0.0
      %285 = vmatpush1.msra.mxu0 0.0
      %286 = vmatprep.subr.mxu0 0.0
      %287 = vmatpush1.msra.mxu0 0.0
      %288 = vmatprep.subr.mxu0 0.0
      %289 = vmatpush1.msra.mxu0 0.0
      %290 = vmatprep.subr.mxu0 0.0
      %291 = vmatpush1.msra.mxu0 0.0
      %292 = vmatprep.subr.mxu0 0.0
      %293 = vmatpush1.msra.mxu0 0.0
      %294 = vmatprep.subr.mxu0 0.0
      %295 = vmatpush1.msra.mxu0 0.0
      %296 = vmatprep.subr.mxu0 0.0
      %297 = vmatpush1.msra.mxu0 %v267
      %298 = vmatprep.subr.mxu0 0.0
      %299 = vmatpush1.msra.mxu0 %v266
      %300 = vmatprep.subr.mxu0 0.0
      %301 = vmatpush1.msra.mxu0 %v265
      %302 = vmatprep.subr.mxu0 0.0
      %303 = vmatpush1.msra.mxu0 %v264
      %304 = vmatprep.subr.mxu0 0.0
      %305 = vmatpush2.msra.mxu0 0.0
      %306 = vmatprep.subr.mxu0 0.0
      %307 = vmatpush2.msra.mxu0 0.0
      %308 = vmatprep.subr.mxu0 0.0
      %309 = vmatpush2.msra.mxu0 0.0
      %310 = vmatprep.subr.mxu0 0.0
      %311 = vmatpush2.msra.mxu0 0.0
      %312 = vmatprep.subr.mxu0 0.0
      %313 = vmatpush2.msra.mxu0 0.0
      %314 = vmatprep.subr.mxu0 0.0
      %315 = vmatpush2.msra.mxu0 0.0
      %316 = vmatprep.subr.mxu0 0.0
      %317 = vmatpush2.msra.mxu0 0.0
      %318 = vmatprep.subr.mxu0 0.0
      %319 = vmatpush2.msra.mxu0 0.0
      %320 = vmatprep.subr.mxu0 0.0
      %321 = vmatpush2.msra.mxu0 0.0
      %322 = vmatprep.subr.mxu0 0.0
      %323 = vmatpush2.msra.mxu0 0.0
      %324 = vmatprep.subr.mxu0 0.0
      %325 = vmatpush2.msra.mxu0 0.0
      %326 = vmatprep.subr.mxu0 0.0
      %327 = vmatpush2.msra.mxu0 0.0
      %328 = vmatprep.subr.mxu0 0.0
      %329 = vmatpush2.msra.mxu0 0.0
      %330 = vmatprep.subr.mxu0 0.0
      %331 = vmatpush2.msra.mxu0 0.0
      %332 = vmatprep.subr.mxu0 0.0
      %333 = vmatpush2.msra.mxu0 0.0
      %334 = vmatprep.subr.mxu0 0.0
      %335 = vmatpush2.msra.mxu0 0.0
      %336 = vmatprep.mubr.f32.mxu0 0.0
      %337 = vmatmul.mubr.f32.gmra.mxu0 %v270
      %v338 = vpop.f32.mrf.mxu0
      %v339 = vadd.f32 0.0, %v338
      %v340 = vpop.f32.mrf.mxu0
      %341 = vdwg.mxu0
      %v342 = vadd.f32 %v262, %v339
      %v343 = vxor.u32 %v342, 2147483648
      %v344 = vmul.f32 %v343, 1.442695
      %v345 = vpow.pop %v344
      %v346 = vadd.f32 %v345, 1.0
      %v347 = vrcp.pop %v346
      %v348 = vmul.f32 1.0, %v347
      %v349 = vtanh.pop %v342
      %v350 = vld [vmem:[#allocation3] sm:$0xff]
      %352 = vrot.lane.b32.xlu0 %v350, 32
      %v353 = vpop.permute.xlu0 %352
      %v355 = vmul.f32 %v348, %v353
      %357 = vrot.lane.b32.xlu0 %v349, 64
      %v358 = vpop.permute.xlu0 %357
      %v360 = vmul.f32 %v348, %v358
      %362 = vrot.lane.b32.xlu0 %v360, 32
      %v363 = vpop.permute.xlu0 %362
      %v365 = vadd.f32 %v355, %v363
      %v366 = vtanh.pop %v365
      %368 = vrot.lane.b32.xlu0 %v366, 64
      %v369 = vpop.permute.xlu0 %368
      %v371 = vmul.f32 %v348, %v369
      %373 = vrot.lane.b32.xlu0 %v365, 96
      %v374 = vpop.permute.xlu0 %373
      %376 = vst.msk [vmem:[#allocation3] sm:$0xff] %vm268, %v374
      %378 = vrot.lane.b32.xlu0 %v371, 32
      %v379 = vpop.permute.xlu0 %378
      %381 = vst.msk [vmem:[#allocation2] sm:$0xff] %vm268, %v379
      %382 = vst.msk [vmem:[%s249] sm:$0xff] %vm268, %v379
      %s383 = smul.u32 %s17, 15
      %s384 = smul.u32 %s17, 2
      %s385 = ssub.s32 1, %s384
      %s386 = smul.u32 %s385, %s18
      %s387 = sadd.s32 %s383, %s386
      %p388 = scmp.lt.s32.totalorder %s17, 1
      %s389 = scalar_select %p388, %s17, 1
      %p390 = scmp.lt.s32.totalorder %s387, 15
      %s391 = scalar_select %p390, %s387, 15
      %s392 = smul.addr %s389, 16
      %s393 = sadd.s32 %s391, %s392
      %s394 = smul.addr %s393, 8
      %s395 = scalar_lea.vmem %s2, %s394
      // Predicated region
      $region33: #{punc_las_forward.4} parent=27 // pred_check
        %p396 = pneg %p119
      $region34: #{punc_las_forward.4} parent=27 // pred_check_branch
        %398 = sbr.rel (%p396) target = $region36
      $region35: #{punc_las_forward.4} parent=27 // pred_region
        %s399 = smul.u32 %s17, 15
        %s400 = smul.u32 %s17, 2
        %s401 = ssub.s32 1, %s400
        %s402 = smul.u32 %s401, %s18
        %s403 = sadd.s32 %s399, %s402
      $region36: #{punc_las_forward.4} parent=27 // pred_fallthru
        _
    $region28: #{punc_las_forward.4} parent=5 // pred_fallthru
      _
    %p404 = scmp.le.s32.totalorder 2, %s8
    // Predicated region
    $region37: #{punc_las_forward.4} parent=5 // pred_check
      %p405 = pneg %p404
    $region38: #{punc_las_forward.4} parent=5 // pred_check_branch
      %407 = sbr.rel (%p405) target = $region40
    $region39: #{punc_las_forward.4} parent=5 // pred_region
      %s408 = ssub.s32 %s8, 2
      // Predicated region
      $region41: #{punc_las_forward.4} parent=39 // pred_check
        %p409 = pneg %p125
      $region42: #{punc_las_forward.4} parent=39 // pred_check_branch
        %411 = sbr.rel (%p409) target = $region44
      $region43: #{punc_las_forward.4} parent=39 // pred_region
        %s412 = smul.u32 %s19, 15
        %s413 = smul.u32 %s19, 2
        %s414 = ssub.s32 1, %s413
        %s415 = smul.u32 %s414, %s20
        %s416 = sadd.s32 %s412, %s415
        %p417 = scmp.lt.s32.totalorder %s19, 1
        %s418 = scalar_select %p417, %s19, 1
        %p419 = scmp.lt.s32.totalorder %s416, 15
        %s420 = scalar_select %p419, %s416, 15
        %s421 = smul.addr %s418, 16
        %s422 = sadd.s32 %s420, %s421
        %s423 = smul.addr %s422, 8
        %s424 = scalar_lea.vmem %s2, %s423
      $region44: #{punc_las_forward.4} parent=39 // pred_fallthru
        _
    $region40: #{punc_las_forward.4} parent=5 // pred_fallthru
      _
  $region6: #{punc_las_forward.4} parent=0 // loop_footer
    %s12 = sadd.s32 1, %s8
  $region7: #{punc_las_forward.4} parent=0 // loop_footer_branch
    %7 = sbr.rel target = $region3
  $region8: #{punc_las_forward.4} parent=0 // loop_exit
    _

// kernel: punc_las_forward.6
$region0: #{punc_las_forward.6}
  #allocation0 [shape = 'u32[]', space=smem, size = 0x4, offset = 0x4, fixed_abs, tag = 'smem constant byte address 0x4 - core index']
  #allocation1 [shape = 'u32[144,128]{1,0:T(1,128)}', space=vmem, size = 0x12000, scoped, tag = 'internal scratch']
  #allocation2 [shape = 'f32[8,32]{1,0:T(8,128)}', space=vmem, size = 0x1000, scoped, tag = 'scratch operand']
  #allocation3 [shape = 'f32[8,32]{1,0:T(8,128)}', space=vmem, size = 0x1000, scoped, tag = 'scratch operand']
  %s0 = inlined_call_operand.vmem [shape: f32[2,4,8,128], index: 0, kind: input, shape index: {}]
  %s1 = inlined_call_operand.vmem [shape: f32[2,32,128], index: 1, kind: input, shape index: {}]
  %s2 = inlined_call_operand.vmem [shape: f32[2,4,8,32], index: 2, kind: output, shape index: {}]
  %s3 = sld [smem:[#allocation0]]
  $region45: #{punc_las_forward.6} parent=0
    _
  %s5 = ssub.s32 1, %s3
  %s6 = scalar_select 0, %s5, %s3
  loop: start=0, step=1, limit=10
  $region2: #{punc_las_forward.6} parent=0 // loop_pre_header
    _
  $region3: #{punc_las_forward.6} parent=0 // loop_header
    %s8 = sphi 0, %s12
    %p9 = scmp.ge.s32.totalorder %s8, 10
    %s15 = sphi 0, %s27
    %s16 = sphi 0, %s23
    %s17 = sphi 0, %s15
    %s18 = sphi 0, %s16
    %s19 = sphi 0, %s17
    %s20 = sphi 0, %s18
    %s42 = sphi 0, %s44
    %s45 = sphi 0, %s42
    %s46 = sphi 0, %s45
    %s62 = sphi 0, %s46
    %s68 = sphi 0, %s70
    %s71 = sphi 0, %s68
    %s72 = sphi 0, %s71
    %s88 = sphi 0, %s72
    %s106 = sphi 0, %s108
    %s109 = sphi 0, %s106
    %s110 = sphi 0, %s109
    %s126 = sphi 0, %s110
  $region4: #{punc_las_forward.6} parent=0 // loop_header_branch
    %11 = sbr.rel (%p9) target = $region8
  $region5: #{punc_las_forward.6} parent=0 // loop_body
    %s13 = ssub.s32 %s8, 1
    %s14 = ssub.s32 %s8, 2
    %s21 = sadd.s32 1, %s16
    %p22 = scmp.ge.s32.totalorder %s21, 4
    %s23 = scalar_select %p22, 0, %s21
    %s24 = sadd.s32 1, %s15
    %s25 = scalar_select %p22, %s24, %s15
    %p26 = scmp.ge.s32.totalorder %s25, 2
    %s27 = scalar_select %p26, 0, %s25
    %s28 = smul.u32 %s15, 3
    %s29 = smul.u32 %s15, 2
    %s30 = ssub.s32 1, %s29
    %s31 = smul.u32 %s30, %s16
    %s32 = sadd.s32 %s28, %s31
    %s33 = smul.u32 %s27, 3
    %s34 = smul.u32 %s27, 2
    %s35 = ssub.s32 1, %s34
    %s36 = smul.u32 %s35, %s23
    %s37 = sadd.s32 %s33, %s36
    %s38 = ssub.s32 %s15, %s27
    %s39 = ssub.s32 %s32, %s37
    %s40 = sor.u32 %s38, %s39
    %p41 = scmp.eq.s32.totalorder %s40, 0
    %s43 = sadd.s32 %s42, 1
    %s44 = scalar_select %p41, %s42, %s43
    %p47 = pneg %p41
    %p48 = scmp.eq.s32.totalorder %s8, 7
    %p49 = por %p47, %p48
    %p50 = scmp.ne.s32.totalorder %s42, %s45
    %p51 = scmp.eq.s32.totalorder %s8, 0
    %p52 = por %p50, %p51
    %p53 = scmp.ne.s32.totalorder %s42, %s45
    %p54 = scmp.eq.s32.totalorder %s13, 7
    %p55 = por %p53, %p54
    %p56 = scmp.ne.s32.totalorder %s45, %s46
    %p57 = scmp.eq.s32.totalorder %s13, 0
    %p58 = por %p56, %p57
    %p59 = scmp.ne.s32.totalorder %s45, %s46
    %p60 = scmp.eq.s32.totalorder %s14, 7
    %p61 = por %p59, %p60
    %p63 = scmp.ne.s32.totalorder %s46, %s62
    %p64 = scmp.eq.s32.totalorder %s14, 0
    %p65 = por %p63, %p64
    %s66 = ssub.s32 %s15, %s27
    %p67 = scmp.eq.s32.totalorder %s66, 0
    %s69 = sadd.s32 %s68, 1
    %s70 = scalar_select %p67, %s68, %s69
    %p73 = pneg %p67
    %p74 = scmp.eq.s32.totalorder %s8, 7
    %p75 = por %p73, %p74
    %p76 = scmp.ne.s32.totalorder %s68, %s71
    %p77 = scmp.eq.s32.totalorder %s8, 0
    %p78 = por %p76, %p77
    %p79 = scmp.ne.s32.totalorder %s68, %s71
    %p80 = scmp.eq.s32.totalorder %s13, 7
    %p81 = por %p79, %p80
    %p82 = scmp.ne.s32.totalorder %s71, %s72
    %p83 = scmp.eq.s32.totalorder %s13, 0
    %p84 = por %p82, %p83
    %p85 = scmp.ne.s32.totalorder %s71, %s72
    %p86 = scmp.eq.s32.totalorder %s14, 7
    %p87 = por %p85, %p86
    %p89 = scmp.ne.s32.totalorder %s72, %s88
    %p90 = scmp.eq.s32.totalorder %s14, 0
    %p91 = por %p89, %p90
    %s92 = smul.u32 %s15, 3
    %s93 = smul.u32 %s15, 2
    %s94 = ssub.s32 1, %s93
    %s95 = smul.u32 %s94, %s16
    %s96 = sadd.s32 %s92, %s95
    %s97 = smul.u32 %s27, 3
    %s98 = smul.u32 %s27, 2
    %s99 = ssub.s32 1, %s98
    %s100 = smul.u32 %s99, %s23
    %s101 = sadd.s32 %s97, %s100
    %s102 = ssub.s32 %s15, %s27
    %s103 = ssub.s32 %s96, %s101
    %s104 = sor.u32 %s102, %s103
    %p105 = scmp.eq.s32.totalorder %s104, 0
    %s107 = sadd.s32 %s106, 1
    %s108 = scalar_select %p105, %s106, %s107
    %p111 = pneg %p105
    %p112 = scmp.eq.s32.totalorder %s8, 7
    %p113 = por %p111, %p112
    %p114 = scmp.ne.s32.totalorder %s106, %s109
    %p115 = scmp.eq.s32.totalorder %s8, 0
    %p116 = por %p114, %p115
    %p117 = scmp.ne.s32.totalorder %s106, %s109
    %p118 = scmp.eq.s32.totalorder %s13, 7
    %p119 = por %p117, %p118
    %p120 = scmp.ne.s32.totalorder %s109, %s110
    %p121 = scmp.eq.s32.totalorder %s13, 0
    %p122 = por %p120, %p121
    %p123 = scmp.ne.s32.totalorder %s109, %s110
    %p124 = scmp.eq.s32.totalorder %s14, 7
    %p125 = por %p123, %p124
    %p127 = scmp.ne.s32.totalorder %s110, %s126
    %p128 = scmp.eq.s32.totalorder %s14, 0
    %p129 = por %p127, %p128
    %p130 = scmp.le.s32.totalorder 1, %s8
    %p131 = scmp.lt.s32.totalorder %s8, 9
    %p132 = pnand %p130, %p131
    %p133 = pneg %p132
    // Predicated region
    $region9: #{punc_las_forward.6} parent=5 // pred_check
      _
    $region10: #{punc_las_forward.6} parent=5 // pred_check_branch
      %135 = sbr.rel (%p132) target = $region12
    $region11: #{punc_las_forward.6} parent=5 // pred_region
      %s136 = ssub.s32 %s8, 1
    $region12: #{punc_las_forward.6} parent=5 // pred_fallthru
      _
    %p137 = scmp.lt.s32.totalorder %s8, 8
    // Predicated region
    $region13: #{punc_las_forward.6} parent=5 // pred_check
      %p138 = pneg %p137
    $region14: #{punc_las_forward.6} parent=5 // pred_check_branch
      %140 = sbr.rel (%p138) target = $region16
    $region15: #{punc_las_forward.6} parent=5 // pred_region
      // Predicated region
      $region17: #{punc_las_forward.6} parent=15 // pred_check
        %p141 = pneg %p52
      $region18: #{punc_las_forward.6} parent=15 // pred_check_branch
        %143 = sbr.rel (%p141) target = $region20
      $region19: #{punc_las_forward.6} parent=15 // pred_region
        %s144 = smul.u32 %s15, 3
        %s145 = smul.u32 %s15, 2
        %s146 = ssub.s32 1, %s145
        %s147 = smul.u32 %s146, %s16
        %s148 = sadd.s32 %s144, %s147
        %p149 = scmp.lt.s32.totalorder %s15, 1
        %s150 = scalar_select %p149, %s15, 1
        %p151 = scmp.lt.s32.totalorder %s148, 3
        %s152 = scalar_select %p151, %s148, 3
        %s153 = smul.addr %s150, 4
        %s154 = sadd.s32 %s152, %s153
        %s155 = smul.addr %s154, 8
        %s156 = scalar_lea.vmem %s0, %s155
        %s157 = smul.u32 %s15, 3
        %s158 = smul.u32 %s15, 2
        %s159 = ssub.s32 1, %s158
        %s160 = smul.u32 %s159, %s16
        %s161 = sadd.s32 %s157, %s160
      $region20: #{punc_las_forward.6} parent=15 // pred_fallthru
        _
      // Predicated region
      $region21: #{punc_las_forward.6} parent=15 // pred_check
        %p162 = pneg %p78
      $region22: #{punc_las_forward.6} parent=15 // pred_check_branch
        %164 = sbr.rel (%p162) target = $region24
      $region23: #{punc_las_forward.6} parent=15 // pred_region
        %p165 = scmp.lt.s32.totalorder %s15, 1
        %s166 = scalar_select %p165, %s15, 1
        %s167 = smul.addr %s166, 4
        %s168 = smul.addr %s167, 8
        %s169 = scalar_lea.vmem %s1, %s168
      $region24: #{punc_las_forward.6} parent=15 // pred_fallthru
        _
    $region16: #{punc_las_forward.6} parent=5 // pred_fallthru
      _
    %p170 = scmp.le.s32.totalorder 1, %s8
    %p171 = scmp.lt.s32.totalorder %s8, 9
    %p172 = pnand %p170, %p171
    %p173 = pneg %p172
    // Predicated region
    $region25: #{punc_las_forward.6} parent=5 // pred_check
      _
    $region26: #{punc_las_forward.6} parent=5 // pred_check_branch
      %175 = sbr.rel (%p172) target = $region28
    $region27: #{punc_las_forward.6} parent=5 // pred_region
      %s176 = ssub.s32 %s8, 1
      %s177 = smul.u32 %s17, 3
      %s178 = smul.u32 %s17, 2
      %s179 = ssub.s32 1, %s178
      %s180 = smul.u32 %s179, %s18
      %s181 = sadd.s32 %s177, %s180
      %p182 = scmp.lt.s32.totalorder %s17, 1
      %s183 = scalar_select %p182, %s17, 1
      %p184 = scmp.lt.s32.totalorder %s181, 3
      %s185 = scalar_select %p184, %s181, 3
      %s186 = smul.addr %s183, 4
      %s187 = sadd.s32 %s185, %s186
      %s188 = smul.addr %s187, 8
      %s189 = scalar_lea.vmem %s0, %s188
      %p190 = pneg %p58
      %p191 = pneg %p55
      %p192 = scmp.lt.s32.totalorder %s17, 1
      %s193 = scalar_select %p192, %s17, 1
      %s194 = smul.addr %s193, 4
      %s195 = smul.addr %s194, 8
      %s196 = scalar_lea.vmem %s1, %s195
      %p197 = pneg %p84
      %p198 = pneg %p81
      %p199 = pneg %p122
      %p200 = pneg %p119
      %s201 = smul.u32 %s17, 3
      %s202 = smul.u32 %s17, 2
      %s203 = ssub.s32 1, %s202
      %s204 = smul.u32 %s203, %s18
      %s205 = sadd.s32 %s201, %s204
      %p206 = scmp.lt.s32.totalorder %s17, 1
      %s207 = scalar_select %p206, %s17, 1
      %p208 = scmp.lt.s32.totalorder %s205, 3
      %s209 = scalar_select %p208, %s205, 3
      %s210 = smul.addr %s207, 4
      %s211 = sadd.s32 %s209, %s210
      %s212 = smul.addr %s211, 8
      %s213 = scalar_lea.vmem %s2, %s212
      %s214 = smul.u32 %s17, 3
      %s215 = smul.u32 %s17, 2
      %s216 = ssub.s32 1, %s215
      %s217 = smul.u32 %s216, %s18
      %s218 = sadd.s32 %s214, %s217
      %p219 = scmp.lt.s32.totalorder %s17, 1
      %s220 = scalar_select %p219, %s17, 1
      %p221 = scmp.lt.s32.totalorder %s218, 3
      %s222 = scalar_select %p221, %s218, 3
      %s223 = smul.addr %s220, 4
      %s224 = sadd.s32 %s222, %s223
      %s225 = smul.addr %s224, 8
      %s226 = scalar_lea.vmem %s0, %s225
      %s227 = smul.u32 %s17, 3
      %s228 = smul.u32 %s17, 2
      %s229 = ssub.s32 1, %s228
      %s230 = smul.u32 %s229, %s18
      %s231 = sadd.s32 %s227, %s230
      %p232 = scmp.lt.s32.totalorder %s17, 1
      %s233 = scalar_select %p232, %s17, 1
      %s234 = smul.addr %s233, 4
      %s235 = smul.addr %s234, 8
      %s236 = scalar_lea.vmem %s1, %s235
      %s237 = smul.u32 %s17, 3
      %s238 = smul.u32 %s17, 2
      %s239 = ssub.s32 1, %s238
      %s240 = smul.u32 %s239, %s18
      %s241 = sadd.s32 %s237, %s240
      %p242 = scmp.lt.s32.totalorder %s17, 1
      %s243 = scalar_select %p242, %s17, 1
      %p244 = scmp.lt.s32.totalorder %s241, 3
      %s245 = scalar_select %p244, %s241, 3
      %s246 = smul.addr %s243, 4
      %s247 = sadd.s32 %s245, %s246
      %s248 = smul.addr %s247, 8
      %s249 = scalar_lea.vmem %s2, %s248
      %s250 = smul.u32 %s17, 3
      %s251 = smul.u32 %s17, 2
      %s252 = ssub.s32 1, %s251
      %s253 = smul.u32 %s252, %s18
      %s254 = sadd.s32 %s250, %s253
      %p255 = scmp.eq.s32.totalorder %s18, 0
      // Predicated region
      $region29: #{punc_las_forward.6} parent=27 // pred_check
        %p256 = pneg %p255
      $region30: #{punc_las_forward.6} parent=27 // pred_check_branch
        %258 = sbr.rel (%p256) target = $region32
      $region31: #{punc_las_forward.6} parent=27 // pred_region
        %vm259 = vcmask 261120
        %260 = vst.msk [vmem:[#allocation2] sm:$0xff] %vm259, 0.0
        %261 = vst.msk [vmem:[#allocation3] sm:$0xff] %vm259, 0.0
      $region32: #{punc_las_forward.6} parent=27 // pred_fallthru
        _
      %v262 = vld [vmem:[%s226] sm:$0xff]
      %v263 = vld [vmem:[#allocation2] sm:$0xff]
      %v264 = vld [vmem:[%s236] sm:$0xff]
      %v265 = vld [vmem:[%s236 + $0x8] sm:$0xff]
      %v266 = vld [vmem:[%s236 + $0x10] sm:$0xff]
      %v267 = vld [vmem:[%s236 + $0x18] sm:$0xff]
      %vm268 = vcmask 261120
      %v270 = vsel %vm268, %v263, 0
      %272 = vmatprep.subr.mxu0 0.0
      %273 = vmatpush1.msra.mxu0 0.0
      %274 = vmatprep.subr.mxu0 0.0
      %275 = vmatpush1.msra.mxu0 0.0
      %276 = vmatprep.subr.mxu0 0.0
      %277 = vmatpush1.msra.mxu0 0.0
      %278 = vmatprep.subr.mxu0 0.0
      %279 = vmatpush1.msra.mxu0 0.0
      %280 = vmatprep.subr.mxu0 0.0
      %281 = vmatpush1.msra.mxu0 0.0
      %282 = vmatprep.subr.mxu0 0.0
      %283 = vmatpush1.msra.mxu0 0.0
      %284 = vmatprep.subr.mxu0 0.0
      %285 = vmatpush1.msra.mxu0 0.0
      %286 = vmatprep.subr.mxu0 0.0
      %287 = vmatpush1.msra.mxu0 0.0
      %288 = vmatprep.subr.mxu0 0.0
      %289 = vmatpush1.msra.mxu0 0.0
      %290 = vmatprep.subr.mxu0 0.0
      %291 = vmatpush1.msra.mxu0 0.0
      %292 = vmatprep.subr.mxu0 0.0
      %293 = vmatpush1.msra.mxu0 0.0
      %294 = vmatprep.subr.mxu0 0.0
      %295 = vmatpush1.msra.mxu0 0.0
      %296 = vmatprep.subr.mxu0 0.0
      %297 = vmatpush1.msra.mxu0 %v267
      %298 = vmatprep.subr.mxu0 0.0
      %299 = vmatpush1.msra.mxu0 %v266
      %300 = vmatprep.subr.mxu0 0.0
      %301 = vmatpush1.msra.mxu0 %v265
      %302 = vmatprep.subr.mxu0 0.0
      %303 = vmatpush1.msra.mxu0 %v264
      %304 = vmatprep.subr.mxu0 0.0
      %305 = vmatpush2.msra.mxu0 0.0
      %306 = vmatprep.subr.mxu0 0.0
      %307 = vmatpush2.msra.mxu0 0.0
      %308 = vmatprep.subr.mxu0 0.0
      %309 = vmatpush2.msra.mxu0 0.0
      %310 = vmatprep.subr.mxu0 0.0
      %311 = vmatpush2.msra.mxu0 0.0
      %312 = vmatprep.subr.mxu0 0.0
      %313 = vmatpush2.msra.mxu0 0.0
      %314 = vmatprep.subr.mxu0 0.0
      %315 = vmatpush2.msra.mxu0 0.0
      %316 = vmatprep.subr.mxu0 0.0
      %317 = vmatpush2.msra.mxu0 0.0
      %318 = vmatprep.subr.mxu0 0.0
      %319 = vmatpush2.msra.mxu0 0.0
      %320 = vmatprep.subr.mxu0 0.0
      %321 = vmatpush2.msra.mxu0 0.0
      %322 = vmatprep.subr.mxu0 0.0
      %323 = vmatpush2.msra.mxu0 0.0
      %324 = vmatprep.subr.mxu0 0.0
      %325 = vmatpush2.msra.mxu0 0.0
      %326 = vmatprep.subr.mxu0 0.0
      %327 = vmatpush2.msra.mxu0 0.0
      %328 = vmatprep.subr.mxu0 0.0
      %329 = vmatpush2.msra.mxu0 0.0
      %330 = vmatprep.subr.mxu0 0.0
      %331 = vmatpush2.msra.mxu0 0.0
      %332 = vmatprep.subr.mxu0 0.0
      %333 = vmatpush2.msra.mxu0 0.0
      %334 = vmatprep.subr.mxu0 0.0
      %335 = vmatpush2.msra.mxu0 0.0
      %336 = vmatprep.mubr.f32.mxu0 0.0
      %337 = vmatmul.mubr.f32.gmra.mxu0 %v270
      %v338 = vpop.f32.mrf.mxu0
      %v339 = vadd.f32 0.0, %v338
      %v340 = vpop.f32.mrf.mxu0
      %341 = vdwg.mxu0
      %v342 = vadd.f32 %v262, %v339
      %v343 = vxor.u32 %v342, 2147483648
      %v344 = vmul.f32 %v343, 1.442695
      %v345 = vpow.pop %v344
      %v346 = vadd.f32 %v345, 1.0
      %v347 = vrcp.pop %v346
      %v348 = vmul.f32 1.0, %v347
      %v349 = vtanh.pop %v342
      %v350 = vld [vmem:[#allocation3] sm:$0xff]
      %352 = vrot.lane.b32.xlu0 %v350, 32
      %v353 = vpop.permute.xlu0 %352
      %v355 = vmul.f32 %v348, %v353
      %357 = vrot.lane.b32.xlu0 %v349, 64
      %v358 = vpop.permute.xlu0 %357
      %v360 = vmul.f32 %v348, %v358
      %362 = vrot.lane.b32.xlu0 %v360, 32
      %v363 = vpop.permute.xlu0 %362
      %v365 = vadd.f32 %v355, %v363
      %v366 = vtanh.pop %v365
      %368 = vrot.lane.b32.xlu0 %v366, 64
      %v369 = vpop.permute.xlu0 %368
      %v371 = vmul.f32 %v348, %v369
      %373 = vrot.lane.b32.xlu0 %v365, 96
      %v374 = vpop.permute.xlu0 %373
      %376 = vst.msk [vmem:[#allocation3] sm:$0xff] %vm268, %v374
      %378 = vrot.lane.b32.xlu0 %v371, 32
      %v379 = vpop.permute.xlu0 %378
      %381 = vst.msk [vmem:[#allocation2] sm:$0xff] %vm268, %v379
      %382 = vst.msk [vmem:[%s249] sm:$0xff] %vm268, %v379
      %s383 = smul.u32 %s17, 3
      %s384 = smul.u32 %s17, 2
      %s385 = ssub.s32 1, %s384
      %s386 = smul.u32 %s385, %s18
      %s387 = sadd.s32 %s383, %s386
      %p388 = scmp.lt.s32.totalorder %s17, 1
      %s389 = scalar_select %p388, %s17, 1
      %p390 = scmp.lt.s32.totalorder %s387, 3
      %s391 = scalar_select %p390, %s387, 3
      %s392 = smul.addr %s389, 4
      %s393 = sadd.s32 %s391, %s392
      %s394 = smul.addr %s393, 8
      %s395 = scalar_lea.vmem %s2, %s394
      // Predicated region
      $region33: #{punc_las_forward.6} parent=27 // pred_check
        %p396 = pneg %p119
      $region34: #{punc_las_forward.6} parent=27 // pred_check_branch
        %398 = sbr.rel (%p396) target = $region36
      $region35: #{punc_las_forward.6} parent=27 // pred_region
        %s399 = smul.u32 %s17, 3
        %s400 = smul.u32 %s17, 2
        %s401 = ssub.s32 1, %s400
        %s402 = smul.u32 %s401, %s18
        %s403 = sadd.s32 %s399, %s402
      $region36: #{punc_las_forward.6} parent=27 // pred_fallthru
        _
    $region28: #{punc_las_forward.6} parent=5 // pred_fallthru
      _
    %p404 = scmp.le.s32.totalorder 2, %s8
    // Predicated region
    $region37: #{punc_las_forward.6} parent=5 // pred_check
      %p405 = pneg %p404
    $region38: #{punc_las_forward.6} parent=5 // pred_check_branch
      %407 = sbr.rel (%p405) target = $region40
    $region39: #{punc_las_forward.6} parent=5 // pred_region
      %s408 = ssub.s32 %s8, 2
      // Predicated region
      $region41: #{punc_las_forward.6} parent=39 // pred_check
        %p409 = pneg %p125
      $region42: #{punc_las_forward.6} parent=39 // pred_check_branch
        %411 = sbr.rel (%p409) target = $region44
      $region43: #{punc_las_forward.6} parent=39 // pred_region
        %s412 = smul.u32 %s19, 3
        %s413 = smul.u32 %s19, 2
        %s414 = ssub.s32 1, %s413
        %s415 = smul.u32 %s414, %s20
        %s416 = sadd.s32 %s412, %s415
        %p417 = scmp.lt.s32.totalorder %s19, 1
        %s418 = scalar_select %p417, %s19, 1
        %p419 = scmp.lt.s32.totalorder %s416, 3
        %s420 = scalar_select %p419, %s416, 3
        %s421 = smul.addr %s418, 4
        %s422 = sadd.s32 %s420, %s421
        %s423 = smul.addr %s422, 8
        %s424 = scalar_lea.vmem %s2, %s423
      $region44: #{punc_las_forward.6} parent=39 // pred_fallthru
        _
    $region40: #{punc_las_forward.6} parent=5 // pred_fallthru
      _
  $region6: #{punc_las_forward.6} parent=0 // loop_footer
    %s12 = sadd.s32 1, %s8
  $region7: #{punc_las_forward.6} parent=0 // loop_footer_branch
    %7 = sbr.rel target = $region3
  $region8: #{punc_las_forward.6} parent=0 // loop_exit
    _

// kernel: punc_las_forward.7
$region0: #{punc_las_forward.7}
  #allocation0 [shape = 'u32[]', space=smem, size = 0x4, offset = 0x4, fixed_abs, tag = 'smem constant byte address 0x4 - core index']
  #allocation1 [shape = 'u32[144,128]{1,0:T(1,128)}', space=vmem, size = 0x12000, scoped, tag = 'internal scratch']
  #allocation2 [shape = 'f32[8,32]{1,0:T(8,128)}', space=vmem, size = 0x1000, scoped, tag = 'scratch operand']
  #allocation3 [shape = 'f32[8,32]{1,0:T(8,128)}', space=vmem, size = 0x1000, scoped, tag = 'scratch operand']
  #allocation4 [shape = 'f32[8,32]{1,0:T(8,128)}', space=vmem, size = 0x1000, scoped, tag = 'scratch operand']
  #allocation5 [shape = 'f32[8,32]{1,0:T(8,128)}', space=vmem, size = 0x1000, scoped, tag = 'scratch operand']
  %s0 = inlined_call_operand.vmem [shape: f32[8,8,128], index: 0, kind: input, shape index: {}]
  %s1 = inlined_call_operand.vmem [shape: f32[8,4,64], index: 1, kind: input, shape index: {}]
  %s2 = inlined_call_operand.vmem [shape: f32[32,64], index: 2, kind: input, shape index: {}]
  %s3 = inlined_call_operand.vmem [shape: f32[1,64], index: 3, kind: input, shape index: {}]
  %s4 = inlined_call_operand.vmem [shape: f32[64,64], index: 4, kind: input, shape index: {}]
  %s5 = inlined_call_operand.vmem [shape: f32[1,64], index: 5, kind: input, shape index: {}]
  %s6 = inlined_call_operand.vmem [shape: f32[64,128], index: 6, kind: input, shape index: {}]
  %s7 = inlined_call_operand.vmem [shape: f32[32,128], index: 7, kind: input, shape index: {}]
  %s8 = inlined_call_operand.vmem [shape: f32[32,128], index: 8, kind: input, shape index: {}]
  %s9 = inlined_call_operand.vmem [shape: f32[32,128], index: 9, kind: input, shape index: {}]
  %s10 = inlined_call_operand.vmem [shape: f32[1,128], index: 10, kind: input, shape index: {}]
  %s11 = inlined_call_operand.vmem [shape: f32[32,128], index: 11, kind: input, shape index: {}]
  %s12 = inlined_call_operand.vmem [shape: f32[64,128], index: 12, kind: input, shape index: {}]
  %s13 = inlined_call_operand.vmem [shape: f32[1,128], index: 13, kind: input, shape index: {}]
  %s14 = inlined_call_operand.vmem [shape: f32[8,8,128], index: 14, kind: output, shape index: {}]
  %s15 = sld [smem:[#allocation0]]
  $region93: #{punc_las_forward.7} parent=0
    _
  %s17 = ssub.s32 1, %s15
  %s18 = scalar_select 0, %s17, %s15
  loop: start=0, step=1, limit=10
  $region2: #{punc_las_forward.7} parent=0 // loop_pre_header
    _
  $region3: #{punc_las_forward.7} parent=0 // loop_header
    %s20 = sphi 0, %s24
    %p21 = scmp.ge.s32.totalorder %s20, 10
    %s30 = sphi 0, %s32
    %s33 = sphi 0, %s30
    %s34 = sphi 0, %s33
    %s50 = sphi 0, %s34
    %s54 = sphi 0, %s54
    %s56 = sphi 0, %s54
    %s57 = sphi 0, %s56
    %s71 = sphi 0, %s57
    %s75 = sphi 0, %s75
    %s77 = sphi 0, %s75
    %s78 = sphi 0, %s77
    %s92 = sphi 0, %s78
    %s96 = sphi 0, %s96
    %s98 = sphi 0, %s96
    %s99 = sphi 0, %s98
    %s113 = sphi 0, %s99
    %s117 = sphi 0, %s117
    %s119 = sphi 0, %s117
    %s120 = sphi 0, %s119
    %s134 = sphi 0, %s120
    %s138 = sphi 0, %s138
    %s140 = sphi 0, %s138
    %s141 = sphi 0, %s140
    %s155 = sphi 0, %s141
    %s159 = sphi 0, %s159
    %s161 = sphi 0, %s159
    %s162 = sphi 0, %s161
    %s176 = sphi 0, %s162
    %s180 = sphi 0, %s180
    %s182 = sphi 0, %s180
    %s183 = sphi 0, %s182
    %s197 = sphi 0, %s183
    %s201 = sphi 0, %s201
    %s203 = sphi 0, %s201
    %s204 = sphi 0, %s203
    %s218 = sphi 0, %s204
    %s222 = sphi 0, %s222
    %s224 = sphi 0, %s222
    %s225 = sphi 0, %s224
    %s239 = sphi 0, %s225
    %s243 = sphi 0, %s243
    %s245 = sphi 0, %s243
    %s246 = sphi 0, %s245
    %s260 = sphi 0, %s246
    %s264 = sphi 0, %s264
    %s266 = sphi 0, %s264
    %s267 = sphi 0, %s266
    %s281 = sphi 0, %s267
    %s285 = sphi 0, %s285
    %s287 = sphi 0, %s285
    %s288 = sphi 0, %s287
    %s302 = sphi 0, %s288
    %s306 = sphi 0, %s306
    %s308 = sphi 0, %s306
    %s309 = sphi 0, %s308
    %s323 = sphi 0, %s309
    %s329 = sphi 0, %s331
    %s332 = sphi 0, %s329
    %s333 = sphi 0, %s332
    %s349 = sphi 0, %s333
  $region4: #{punc_las_forward.7} parent=0 // loop_header_branch
    %23 = sbr.rel (%p21) target = $region8
  $region5: #{punc_las_forward.7} parent=0 // loop_body
    %s25 = ssub.s32 %s20, 1
    %s26 = ssub.s32 %s20, 2
    %s27 = sadd.s32 %s20, 1
    %s28 = ssub.s32 %s20, %s27
    %p29 = scmp.eq.s32.totalorder %s28, 0
    %s31 = sadd.s32 %s30, 1
    %s32 = scalar_select %p29, %s30, %s31
    %p35 = pneg %p29
    %p36 = scmp.eq.s32.totalorder %s20, 7
    %p37 = por %p35, %p36
    %p38 = scmp.ne.s32.totalorder %s30, %s33
    %p39 = scmp.eq.s32.totalorder %s20, 0
    %p40 = por %p38, %p39
    %p41 = scmp.ne.s32.totalorder %s30, %s33
    %p42 = scmp.eq.s32.totalorder %s25, 7
    %p43 = por %p41, %p42
    %p44 = scmp.ne.s32.totalorder %s33, %s34
    %p45 = scmp.eq.s32.totalorder %s25, 0
    %p46 = por %p44, %p45
    %p47 = scmp.ne.s32.totalorder %s33, %s34
    %p48 = scmp.eq.s32.totalorder %s26, 7
    %p49 = por %p47, %p48
    %p51 = scmp.ne.s32.totalorder %s34, %s50
    %p52 = scmp.eq.s32.totalorder %s26, 0
    %p53 = por %p51, %p52
    %s55 = sadd.s32 %s54, 1
    %p58 = scmp.eq.s32.totalorder %s20, 7
    %p59 = scmp.ne.s32.totalorder %s54, %s56
    %p60 = scmp.eq.s32.totalorder %s20, 0
    %p61 = por %p59, %p60
    %p62 = scmp.ne.s32.totalorder %s54, %s56
    %p63 = scmp.eq.s32.totalorder %s25, 7
    %p64 = por %p62, %p63
    %p65 = scmp.ne.s32.totalorder %s56, %s57
    %p66 = scmp.eq.s32.totalorder %s25, 0
    %p67 = por %p65, %p66
    %p68 = scmp.ne.s32.totalorder %s56, %s57
    %p69 = scmp.eq.s32.totalorder %s26, 7
    %p70 = por %p68, %p69
    %p72 = scmp.ne.s32.totalorder %s57, %s71
    %p73 = scmp.eq.s32.totalorder %s26, 0
    %p74 = por %p72, %p73
    %s76 = sadd.s32 %s75, 1
    %p79 = scmp.eq.s32.totalorder %s20, 7
    %p80 = scmp.ne.s32.totalorder %s75, %s77
    %p81 = scmp.eq.s32.totalorder %s20, 0
    %p82 = por %p80, %p81
    %p83 = scmp.ne.s32.totalorder %s75, %s77
    %p84 = scmp.eq.s32.totalorder %s25, 7
    %p85 = por %p83, %p84
    %p86 = scmp.ne.s32.totalorder %s77, %s78
    %p87 = scmp.eq.s32.totalorder %s25, 0
    %p88 = por %p86, %p87
    %p89 = scmp.ne.s32.totalorder %s77, %s78
    %p90 = scmp.eq.s32.totalorder %s26, 7
    %p91 = por %p89, %p90
    %p93 = scmp.ne.s32.totalorder %s78, %s92
    %p94 = scmp.eq.s32.totalorder %s26, 0
    %p95 = por %p93, %p94
    %s97 = sadd.s32 %s96, 1
    %p100 = scmp.eq.s32.totalorder %s20, 7
    %p101 = scmp.ne.s32.totalorder %s96, %s98
    %p102 = scmp.eq.s32.totalorder %s20, 0
    %p103 = por %p101, %p102
    %p104 = scmp.ne.s32.totalorder %s96, %s98
    %p105 = scmp.eq.s32.totalorder %s25, 7
    %p106 = por %p104, %p105
    %p107 = scmp.ne.s32.totalorder %s98, %s99
    %p108 = scmp.eq.s32.totalorder %s25, 0
    %p109 = por %p107, %p108
    %p110 = scmp.ne.s32.totalorder %s98, %s99
    %p111 = scmp.eq.s32.totalorder %s26, 7
    %p112 = por %p110, %p111
    %p114 = scmp.ne.s32.totalorder %s99, %s113
    %p115 = scmp.eq.s32.totalorder %s26, 0
    %p116 = por %p114, %p115
    %s118 = sadd.s32 %s117, 1
    %p121 = scmp.eq.s32.totalorder %s20, 7
    %p122 = scmp.ne.s32.totalorder %s117, %s119
    %p123 = scmp.eq.s32.totalorder %s20, 0
    %p124 = por %p122, %p123
    %p125 = scmp.ne.s32.totalorder %s117, %s119
    %p126 = scmp.eq.s32.totalorder %s25, 7
    %p127 = por %p125, %p126
    %p128 = scmp.ne.s32.totalorder %s119, %s120
    %p129 = scmp.eq.s32.totalorder %s25, 0
    %p130 = por %p128, %p129
    %p131 = scmp.ne.s32.totalorder %s119, %s120
    %p132 = scmp.eq.s32.totalorder %s26, 7
    %p133 = por %p131, %p132
    %p135 = scmp.ne.s32.totalorder %s120, %s134
    %p136 = scmp.eq.s32.totalorder %s26, 0
    %p137 = por %p135, %p136
    %s139 = sadd.s32 %s138, 1
    %p142 = scmp.eq.s32.totalorder %s20, 7
    %p143 = scmp.ne.s32.totalorder %s138, %s140
    %p144 = scmp.eq.s32.totalorder %s20, 0
    %p145 = por %p143, %p144
    %p146 = scmp.ne.s32.totalorder %s138, %s140
    %p147 = scmp.eq.s32.totalorder %s25, 7
    %p148 = por %p146, %p147
    %p149 = scmp.ne.s32.totalorder %s140, %s141
    %p150 = scmp.eq.s32.totalorder %s25, 0
    %p151 = por %p149, %p150
    %p152 = scmp.ne.s32.totalorder %s140, %s141
    %p153 = scmp.eq.s32.totalorder %s26, 7
    %p154 = por %p152, %p153
    %p156 = scmp.ne.s32.totalorder %s141, %s155
    %p157 = scmp.eq.s32.totalorder %s26, 0
    %p158 = por %p156, %p157
    %s160 = sadd.s32 %s159, 1
    %p163 = scmp.eq.s32.totalorder %s20, 7
    %p164 = scmp.ne.s32.totalorder %s159, %s161
    %p165 = scmp.eq.s32.totalorder %s20, 0
    %p166 = por %p164, %p165
    %p167 = scmp.ne.s32.totalorder %s159, %s161
    %p168 = scmp.eq.s32.totalorder %s25, 7
    %p169 = por %p167, %p168
    %p170 = scmp.ne.s32.totalorder %s161, %s162
    %p171 = scmp.eq.s32.totalorder %s25, 0
    %p172 = por %p170, %p171
    %p173 = scmp.ne.s32.totalorder %s161, %s162
    %p174 = scmp.eq.s32.totalorder %s26, 7
    %p175 = por %p173, %p174
    %p177 = scmp.ne.s32.totalorder %s162, %s176
    %p178 = scmp.eq.s32.totalorder %s26, 0
    %p179 = por %p177, %p178
    %s181 = sadd.s32 %s180, 1
    %p184 = scmp.eq.s32.totalorder %s20, 7
    %p185 = scmp.ne.s32.totalorder %s180, %s182
    %p186 = scmp.eq.s32.totalorder %s20, 0
    %p187 = por %p185, %p186
    %p188 = scmp.ne.s32.totalorder %s180, %s182
    %p189 = scmp.eq.s32.totalorder %s25, 7
    %p190 = por %p188, %p189
    %p191 = scmp.ne.s32.totalorder %s182, %s183
    %p192 = scmp.eq.s32.totalorder %s25, 0
    %p193 = por %p191, %p192
    %p194 = scmp.ne.s32.totalorder %s182, %s183
    %p195 = scmp.eq.s32.totalorder %s26, 7
    %p196 = por %p194, %p195
    %p198 = scmp.ne.s32.totalorder %s183, %s197
    %p199 = scmp.eq.s32.totalorder %s26, 0
    %p200 = por %p198, %p199
    %s202 = sadd.s32 %s201, 1
    %p205 = scmp.eq.s32.totalorder %s20, 7
    %p206 = scmp.ne.s32.totalorder %s201, %s203
    %p207 = scmp.eq.s32.totalorder %s20, 0
    %p208 = por %p206, %p207
    %p209 = scmp.ne.s32.totalorder %s201, %s203
    %p210 = scmp.eq.s32.totalorder %s25, 7
    %p211 = por %p209, %p210
    %p212 = scmp.ne.s32.totalorder %s203, %s204
    %p213 = scmp.eq.s32.totalorder %s25, 0
    %p214 = por %p212, %p213
    %p215 = scmp.ne.s32.totalorder %s203, %s204
    %p216 = scmp.eq.s32.totalorder %s26, 7
    %p217 = por %p215, %p216
    %p219 = scmp.ne.s32.totalorder %s204, %s218
    %p220 = scmp.eq.s32.totalorder %s26, 0
    %p221 = por %p219, %p220
    %s223 = sadd.s32 %s222, 1
    %p226 = scmp.eq.s32.totalorder %s20, 7
    %p227 = scmp.ne.s32.totalorder %s222, %s224
    %p228 = scmp.eq.s32.totalorder %s20, 0
    %p229 = por %p227, %p228
    %p230 = scmp.ne.s32.totalorder %s222, %s224
    %p231 = scmp.eq.s32.totalorder %s25, 7
    %p232 = por %p230, %p231
    %p233 = scmp.ne.s32.totalorder %s224, %s225
    %p234 = scmp.eq.s32.totalorder %s25, 0
    %p235 = por %p233, %p234
    %p236 = scmp.ne.s32.totalorder %s224, %s225
    %p237 = scmp.eq.s32.totalorder %s26, 7
    %p238 = por %p236, %p237
    %p240 = scmp.ne.s32.totalorder %s225, %s239
    %p241 = scmp.eq.s32.totalorder %s26, 0
    %p242 = por %p240, %p241
    %s244 = sadd.s32 %s243, 1
    %p247 = scmp.eq.s32.totalorder %s20, 7
    %p248 = scmp.ne.s32.totalorder %s243, %s245
    %p249 = scmp.eq.s32.totalorder %s20, 0
    %p250 = por %p248, %p249
    %p251 = scmp.ne.s32.totalorder %s243, %s245
    %p252 = scmp.eq.s32.totalorder %s25, 7
    %p253 = por %p251, %p252
    %p254 = scmp.ne.s32.totalorder %s245, %s246
    %p255 = scmp.eq.s32.totalorder %s25, 0
    %p256 = por %p254, %p255
    %p257 = scmp.ne.s32.totalorder %s245, %s246
    %p258 = scmp.eq.s32.totalorder %s26, 7
    %p259 = por %p257, %p258
    %p261 = scmp.ne.s32.totalorder %s246, %s260
    %p262 = scmp.eq.s32.totalorder %s26, 0
    %p263 = por %p261, %p262
    %s265 = sadd.s32 %s264, 1
    %p268 = scmp.eq.s32.totalorder %s20, 7
    %p269 = scmp.ne.s32.totalorder %s264, %s266
    %p270 = scmp.eq.s32.totalorder %s20, 0
    %p271 = por %p269, %p270
    %p272 = scmp.ne.s32.totalorder %s264, %s266
    %p273 = scmp.eq.s32.totalorder %s25, 7
    %p274 = por %p272, %p273
    %p275 = scmp.ne.s32.totalorder %s266, %s267
    %p276 = scmp.eq.s32.totalorder %s25, 0
    %p277 = por %p275, %p276
    %p278 = scmp.ne.s32.totalorder %s266, %s267
    %p279 = scmp.eq.s32.totalorder %s26, 7
    %p280 = por %p278, %p279
    %p282 = scmp.ne.s32.totalorder %s267, %s281
    %p283 = scmp.eq.s32.totalorder %s26, 0
    %p284 = por %p282, %p283
    %s286 = sadd.s32 %s285, 1
    %p289 = scmp.eq.s32.totalorder %s20, 7
    %p290 = scmp.ne.s32.totalorder %s285, %s287
    %p291 = scmp.eq.s32.totalorder %s20, 0
    %p292 = por %p290, %p291
    %p293 = scmp.ne.s32.totalorder %s285, %s287
    %p294 = scmp.eq.s32.totalorder %s25, 7
    %p295 = por %p293, %p294
    %p296 = scmp.ne.s32.totalorder %s287, %s288
    %p297 = scmp.eq.s32.totalorder %s25, 0
    %p298 = por %p296, %p297
    %p299 = scmp.ne.s32.totalorder %s287, %s288
    %p300 = scmp.eq.s32.totalorder %s26, 7
    %p301 = por %p299, %p300
    %p303 = scmp.ne.s32.totalorder %s288, %s302
    %p304 = scmp.eq.s32.totalorder %s26, 0
    %p305 = por %p303, %p304
    %s307 = sadd.s32 %s306, 1
    %p310 = scmp.eq.s32.totalorder %s20, 7
    %p311 = scmp.ne.s32.totalorder %s306, %s308
    %p312 = scmp.eq.s32.totalorder %s20, 0
    %p313 = por %p311, %p312
    %p314 = scmp.ne.s32.totalorder %s306, %s308
    %p315 = scmp.eq.s32.totalorder %s25, 7
    %p316 = por %p314, %p315
    %p317 = scmp.ne.s32.totalorder %s308, %s309
    %p318 = scmp.eq.s32.totalorder %s25, 0
    %p319 = por %p317, %p318
    %p320 = scmp.ne.s32.totalorder %s308, %s309
    %p321 = scmp.eq.s32.totalorder %s26, 7
    %p322 = por %p320, %p321
    %p324 = scmp.ne.s32.totalorder %s309, %s323
    %p325 = scmp.eq.s32.totalorder %s26, 0
    %p326 = por %p324, %p325
    %s327 = ssub.s32 %s20, %s27
    %p328 = scmp.eq.s32.totalorder %s327, 0
    %s330 = sadd.s32 %s329, 1
    %s331 = scalar_select %p328, %s329, %s330
    %p334 = pneg %p328
    %p335 = scmp.eq.s32.totalorder %s20, 7
    %p336 = por %p334, %p335
    %p337 = scmp.ne.s32.totalorder %s329, %s332
    %p338 = scmp.eq.s32.totalorder %s20, 0
    %p339 = por %p337, %p338
    %p340 = scmp.ne.s32.totalorder %s329, %s332
    %p341 = scmp.eq.s32.totalorder %s25, 7
    %p342 = por %p340, %p341
    %p343 = scmp.ne.s32.totalorder %s332, %s333
    %p344 = scmp.eq.s32.totalorder %s25, 0
    %p345 = por %p343, %p344
    %p346 = scmp.ne.s32.totalorder %s332, %s333
    %p347 = scmp.eq.s32.totalorder %s26, 7
    %p348 = por %p346, %p347
    %p350 = scmp.ne.s32.totalorder %s333, %s349
    %p351 = scmp.eq.s32.totalorder %s26, 0
    %p352 = por %p350, %p351
    %p353 = scmp.le.s32.totalorder 1, %s20
    %p354 = scmp.lt.s32.totalorder %s20, 9
    %p355 = pnand %p353, %p354
    %p356 = pneg %p355
    // Predicated region
    $region9: #{punc_las_forward.7} parent=5 // pred_check
      _
    $region10: #{punc_las_forward.7} parent=5 // pred_check_branch
      %358 = sbr.rel (%p355) target = $region12
    $region11: #{punc_las_forward.7} parent=5 // pred_region
      %s359 = ssub.s32 %s20, 1
      // Predicated region
      $region13: #{punc_las_forward.7} parent=11 // pred_check
        %p360 = pneg %p67
      $region14: #{punc_las_forward.7} parent=11 // pred_check_branch
        %362 = sbr.rel (%p360) target = $region16
      $region15: #{punc_las_forward.7} parent=11 // pred_region
        _
      $region16: #{punc_las_forward.7} parent=11 // pred_fallthru
        _
      // Predicated region
      $region17: #{punc_las_forward.7} parent=11 // pred_check
        %p363 = pneg %p88
      $region18: #{punc_las_forward.7} parent=11 // pred_check_branch
        %365 = sbr.rel (%p363) target = $region20
      $region19: #{punc_las_forward.7} parent=11 // pred_region
        _
      $region20: #{punc_las_forward.7} parent=11 // pred_fallthru
        _
      // Predicated region
      $region21: #{punc_las_forward.7} parent=11 // pred_check
        %p366 = pneg %p109
      $region22: #{punc_las_forward.7} parent=11 // pred_check_branch
        %368 = sbr.rel (%p366) target = $region24
      $region23: #{punc_las_forward.7} parent=11 // pred_region
        _
      $region24: #{punc_las_forward.7} parent=11 // pred_fallthru
        _
      // Predicated region
      $region25: #{punc_las_forward.7} parent=11 // pred_check
        %p369 = pneg %p130
      $region26: #{punc_las_forward.7} parent=11 // pred_check_branch
        %371 = sbr.rel (%p369) target = $region28
      $region27: #{punc_las_forward.7} parent=11 // pred_region
        _
      $region28: #{punc_las_forward.7} parent=11 // pred_fallthru
        _
      // Predicated region
      $region29: #{punc_las_forward.7} parent=11 // pred_check
        %p372 = pneg %p151
      $region30: #{punc_las_forward.7} parent=11 // pred_check_branch
        %374 = sbr.rel (%p372) target = $region32
      $region31: #{punc_las_forward.7} parent=11 // pred_region
        _
      $region32: #{punc_las_forward.7} parent=11 // pred_fallthru
        _
      // Predicated region
      $region33: #{punc_las_forward.7} parent=11 // pred_check
        %p375 = pneg %p172
      $region34: #{punc_las_forward.7} parent=11 // pred_check_branch
        %377 = sbr.rel (%p375) target = $region36
      $region35: #{punc_las_forward.7} parent=11 // pred_region
        _
      $region36: #{punc_las_forward.7} parent=11 // pred_fallthru
        _
      // Predicated region
      $region37: #{punc_las_forward.7} parent=11 // pred_check
        %p378 = pneg %p193
      $region38: #{punc_las_forward.7} parent=11 // pred_check_branch
        %380 = sbr.rel (%p378) target = $region40
      $region39: #{punc_las_forward.7} parent=11 // pred_region
        _
      $region40: #{punc_las_forward.7} parent=11 // pred_fallthru
        _
      // Predicated region
      $region41: #{punc_las_forward.7} parent=11 // pred_check
        %p381 = pneg %p214
      $region42: #{punc_las_forward.7} parent=11 // pred_check_branch
        %383 = sbr.rel (%p381) target = $region44
      $region43: #{punc_las_forward.7} parent=11 // pred_region
        _
      $region44: #{punc_las_forward.7} parent=11 // pred_fallthru
        _
      // Predicated region
      $region45: #{punc_las_forward.7} parent=11 // pred_check
        %p384 = pneg %p235
      $region46: #{punc_las_forward.7} parent=11 // pred_check_branch
        %386 = sbr.rel (%p384) target = $region48
      $region47: #{punc_las_forward.7} parent=11 // pred_region
        _
      $region48: #{punc_las_forward.7} parent=11 // pred_fallthru
        _
      // Predicated region
      $region49: #{punc_las_forward.7} parent=11 // pred_check
        %p387 = pneg %p256
      $region50: #{punc_las_forward.7} parent=11 // pred_check_branch
        %389 = sbr.rel (%p387) target = $region52
      $region51: #{punc_las_forward.7} parent=11 // pred_region
        _
      $region52: #{punc_las_forward.7} parent=11 // pred_fallthru
        _
      // Predicated region
      $region53: #{punc_las_forward.7} parent=11 // pred_check
        %p390 = pneg %p277
      $region54: #{punc_las_forward.7} parent=11 // pred_check_branch
        %392 = sbr.rel (%p390) target = $region56
      $region55: #{punc_las_forward.7} parent=11 // pred_region
        _
      $region56: #{punc_las_forward.7} parent=11 // pred_fallthru
        _
      // Predicated region
      $region57: #{punc_las_forward.7} parent=11 // pred_check
        %p393 = pneg %p298
      $region58: #{punc_las_forward.7} parent=11 // pred_check_branch
        %395 = sbr.rel (%p393) target = $region60
      $region59: #{punc_las_forward.7} parent=11 // pred_region
        _
      $region60: #{punc_las_forward.7} parent=11 // pred_fallthru
        _
      // Predicated region
      $region61: #{punc_las_forward.7} parent=11 // pred_check
        %p396 = pneg %p319
      $region62: #{punc_las_forward.7} parent=11 // pred_check_branch
        %398 = sbr.rel (%p396) target = $region64
      $region63: #{punc_las_forward.7} parent=11 // pred_region
        _
      $region64: #{punc_las_forward.7} parent=11 // pred_fallthru
        _
    $region12: #{punc_las_forward.7} parent=5 // pred_fallthru
      _
    %p399 = scmp.lt.s32.totalorder %s20, 8
    // Predicated region
    $region65: #{punc_las_forward.7} parent=5 // pred_check
      %p400 = pneg %p399
    $region66: #{punc_las_forward.7} parent=5 // pred_check_branch
      %402 = sbr.rel (%p400) target = $region68
    $region67: #{punc_las_forward.7} parent=5 // pred_region
      // Predicated region
      $region69: #{punc_las_forward.7} parent=67 // pred_check
        %p403 = pneg %p40
      $region70: #{punc_las_forward.7} parent=67 // pred_check_branch
        %405 = sbr.rel (%p403) target = $region72
      $region71: #{punc_las_forward.7} parent=67 // pred_region
        %p406 = scmp.lt.s32.totalorder %s20, 7
        %s407 = scalar_select %p406, %s20, 7
        %s408 = smul.addr %s407, 8
        %s409 = scalar_lea.vmem %s0, %s408
      $region72: #{punc_las_forward.7} parent=67 // pred_fallthru
        _
    $region68: #{punc_las_forward.7} parent=5 // pred_fallthru
      _
    %p410 = scmp.le.s32.totalorder 1, %s20
    %p411 = scmp.lt.s32.totalorder %s20, 9
    %p412 = pnand %p410, %p411
    %p413 = pneg %p412
    // Predicated region
    $region73: #{punc_las_forward.7} parent=5 // pred_check
      _
    $region74: #{punc_las_forward.7} parent=5 // pred_check_branch
      %415 = sbr.rel (%p412) target = $region76
    $region75: #{punc_las_forward.7} parent=5 // pred_region
      %s416 = ssub.s32 %s20, 1
      %p417 = scmp.lt.s32.totalorder %s25, 7
      %s418 = scalar_select %p417, %s25, 7
      %s419 = smul.addr %s418, 8
      %s420 = scalar_lea.vmem %s0, %s419
      %p421 = pneg %p46
      %p422 = pneg %p43
      %p423 = pneg %p67
      %p424 = pneg %p64
      %p425 = pneg %p88
      %p426 = pneg %p85
      %p427 = pneg %p109
      %p428 = pneg %p106
      %p429 = pneg %p130
      %p430 = pneg %p127
      %p431 = pneg %p151
      %p432 = pneg %p148
      %p433 = pneg %p172
      %p434 = pneg %p169
      %p435 = pneg %p193
      %p436 = pneg %p190
      %p437 = pneg %p214
      %p438 = pneg %p211
      %p439 = pneg %p235
      %p440 = pneg %p232
      %p441 = pneg %p256
      %p442 = pneg %p253
      %p443 = pneg %p277
      %p444 = pneg %p274
      %p445 = pneg %p298
      %p446 = pneg %p295
      %p447 = pneg %p319
      %p448 = pneg %p316
      %p449 = pneg %p345
      %p450 = pneg %p342
      %p451 = scmp.lt.s32.totalorder %s25, 7
      %s452 = scalar_select %p451, %s25, 7
      %s453 = smul.addr %s452, 8
      %s454 = scalar_lea.vmem %s14, %s453
      %p455 = scmp.lt.s32.totalorder %s25, 7
      %s456 = scalar_select %p455, %s25, 7
      %s457 = smul.addr %s456, 8
      %s458 = scalar_lea.vmem %s0, %s457
      %p459 = scmp.lt.s32.totalorder %s25, 7
      %s460 = scalar_select %p459, %s25, 7
      %s461 = smul.addr %s460, 8
      %s462 = scalar_lea.vmem %s14, %s461
      %p463 = scmp.eq.s32.totalorder %s25, 0
      // Predicated region
      $region77: #{punc_las_forward.7} parent=75 // pred_check
        %p464 = pneg %p463
      $region78: #{punc_las_forward.7} parent=75 // pred_check_branch
        %466 = sbr.rel (%p464) target = $region80
      $region79: #{punc_las_forward.7} parent=75 // pred_region
        %vm467 = vcmask 261120
        %468 = vst.msk [vmem:[#allocation2] sm:$0xff] %vm467, 0.0
        %469 = vst.msk [vmem:[#allocation3] sm:$0xff] %vm467, 0.0
        %470 = vst.msk [vmem:[#allocation4] sm:$0xff] %vm467, 0.0
        %471 = vst.msk [vmem:[#allocation5] sm:$0xff] %vm467, 0.0
      $region80: #{punc_las_forward.7} parent=75 // pred_fallthru
        _
      %v472 = vld [vmem:[%s1] sm:$0xf]
      %v473 = vld [vmem:[%s1 + $0x4] sm:$0xf]
      %v474 = vld [vmem:[%s1 + $0x8] sm:$0xf]
      %v475 = vld [vmem:[%s1 + $0xc] sm:$0xf]
      %v476 = vld [vmem:[%s1 + $0x10] sm:$0xf]
      %v477 = vld [vmem:[%s1 + $0x14] sm:$0xf]
      %v478 = vld [vmem:[%s1 + $0x18] sm:$0xf]
      %v479 = vld [vmem:[%s1 + $0x1c] sm:$0xf]
      %v480 = vld [vmem:[#allocation4] sm:$0xff]
      %v481 = vld [vmem:[%s2] sm:$0xff]
      %v482 = vld [vmem:[%s2 + $0x8] sm:$0xff]
      %v483 = vld [vmem:[%s2 + $0x10] sm:$0xff]
      %v484 = vld [vmem:[%s2 + $0x18] sm:$0xff]
      %v485 = vld [vmem:[%s3] sm:$0x1]
      %v487 = vlaneseq
      %v488 = vshrl.u32 %v487, 7
      %v489 = vsub.s32 0, %v488
      %v490 = vrot.slane %v485, %v489
      %vm492 = vcmask 261120
      %v494 = vsel %vm492, %v480, 0
      %496 = vmatprep.subr.mxu0 0.0
      %497 = vmatpush1.msra.mxu0 0.0
      %498 = vmatprep.subr.mxu0 0.0
      %499 = vmatpush1.msra.mxu0 0.0
      %500 = vmatprep.subr.mxu0 0.0
      %501 = vmatpush1.msra.mxu0 0.0
      %502 = vmatprep.subr.mxu0 0.0
      %503 = vmatpush1.msra.mxu0 0.0
      %504 = vmatprep.subr.mxu0 0.0
      %505 = vmatpush1.msra.mxu0 0.0
      %506 = vmatprep.subr.mxu0 0.0
      %507 = vmatpush1.msra.mxu0 0.0
      %508 = vmatprep.subr.mxu0 0.0
      %509 = vmatpush1.msra.mxu0 0.0
      %510 = vmatprep.subr.mxu0 0.0
      %511 = vmatpush1.msra.mxu0 0.0
      %512 = vmatprep.subr.mxu0 0.0
      %513 = vmatpush1.msra.mxu0 0.0
      %514 = vmatprep.subr.mxu0 0.0
      %515 = vmatpush1.msra.mxu0 0.0
      %516 = vmatprep.subr.mxu0 0.0
      %517 = vmatpush1.msra.mxu0 0.0
      %518 = vmatprep.subr.mxu0 0.0
      %519 = vmatpush1.msra.mxu0 0.0
      %520 = vmatprep.subr.mxu0 0.0
      %521 = vmatpush1.msra.mxu0 %v484
      %522 = vmatprep.subr.mxu0 0.0
      %523 = vmatpush1.msra.mxu0 %v483
      %524 = vmatprep.subr.mxu0 0.0
      %525 = vmatpush1.msra.mxu0 %v482
      %526 = vmatprep.subr.mxu0 0.0
      %527 = vmatpush1.msra.mxu0 %v481
      %528 = vmatprep.subr.mxu0 0.0
      %529 = vmatpush2.msra.mxu0 0.0
      %530 = vmatprep.subr.mxu0 0.0
      %531 = vmatpush2.msra.mxu0 0.0
      %532 = vmatprep.subr.mxu0 0.0
      %533 = vmatpush2.msra.mxu0 0.0
      %534 = vmatprep.subr.mxu0 0.0
      %535 = vmatpush2.msra.mxu0 0.0
      %536 = vmatprep.subr.mxu0 0.0
      %537 = vmatpush2.msra.mxu0 0.0
      %538 = vmatprep.subr.mxu0 0.0
      %539 = vmatpush2.msra.mxu0 0.0
      %540 = vmatprep.subr.mxu0 0.0
      %541 = vmatpush2.msra.mxu0 0.0
      %542 = vmatprep.subr.mxu0 0.0
      %543 = vmatpush2.msra.mxu0 0.0
      %544 = vmatprep.subr.mxu0 0.0
      %545 = vmatpush2.msra.mxu0 0.0
      %546 = vmatprep.subr.mxu0 0.0
      %547 = vmatpush2.msra.mxu0 0.0
      %548 = vmatprep.subr.mxu0 0.0
      %549 = vmatpush2.msra.mxu0 0.0
      %550 = vmatprep.subr.mxu0 0.0
      %551 = vmatpush2.msra.mxu0 0.0
      %552 = vmatprep.subr.mxu0 0.0
      %553 = vmatpush2.msra.mxu0 0.0
      %554 = vmatprep.subr.mxu0 0.0
      %555 = vmatpush2.msra.mxu0 0.0
      %556 = vmatprep.subr.mxu0 0.0
      %557 = vmatpush2.msra.mxu0 0.0
      %558 = vmatprep.subr.mxu0 0.0
      %559 = vmatpush2.msra.mxu0 0.0
      %560 = vmatprep.mubr.f32.mxu0 0.0
      %561 = vmatmul.mubr.f32.gmra.mxu0 %v494
      %v562 = vpop.f32.mrf.mxu0
      %v563 = vadd.f32 %v490, %v562
      %v564 = vpop.f32.mrf.mxu0
      %565 = vdwg.mxu0
      %v567 = vcombine.high %v563, %v563
      %v569 = vunpack.c.l.s4 1966171168
      %v570 = vunpack.c.0.s8 %v569
      %v571 = vlaneseq
      %v572 = vshrl.u32 %v571, 7
      %v573 = vsub.s32 %v570, %v572
      %v574 = vrot.slane %v563, %v573
      %v576 = vunpack.c.l.s4 1966171168
      %v577 = vunpack.c.0.s8 %v576
      %v578 = vlaneseq
      %v579 = vshrl.u32 %v578, 7
      %v580 = vsub.s32 %v577, %v579
      %v581 = vrot.slane %v567, %v580
      %v582 = vcombine.high %v574, %v574
      %v583 = vcombine.high %v581, %v581
      %v585 = vunpack.c.l.s4 1966171168
      %v586 = vunpack.c.0.s8 %v585
      %v587 = vlaneseq
      %v588 = vshrl.u32 %v587, 7
      %v589 = vsub.s32 %v586, %v588
      %v590 = vrot.slane %v574, %v589
      %v592 = vunpack.c.l.s4 1966171168
      %v593 = vunpack.c.0.s8 %v592
      %v594 = vlaneseq
      %v595 = vshrl.u32 %v594, 7
      %v596 = vsub.s32 %v593, %v595
      %v597 = vrot.slane %v581, %v596
      %v599 = vunpack.c.l.s4 1966171168
      %v600 = vunpack.c.0.s8 %v599
      %v601 = vlaneseq
      %v602 = vshrl.u32 %v601, 7
      %v603 = vsub.s32 %v600, %v602
      %v604 = vrot.slane %v582, %v603
      %v606 = vunpack.c.l.s4 1966171168
      %v607 = vunpack.c.0.s8 %v606
      %v608 = vlaneseq
      %v609 = vshrl.u32 %v608, 7
      %v610 = vsub.s32 %v607, %v609
      %v611 = vrot.slane %v583, %v610
      %v612 = vcombine.high %v590, %v590
      %v613 = vcombine.high %v597, %v597
      %v614 = vcombine.high %v604, %v604
      %v615 = vcombine.high %v611, %v611
      %vm616 = vcmask 523264
      %v617 = vsel %vm616, %v590, 0
      %v620 = vsel %vm616, %v472, 0
      %622 = vmatprep.subr.mxu0 0.0
      %623 = vmatpush1.xpose.msra.mxu0 0.0
      %624 = vmatprep.subr.mxu0 0.0
      %625 = vmatpush1.xpose.msra.mxu0 0.0
      %626 = vmatprep.subr.mxu0 0.0
      %627 = vmatpush1.xpose.msra.mxu0 0.0
      %628 = vmatprep.subr.mxu0 0.0
      %629 = vmatpush1.xpose.msra.mxu0 0.0
      %630 = vmatprep.subr.mxu0 0.0
      %631 = vmatpush1.xpose.msra.mxu0 0.0
      %632 = vmatprep.subr.mxu0 0.0
      %633 = vmatpush1.xpose.msra.mxu0 0.0
      %634 = vmatprep.subr.mxu0 0.0
      %635 = vmatpush1.xpose.msra.mxu0 0.0
      %636 = vmatprep.subr.mxu0 0.0
      %637 = vmatpush1.xpose.msra.mxu0 0.0
      %638 = vmatprep.subr.mxu0 0.0
      %639 = vmatpush1.xpose.msra.mxu0 0.0
      %640 = vmatprep.subr.mxu0 0.0
      %641 = vmatpush1.xpose.msra.mxu0 0.0
      %642 = vmatprep.subr.mxu0 0.0
      %643 = vmatpush1.xpose.msra.mxu0 0.0
      %644 = vmatprep.subr.mxu0 0.0
      %645 = vmatpush1.xpose.msra.mxu0 0.0
      %646 = vmatprep.subr.mxu0 0.0
      %647 = vmatpush1.xpose.msra.mxu0 0.0
      %648 = vmatprep.subr.mxu0 0.0
      %649 = vmatpush1.xpose.msra.mxu0 0.0
      %650 = vmatprep.subr.mxu0 0.0
      %651 = vmatpush1.xpose.msra.mxu0 0.0
      %652 = vmatprep.subr.mxu0 0.0
      %653 = vmatpush1.xpose.msra.mxu0 %v620
      %654 = vmatprep.subr.mxu0 0.0
      %655 = vmatpush2.xpose.msra.mxu0 0.0
      %656 = vmatprep.subr.mxu0 0.0
      %657 = vmatpush2.xpose.msra.mxu0 0.0
      %658 = vmatprep.subr.mxu0 0.0
      %659 = vmatpush2.xpose.msra.mxu0 0.0
      %660 = vmatprep.subr.mxu0 0.0
      %661 = vmatpush2.xpose.msra.mxu0 0.0
      %662 = vmatprep.subr.mxu0 0.0
      %663 = vmatpush2.xpose.msra.mxu0 0.0
      %664 = vmatprep.subr.mxu0 0.0
      %665 = vmatpush2.xpose.msra.mxu0 0.0
      %666 = vmatprep.subr.mxu0 0.0
      %667 = vmatpush2.xpose.msra.mxu0 0.0
      %668 = vmatprep.subr.mxu0 0.0
      %669 = vmatpush2.xpose.msra.mxu0 0.0
      %670 = vmatprep.subr.mxu0 0.0
      %671 = vmatpush2.xpose.msra.mxu0 0.0
      %672 = vmatprep.subr.mxu0 0.0
      %673 = vmatpush2.xpose.msra.mxu0 0.0
      %674 = vmatprep.subr.mxu0 0.0
      %675 = vmatpush2.xpose.msra.mxu0 0.0
      %676 = vmatprep.subr.mxu0 0.0
      %677 = vmatpush2.xpose.msra.mxu0 0.0
      %678 = vmatprep.subr.mxu0 0.0
      %679 = vmatpush2.xpose.msra.mxu0 0.0
      %680 = vmatprep.subr.mxu0 0.0
      %681 = vmatpush2.xpose.msra.mxu0 0.0
      %682 = vmatprep.subr.mxu0 0.0
      %683 = vmatpush2.xpose.msra.mxu0 0.0
      %684 = vmatprep.subr.mxu0 0.0
      %685 = vmatpush2.xpose.msra.mxu0 0.0
      %686 = vmatprep.mubr.f32.mxu0 0.0
      %687 = vmatmul.mubr.f32.gmra.mxu0 %v617
      %v688 = vpop.f32.mrf.mxu0
      %v689 = vadd.f32 0.0, %v688
      %v690 = vpop.f32.mrf.mxu0
      %691 = vdwg.mxu0
      %v692 = vsel %vm616, %v604, 0
      %v695 = vsel %vm616, %v473, 0
      %697 = vmatprep.subr.mxu0 0.0
      %698 = vmatpush1.xpose.msra.mxu0 0.0
      %699 = vmatprep.subr.mxu0 0.0
      %700 = vmatpush1.xpose.msra.mxu0 0.0
      %701 = vmatprep.subr.mxu0 0.0
      %702 = vmatpush1.xpose.msra.mxu0 0.0
      %703 = vmatprep.subr.mxu0 0.0
      %704 = vmatpush1.xpose.msra.mxu0 0.0
      %705 = vmatprep.subr.mxu0 0.0
      %706 = vmatpush1.xpose.msra.mxu0 0.0
      %707 = vmatprep.subr.mxu0 0.0
      %708 = vmatpush1.xpose.msra.mxu0 0.0
      %709 = vmatprep.subr.mxu0 0.0
      %710 = vmatpush1.xpose.msra.mxu0 0.0
      %711 = vmatprep.subr.mxu0 0.0
      %712 = vmatpush1.xpose.msra.mxu0 0.0
      %713 = vmatprep.subr.mxu0 0.0
      %714 = vmatpush1.xpose.msra.mxu0 0.0
      %715 = vmatprep.subr.mxu0 0.0
      %716 = vmatpush1.xpose.msra.mxu0 0.0
      %717 = vmatprep.subr.mxu0 0.0
      %718 = vmatpush1.xpose.msra.mxu0 0.0
      %719 = vmatprep.subr.mxu0 0.0
      %720 = vmatpush1.xpose.msra.mxu0 0.0
      %721 = vmatprep.subr.mxu0 0.0
      %722 = vmatpush1.xpose.msra.mxu0 0.0
      %723 = vmatprep.subr.mxu0 0.0
      %724 = vmatpush1.xpose.msra.mxu0 0.0
      %725 = vmatprep.subr.mxu0 0.0
      %726 = vmatpush1.xpose.msra.mxu0 0.0
      %727 = vmatprep.subr.mxu0 0.0
      %728 = vmatpush1.xpose.msra.mxu0 %v695
      %729 = vmatprep.subr.mxu0 0.0
      %730 = vmatpush2.xpose.msra.mxu0 0.0
      %731 = vmatprep.subr.mxu0 0.0
      %732 = vmatpush2.xpose.msra.mxu0 0.0
      %733 = vmatprep.subr.mxu0 0.0
      %734 = vmatpush2.xpose.msra.mxu0 0.0
      %735 = vmatprep.subr.mxu0 0.0
      %736 = vmatpush2.xpose.msra.mxu0 0.0
      %737 = vmatprep.subr.mxu0 0.0
      %738 = vmatpush2.xpose.msra.mxu0 0.0
      %739 = vmatprep.subr.mxu0 0.0
      %740 = vmatpush2.xpose.msra.mxu0 0.0
      %741 = vmatprep.subr.mxu0 0.0
      %742 = vmatpush2.xpose.msra.mxu0 0.0
      %743 = vmatprep.subr.mxu0 0.0
      %744 = vmatpush2.xpose.msra.mxu0 0.0
      %745 = vmatprep.subr.mxu0 0.0
      %746 = vmatpush2.xpose.msra.mxu0 0.0
      %747 = vmatprep.subr.mxu0 0.0
      %748 = vmatpush2.xpose.msra.mxu0 0.0
      %749 = vmatprep.subr.mxu0 0.0
      %750 = vmatpush2.xpose.msra.mxu0 0.0
      %751 = vmatprep.subr.mxu0 0.0
      %752 = vmatpush2.xpose.msra.mxu0 0.0
      %753 = vmatprep.subr.mxu0 0.0
      %754 = vmatpush2.xpose.msra.mxu0 0.0
      %755 = vmatprep.subr.mxu0 0.0
      %756 = vmatpush2.xpose.msra.mxu0 0.0
      %757 = vmatprep.subr.mxu0 0.0
      %758 = vmatpush2.xpose.msra.mxu0 0.0
      %759 = vmatprep.subr.mxu0 0.0
      %760 = vmatpush2.xpose.msra.mxu0 0.0
      %761 = vmatprep.mubr.f32.mxu0 0.0
      %762 = vmatmul.mubr.f32.gmra.mxu0 %v692
      %v763 = vpop.f32.mrf.mxu0
      %v764 = vadd.f32 0.0, %v763
      %v765 = vpop.f32.mrf.mxu0
      %766 = vdwg.mxu0
      %v767 = vsel %vm616, %v612, 0
      %v770 = vsel %vm616, %v474, 0
      %772 = vmatprep.subr.mxu0 0.0
      %773 = vmatpush1.xpose.msra.mxu0 0.0
      %774 = vmatprep.subr.mxu0 0.0
      %775 = vmatpush1.xpose.msra.mxu0 0.0
      %776 = vmatprep.subr.mxu0 0.0
      %777 = vmatpush1.xpose.msra.mxu0 0.0
      %778 = vmatprep.subr.mxu0 0.0
      %779 = vmatpush1.xpose.msra.mxu0 0.0
      %780 = vmatprep.subr.mxu0 0.0
      %781 = vmatpush1.xpose.msra.mxu0 0.0
      %782 = vmatprep.subr.mxu0 0.0
      %783 = vmatpush1.xpose.msra.mxu0 0.0
      %784 = vmatprep.subr.mxu0 0.0
      %785 = vmatpush1.xpose.msra.mxu0 0.0
      %786 = vmatprep.subr.mxu0 0.0
      %787 = vmatpush1.xpose.msra.mxu0 0.0
      %788 = vmatprep.subr.mxu0 0.0
      %789 = vmatpush1.xpose.msra.mxu0 0.0
      %790 = vmatprep.subr.mxu0 0.0
      %791 = vmatpush1.xpose.msra.mxu0 0.0
      %792 = vmatprep.subr.mxu0 0.0
      %793 = vmatpush1.xpose.msra.mxu0 0.0
      %794 = vmatprep.subr.mxu0 0.0
      %795 = vmatpush1.xpose.msra.mxu0 0.0
      %796 = vmatprep.subr.mxu0 0.0
      %797 = vmatpush1.xpose.msra.mxu0 0.0
      %798 = vmatprep.subr.mxu0 0.0
      %799 = vmatpush1.xpose.msra.mxu0 0.0
      %800 = vmatprep.subr.mxu0 0.0
      %801 = vmatpush1.xpose.msra.mxu0 0.0
      %802 = vmatprep.subr.mxu0 0.0
      %803 = vmatpush1.xpose.msra.mxu0 %v770
      %804 = vmatprep.subr.mxu0 0.0
      %805 = vmatpush2.xpose.msra.mxu0 0.0
      %806 = vmatprep.subr.mxu0 0.0
      %807 = vmatpush2.xpose.msra.mxu0 0.0
      %808 = vmatprep.subr.mxu0 0.0
      %809 = vmatpush2.xpose.msra.mxu0 0.0
      %810 = vmatprep.subr.mxu0 0.0
      %811 = vmatpush2.xpose.msra.mxu0 0.0
      %812 = vmatprep.subr.mxu0 0.0
      %813 = vmatpush2.xpose.msra.mxu0 0.0
      %814 = vmatprep.subr.mxu0 0.0
      %815 = vmatpush2.xpose.msra.mxu0 0.0
      %816 = vmatprep.subr.mxu0 0.0
      %817 = vmatpush2.xpose.msra.mxu0 0.0
      %818 = vmatprep.subr.mxu0 0.0
      %819 = vmatpush2.xpose.msra.mxu0 0.0
      %820 = vmatprep.subr.mxu0 0.0
      %821 = vmatpush2.xpose.msra.mxu0 0.0
      %822 = vmatprep.subr.mxu0 0.0
      %823 = vmatpush2.xpose.msra.mxu0 0.0
      %824 = vmatprep.subr.mxu0 0.0
      %825 = vmatpush2.xpose.msra.mxu0 0.0
      %826 = vmatprep.subr.mxu0 0.0
      %827 = vmatpush2.xpose.msra.mxu0 0.0
      %828 = vmatprep.subr.mxu0 0.0
      %829 = vmatpush2.xpose.msra.mxu0 0.0
      %830 = vmatprep.subr.mxu0 0.0
      %831 = vmatpush2.xpose.msra.mxu0 0.0
      %832 = vmatprep.subr.mxu0 0.0
      %833 = vmatpush2.xpose.msra.mxu0 0.0
      %834 = vmatprep.subr.mxu0 0.0
      %835 = vmatpush2.xpose.msra.mxu0 0.0
      %836 = vmatprep.mubr.f32.mxu0 0.0
      %837 = vmatmul.mubr.f32.gmra.mxu0 %v767
      %v838 = vpop.f32.mrf.mxu0
      %v839 = vadd.f32 0.0, %v838
      %v840 = vpop.f32.mrf.mxu0
      %841 = vdwg.mxu0
      %v842 = vsel %vm616, %v614, 0
      %v845 = vsel %vm616, %v475, 0
      %847 = vmatprep.subr.mxu0 0.0
      %848 = vmatpush1.xpose.msra.mxu0 0.0
      %849 = vmatprep.subr.mxu0 0.0
      %850 = vmatpush1.xpose.msra.mxu0 0.0
      %851 = vmatprep.subr.mxu0 0.0
      %852 = vmatpush1.xpose.msra.mxu0 0.0
      %853 = vmatprep.subr.mxu0 0.0
      %854 = vmatpush1.xpose.msra.mxu0 0.0
      %855 = vmatprep.subr.mxu0 0.0
      %856 = vmatpush1.xpose.msra.mxu0 0.0
      %857 = vmatprep.subr.mxu0 0.0
      %858 = vmatpush1.xpose.msra.mxu0 0.0
      %859 = vmatprep.subr.mxu0 0.0
      %860 = vmatpush1.xpose.msra.mxu0 0.0
      %861 = vmatprep.subr.mxu0 0.0
      %862 = vmatpush1.xpose.msra.mxu0 0.0
      %863 = vmatprep.subr.mxu0 0.0
      %864 = vmatpush1.xpose.msra.mxu0 0.0
      %865 = vmatprep.subr.mxu0 0.0
      %866 = vmatpush1.xpose.msra.mxu0 0.0
      %867 = vmatprep.subr.mxu0 0.0
      %868 = vmatpush1.xpose.msra.mxu0 0.0
      %869 = vmatprep.subr.mxu0 0.0
      %870 = vmatpush1.xpose.msra.mxu0 0.0
      %871 = vmatprep.subr.mxu0 0.0
      %872 = vmatpush1.xpose.msra.mxu0 0.0
      %873 = vmatprep.subr.mxu0 0.0
      %874 = vmatpush1.xpose.msra.mxu0 0.0
      %875 = vmatprep.subr.mxu0 0.0
      %876 = vmatpush1.xpose.msra.mxu0 0.0
      %877 = vmatprep.subr.mxu0 0.0
      %878 = vmatpush1.xpose.msra.mxu0 %v845
      %879 = vmatprep.subr.mxu0 0.0
      %880 = vmatpush2.xpose.msra.mxu0 0.0
      %881 = vmatprep.subr.mxu0 0.0
      %882 = vmatpush2.xpose.msra.mxu0 0.0
      %883 = vmatprep.subr.mxu0 0.0
      %884 = vmatpush2.xpose.msra.mxu0 0.0
      %885 = vmatprep.subr.mxu0 0.0
      %886 = vmatpush2.xpose.msra.mxu0 0.0
      %887 = vmatprep.subr.mxu0 0.0
      %888 = vmatpush2.xpose.msra.mxu0 0.0
      %889 = vmatprep.subr.mxu0 0.0
      %890 = vmatpush2.xpose.msra.mxu0 0.0
      %891 = vmatprep.subr.mxu0 0.0
      %892 = vmatpush2.xpose.msra.mxu0 0.0
      %893 = vmatprep.subr.mxu0 0.0
      %894 = vmatpush2.xpose.msra.mxu0 0.0
      %895 = vmatprep.subr.mxu0 0.0
      %896 = vmatpush2.xpose.msra.mxu0 0.0
      %897 = vmatprep.subr.mxu0 0.0
      %898 = vmatpush2.xpose.msra.mxu0 0.0
      %899 = vmatprep.subr.mxu0 0.0
      %900 = vmatpush2.xpose.msra.mxu0 0.0
      %901 = vmatprep.subr.mxu0 0.0
      %902 = vmatpush2.xpose.msra.mxu0 0.0
      %903 = vmatprep.subr.mxu0 0.0
      %904 = vmatpush2.xpose.msra.mxu0 0.0
      %905 = vmatprep.subr.mxu0 0.0
      %906 = vmatpush2.xpose.msra.mxu0 0.0
      %907 = vmatprep.subr.mxu0 0.0
      %908 = vmatpush2.xpose.msra.mxu0 0.0
      %909 = vmatprep.subr.mxu0 0.0
      %910 = vmatpush2.xpose.msra.mxu0 0.0
      %911 = vmatprep.mubr.f32.mxu0 0.0
      %912 = vmatmul.mubr.f32.gmra.mxu0 %v842
      %v913 = vpop.f32.mrf.mxu0
      %v914 = vadd.f32 0.0, %v913
      %v915 = vpop.f32.mrf.mxu0
      %916 = vdwg.mxu0
      %v917 = vsel %vm616, %v597, 0
      %v920 = vsel %vm616, %v476, 0
      %922 = vmatprep.subr.mxu0 0.0
      %923 = vmatpush1.xpose.msra.mxu0 0.0
      %924 = vmatprep.subr.mxu0 0.0
      %925 = vmatpush1.xpose.msra.mxu0 0.0
      %926 = vmatprep.subr.mxu0 0.0
      %927 = vmatpush1.xpose.msra.mxu0 0.0
      %928 = vmatprep.subr.mxu0 0.0
      %929 = vmatpush1.xpose.msra.mxu0 0.0
      %930 = vmatprep.subr.mxu0 0.0
      %931 = vmatpush1.xpose.msra.mxu0 0.0
      %932 = vmatprep.subr.mxu0 0.0
      %933 = vmatpush1.xpose.msra.mxu0 0.0
      %934 = vmatprep.subr.mxu0 0.0
      %935 = vmatpush1.xpose.msra.mxu0 0.0
      %936 = vmatprep.subr.mxu0 0.0
      %937 = vmatpush1.xpose.msra.mxu0 0.0
      %938 = vmatprep.subr.mxu0 0.0
      %939 = vmatpush1.xpose.msra.mxu0 0.0
      %940 = vmatprep.subr.mxu0 0.0
      %941 = vmatpush1.xpose.msra.mxu0 0.0
      %942 = vmatprep.subr.mxu0 0.0
      %943 = vmatpush1.xpose.msra.mxu0 0.0
      %944 = vmatprep.subr.mxu0 0.0
      %945 = vmatpush1.xpose.msra.mxu0 0.0
      %946 = vmatprep.subr.mxu0 0.0
      %947 = vmatpush1.xpose.msra.mxu0 0.0
      %948 = vmatprep.subr.mxu0 0.0
      %949 = vmatpush1.xpose.msra.mxu0 0.0
      %950 = vmatprep.subr.mxu0 0.0
      %951 = vmatpush1.xpose.msra.mxu0 0.0
      %952 = vmatprep.subr.mxu0 0.0
      %953 = vmatpush1.xpose.msra.mxu0 %v920
      %954 = vmatprep.subr.mxu0 0.0
      %955 = vmatpush2.xpose.msra.mxu0 0.0
      %956 = vmatprep.subr.mxu0 0.0
      %957 = vmatpush2.xpose.msra.mxu0 0.0
      %958 = vmatprep.subr.mxu0 0.0
      %959 = vmatpush2.xpose.msra.mxu0 0.0
      %960 = vmatprep.subr.mxu0 0.0
      %961 = vmatpush2.xpose.msra.mxu0 0.0
      %962 = vmatprep.subr.mxu0 0.0
      %963 = vmatpush2.xpose.msra.mxu0 0.0
      %964 = vmatprep.subr.mxu0 0.0
      %965 = vmatpush2.xpose.msra.mxu0 0.0
      %966 = vmatprep.subr.mxu0 0.0
      %967 = vmatpush2.xpose.msra.mxu0 0.0
      %968 = vmatprep.subr.mxu0 0.0
      %969 = vmatpush2.xpose.msra.mxu0 0.0
      %970 = vmatprep.subr.mxu0 0.0
      %971 = vmatpush2.xpose.msra.mxu0 0.0
      %972 = vmatprep.subr.mxu0 0.0
      %973 = vmatpush2.xpose.msra.mxu0 0.0
      %974 = vmatprep.subr.mxu0 0.0
      %975 = vmatpush2.xpose.msra.mxu0 0.0
      %976 = vmatprep.subr.mxu0 0.0
      %977 = vmatpush2.xpose.msra.mxu0 0.0
      %978 = vmatprep.subr.mxu0 0.0
      %979 = vmatpush2.xpose.msra.mxu0 0.0
      %980 = vmatprep.subr.mxu0 0.0
      %981 = vmatpush2.xpose.msra.mxu0 0.0
      %982 = vmatprep.subr.mxu0 0.0
      %983 = vmatpush2.xpose.msra.mxu0 0.0
      %984 = vmatprep.subr.mxu0 0.0
      %985 = vmatpush2.xpose.msra.mxu0 0.0
      %986 = vmatprep.mubr.f32.mxu0 0.0
      %987 = vmatmul.mubr.f32.gmra.mxu0 %v917
      %v988 = vpop.f32.mrf.mxu0
      %v989 = vadd.f32 0.0, %v988
      %v990 = vpop.f32.mrf.mxu0
      %991 = vdwg.mxu0
      %v992 = vsel %vm616, %v611, 0
      %v995 = vsel %vm616, %v477, 0
      %997 = vmatprep.subr.mxu0 0.0
      %998 = vmatpush1.xpose.msra.mxu0 0.0
      %999 = vmatprep.subr.mxu0 0.0
      %1000 = vmatpush1.xpose.msra.mxu0 0.0
      %1001 = vmatprep.subr.mxu0 0.0
      %1002 = vmatpush1.xpose.msra.mxu0 0.0
      %1003 = vmatprep.subr.mxu0 0.0
      %1004 = vmatpush1.xpose.msra.mxu0 0.0
      %1005 = vmatprep.subr.mxu0 0.0
      %1006 = vmatpush1.xpose.msra.mxu0 0.0
      %1007 = vmatprep.subr.mxu0 0.0
      %1008 = vmatpush1.xpose.msra.mxu0 0.0
      %1009 = vmatprep.subr.mxu0 0.0
      %1010 = vmatpush1.xpose.msra.mxu0 0.0
      %1011 = vmatprep.subr.mxu0 0.0
      %1012 = vmatpush1.xpose.msra.mxu0 0.0
      %1013 = vmatprep.subr.mxu0 0.0
      %1014 = vmatpush1.xpose.msra.mxu0 0.0
      %1015 = vmatprep.subr.mxu0 0.0
      %1016 = vmatpush1.xpose.msra.mxu0 0.0
      %1017 = vmatprep.subr.mxu0 0.0
      %1018 = vmatpush1.xpose.msra.mxu0 0.0
      %1019 = vmatprep.subr.mxu0 0.0
      %1020 = vmatpush1.xpose.msra.mxu0 0.0
      %1021 = vmatprep.subr.mxu0 0.0
      %1022 = vmatpush1.xpose.msra.mxu0 0.0
      %1023 = vmatprep.subr.mxu0 0.0
      %1024 = vmatpush1.xpose.msra.mxu0 0.0
      %1025 = vmatprep.subr.mxu0 0.0
      %1026 = vmatpush1.xpose.msra.mxu0 0.0
      %1027 = vmatprep.subr.mxu0 0.0
      %1028 = vmatpush1.xpose.msra.mxu0 %v995
      %1029 = vmatprep.subr.mxu0 0.0
      %1030 = vmatpush2.xpose.msra.mxu0 0.0
      %1031 = vmatprep.subr.mxu0 0.0
      %1032 = vmatpush2.xpose.msra.mxu0 0.0
      %1033 = vmatprep.subr.mxu0 0.0
      %1034 = vmatpush2.xpose.msra.mxu0 0.0
      %1035 = vmatprep.subr.mxu0 0.0
      %1036 = vmatpush2.xpose.msra.mxu0 0.0
      %1037 = vmatprep.subr.mxu0 0.0
      %1038 = vmatpush2.xpose.msra.mxu0 0.0
      %1039 = vmatprep.subr.mxu0 0.0
      %1040 = vmatpush2.xpose.msra.mxu0 0.0
      %1041 = vmatprep.subr.mxu0 0.0
      %1042 = vmatpush2.xpose.msra.mxu0 0.0
      %1043 = vmatprep.subr.mxu0 0.0
      %1044 = vmatpush2.xpose.msra.mxu0 0.0
      %1045 = vmatprep.subr.mxu0 0.0
      %1046 = vmatpush2.xpose.msra.mxu0 0.0
      %1047 = vmatprep.subr.mxu0 0.0
      %1048 = vmatpush2.xpose.msra.mxu0 0.0
      %1049 = vmatprep.subr.mxu0 0.0
      %1050 = vmatpush2.xpose.msra.mxu0 0.0
      %1051 = vmatprep.subr.mxu0 0.0
      %1052 = vmatpush2.xpose.msra.mxu0 0.0
      %1053 = vmatprep.subr.mxu0 0.0
      %1054 = vmatpush2.xpose.msra.mxu0 0.0
      %1055 = vmatprep.subr.mxu0 0.0
      %1056 = vmatpush2.xpose.msra.mxu0 0.0
      %1057 = vmatprep.subr.mxu0 0.0
      %1058 = vmatpush2.xpose.msra.mxu0 0.0
      %1059 = vmatprep.subr.mxu0 0.0
      %1060 = vmatpush2.xpose.msra.mxu0 0.0
      %1061 = vmatprep.mubr.f32.mxu0 0.0
      %1062 = vmatmul.mubr.f32.gmra.mxu0 %v992
      %v1063 = vpop.f32.mrf.mxu0
      %v1064 = vadd.f32 0.0, %v1063
      %v1065 = vpop.f32.mrf.mxu0
      %1066 = vdwg.mxu0
      %v1067 = vsel %vm616, %v613, 0
      %v1070 = vsel %vm616, %v478, 0
      %1072 = vmatprep.subr.mxu0 0.0
      %1073 = vmatpush1.xpose.msra.mxu0 0.0
      %1074 = vmatprep.subr.mxu0 0.0
      %1075 = vmatpush1.xpose.msra.mxu0 0.0
      %1076 = vmatprep.subr.mxu0 0.0
      %1077 = vmatpush1.xpose.msra.mxu0 0.0
      %1078 = vmatprep.subr.mxu0 0.0
      %1079 = vmatpush1.xpose.msra.mxu0 0.0
      %1080 = vmatprep.subr.mxu0 0.0
      %1081 = vmatpush1.xpose.msra.mxu0 0.0
      %1082 = vmatprep.subr.mxu0 0.0
      %1083 = vmatpush1.xpose.msra.mxu0 0.0
      %1084 = vmatprep.subr.mxu0 0.0
      %1085 = vmatpush1.xpose.msra.mxu0 0.0
      %1086 = vmatprep.subr.mxu0 0.0
      %1087 = vmatpush1.xpose.msra.mxu0 0.0
      %1088 = vmatprep.subr.mxu0 0.0
      %1089 = vmatpush1.xpose.msra.mxu0 0.0
      %1090 = vmatprep.subr.mxu0 0.0
      %1091 = vmatpush1.xpose.msra.mxu0 0.0
      %1092 = vmatprep.subr.mxu0 0.0
      %1093 = vmatpush1.xpose.msra.mxu0 0.0
      %1094 = vmatprep.subr.mxu0 0.0
      %1095 = vmatpush1.xpose.msra.mxu0 0.0
      %1096 = vmatprep.subr.mxu0 0.0
      %1097 = vmatpush1.xpose.msra.mxu0 0.0
      %1098 = vmatprep.subr.mxu0 0.0
      %1099 = vmatpush1.xpose.msra.mxu0 0.0
      %1100 = vmatprep.subr.mxu0 0.0
      %1101 = vmatpush1.xpose.msra.mxu0 0.0
      %1102 = vmatprep.subr.mxu0 0.0
      %1103 = vmatpush1.xpose.msra.mxu0 %v1070
      %1104 = vmatprep.subr.mxu0 0.0
      %1105 = vmatpush2.xpose.msra.mxu0 0.0
      %1106 = vmatprep.subr.mxu0 0.0
      %1107 = vmatpush2.xpose.msra.mxu0 0.0
      %1108 = vmatprep.subr.mxu0 0.0
      %1109 = vmatpush2.xpose.msra.mxu0 0.0
      %1110 = vmatprep.subr.mxu0 0.0
      %1111 = vmatpush2.xpose.msra.mxu0 0.0
      %1112 = vmatprep.subr.mxu0 0.0
      %1113 = vmatpush2.xpose.msra.mxu0 0.0
      %1114 = vmatprep.subr.mxu0 0.0
      %1115 = vmatpush2.xpose.msra.mxu0 0.0
      %1116 = vmatprep.subr.mxu0 0.0
      %1117 = vmatpush2.xpose.msra.mxu0 0.0
      %1118 = vmatprep.subr.mxu0 0.0
      %1119 = vmatpush2.xpose.msra.mxu0 0.0
      %1120 = vmatprep.subr.mxu0 0.0
      %1121 = vmatpush2.xpose.msra.mxu0 0.0
      %1122 = vmatprep.subr.mxu0 0.0
      %1123 = vmatpush2.xpose.msra.mxu0 0.0
      %1124 = vmatprep.subr.mxu0 0.0
      %1125 = vmatpush2.xpose.msra.mxu0 0.0
      %1126 = vmatprep.subr.mxu0 0.0
      %1127 = vmatpush2.xpose.msra.mxu0 0.0
      %1128 = vmatprep.subr.mxu0 0.0
      %1129 = vmatpush2.xpose.msra.mxu0 0.0
      %1130 = vmatprep.subr.mxu0 0.0
      %1131 = vmatpush2.xpose.msra.mxu0 0.0
      %1132 = vmatprep.subr.mxu0 0.0
      %1133 = vmatpush2.xpose.msra.mxu0 0.0
      %1134 = vmatprep.subr.mxu0 0.0
      %1135 = vmatpush2.xpose.msra.mxu0 0.0
      %1136 = vmatprep.mubr.f32.mxu0 0.0
      %1137 = vmatmul.mubr.f32.gmra.mxu0 %v1067
      %v1138 = vpop.f32.mrf.mxu0
      %v1139 = vadd.f32 0.0, %v1138
      %v1140 = vpop.f32.mrf.mxu0
      %1141 = vdwg.mxu0
      %v1142 = vsel %vm616, %v615, 0
      %v1145 = vsel %vm616, %v479, 0
      %1147 = vmatprep.subr.mxu0 0.0
      %1148 = vmatpush1.xpose.msra.mxu0 0.0
      %1149 = vmatprep.subr.mxu0 0.0
      %1150 = vmatpush1.xpose.msra.mxu0 0.0
      %1151 = vmatprep.subr.mxu0 0.0
      %1152 = vmatpush1.xpose.msra.mxu0 0.0
      %1153 = vmatprep.subr.mxu0 0.0
      %1154 = vmatpush1.xpose.msra.mxu0 0.0
      %1155 = vmatprep.subr.mxu0 0.0
      %1156 = vmatpush1.xpose.msra.mxu0 0.0
      %1157 = vmatprep.subr.mxu0 0.0
      %1158 = vmatpush1.xpose.msra.mxu0 0.0
      %1159 = vmatprep.subr.mxu0 0.0
      %1160 = vmatpush1.xpose.msra.mxu0 0.0
      %1161 = vmatprep.subr.mxu0 0.0
      %1162 = vmatpush1.xpose.msra.mxu0 0.0
      %1163 = vmatprep.subr.mxu0 0.0
      %1164 = vmatpush1.xpose.msra.mxu0 0.0
      %1165 = vmatprep.subr.mxu0 0.0
      %1166 = vmatpush1.xpose.msra.mxu0 0.0
      %1167 = vmatprep.subr.mxu0 0.0
      %1168 = vmatpush1.xpose.msra.mxu0 0.0
      %1169 = vmatprep.subr.mxu0 0.0
      %1170 = vmatpush1.xpose.msra.mxu0 0.0
      %1171 = vmatprep.subr.mxu0 0.0
      %1172 = vmatpush1.xpose.msra.mxu0 0.0
      %1173 = vmatprep.subr.mxu0 0.0
      %1174 = vmatpush1.xpose.msra.mxu0 0.0
      %1175 = vmatprep.subr.mxu0 0.0
      %1176 = vmatpush1.xpose.msra.mxu0 0.0
      %1177 = vmatprep.subr.mxu0 0.0
      %1178 = vmatpush1.xpose.msra.mxu0 %v1145
      %1179 = vmatprep.subr.mxu0 0.0
      %1180 = vmatpush2.xpose.msra.mxu0 0.0
      %1181 = vmatprep.subr.mxu0 0.0
      %1182 = vmatpush2.xpose.msra.mxu0 0.0
      %1183 = vmatprep.subr.mxu0 0.0
      %1184 = vmatpush2.xpose.msra.mxu0 0.0
      %1185 = vmatprep.subr.mxu0 0.0
      %1186 = vmatpush2.xpose.msra.mxu0 0.0
      %1187 = vmatprep.subr.mxu0 0.0
      %1188 = vmatpush2.xpose.msra.mxu0 0.0
      %1189 = vmatprep.subr.mxu0 0.0
      %1190 = vmatpush2.xpose.msra.mxu0 0.0
      %1191 = vmatprep.subr.mxu0 0.0
      %1192 = vmatpush2.xpose.msra.mxu0 0.0
      %1193 = vmatprep.subr.mxu0 0.0
      %1194 = vmatpush2.xpose.msra.mxu0 0.0
      %1195 = vmatprep.subr.mxu0 0.0
      %1196 = vmatpush2.xpose.msra.mxu0 0.0
      %1197 = vmatprep.subr.mxu0 0.0
      %1198 = vmatpush2.xpose.msra.mxu0 0.0
      %1199 = vmatprep.subr.mxu0 0.0
      %1200 = vmatpush2.xpose.msra.mxu0 0.0
      %1201 = vmatprep.subr.mxu0 0.0
      %1202 = vmatpush2.xpose.msra.mxu0 0.0
      %1203 = vmatprep.subr.mxu0 0.0
      %1204 = vmatpush2.xpose.msra.mxu0 0.0
      %1205 = vmatprep.subr.mxu0 0.0
      %1206 = vmatpush2.xpose.msra.mxu0 0.0
      %1207 = vmatprep.subr.mxu0 0.0
      %1208 = vmatpush2.xpose.msra.mxu0 0.0
      %1209 = vmatprep.subr.mxu0 0.0
      %1210 = vmatpush2.xpose.msra.mxu0 0.0
      %1211 = vmatprep.mubr.f32.mxu0 0.0
      %1212 = vmatmul.mubr.f32.gmra.mxu0 %v1142
      %v1213 = vpop.f32.mrf.mxu0
      %v1214 = vadd.f32 0.0, %v1213
      %v1215 = vpop.f32.mrf.mxu0
      %1216 = vdwg.mxu0
      %vm1217 = vcmask 24576
      %v1218 = vsel %vm1217, %v689, -inf
      %1219 = vmax.xlane.f32.xlu0 %v1218
      %v1220 = vpop.xlane.xlu0 %1219
      %v1221 = vsel %vm1217, %v764, -inf
      %1222 = vmax.xlane.f32.xlu0 %v1221
      %v1223 = vpop.xlane.xlu0 %1222
      %v1224 = vsel %vm1217, %v839, -inf
      %1225 = vmax.xlane.f32.xlu0 %v1224
      %v1226 = vpop.xlane.xlu0 %1225
      %v1227 = vsel %vm1217, %v914, -inf
      %1228 = vmax.xlane.f32.xlu0 %v1227
      %v1229 = vpop.xlane.xlu0 %1228
      %v1230 = vsel %vm1217, %v989, -inf
      %1231 = vmax.xlane.f32.xlu0 %v1230
      %v1232 = vpop.xlane.xlu0 %1231
      %v1233 = vsel %vm1217, %v1064, -inf
      %1234 = vmax.xlane.f32.xlu0 %v1233
      %v1235 = vpop.xlane.xlu0 %1234
      %v1236 = vsel %vm1217, %v1139, -inf
      %1237 = vmax.xlane.f32.xlu0 %v1236
      %v1238 = vpop.xlane.xlu0 %1237
      %v1239 = vsel %vm1217, %v1214, -inf
      %1240 = vmax.xlane.f32.xlu0 %v1239
      %v1241 = vpop.xlane.xlu0 %1240
      %v1242 = vsub.f32 %v689, %v1220
      %v1243 = vsub.f32 %v764, %v1223
      %v1244 = vsub.f32 %v839, %v1226
      %v1245 = vsub.f32 %v914, %v1229
      %v1246 = vsub.f32 %v989, %v1232
      %v1247 = vsub.f32 %v1064, %v1235
      %v1248 = vsub.f32 %v1139, %v1238
      %v1249 = vsub.f32 %v1214, %v1241
      %v1250 = vmul.f32 %v1242, 1.442695
      %v1251 = vpow.pop %v1250
      %v1252 = vmul.f32 %v1243, 1.442695
      %v1253 = vpow.pop %v1252
      %v1254 = vmul.f32 %v1244, 1.442695
      %v1255 = vpow.pop %v1254
      %v1256 = vmul.f32 %v1245, 1.442695
      %v1257 = vpow.pop %v1256
      %v1258 = vmul.f32 %v1246, 1.442695
      %v1259 = vpow.pop %v1258
      %v1260 = vmul.f32 %v1247, 1.442695
      %v1261 = vpow.pop %v1260
      %v1262 = vmul.f32 %v1248, 1.442695
      %v1263 = vpow.pop %v1262
      %v1264 = vmul.f32 %v1249, 1.442695
      %v1265 = vpow.pop %v1264
      %v1266 = vsel %vm1217, %v1251, 0.0
      %1267 = vadd.xlane.f32.xlu0 %v1266
      %v1268 = vpop.xlane.xlu0 %1267
      %v1269 = vsel %vm1217, %v1253, 0.0
      %1270 = vadd.xlane.f32.xlu0 %v1269
      %v1271 = vpop.xlane.xlu0 %1270
      %v1272 = vsel %vm1217, %v1255, 0.0
      %1273 = vadd.xlane.f32.xlu0 %v1272
      %v1274 = vpop.xlane.xlu0 %1273
      %v1275 = vsel %vm1217, %v1257, 0.0
      %1276 = vadd.xlane.f32.xlu0 %v1275
      %v1277 = vpop.xlane.xlu0 %1276
      %v1278 = vsel %vm1217, %v1259, 0.0
      %1279 = vadd.xlane.f32.xlu0 %v1278
      %v1280 = vpop.xlane.xlu0 %1279
      %v1281 = vsel %vm1217, %v1261, 0.0
      %1282 = vadd.xlane.f32.xlu0 %v1281
      %v1283 = vpop.xlane.xlu0 %1282
      %v1284 = vsel %vm1217, %v1263, 0.0
      %1285 = vadd.xlane.f32.xlu0 %v1284
      %v1286 = vpop.xlane.xlu0 %1285
      %v1287 = vsel %vm1217, %v1265, 0.0
      %1288 = vadd.xlane.f32.xlu0 %v1287
      %v1289 = vpop.xlane.xlu0 %1288
      %v1290 = vrcp.pop %v1268
      %v1291 = vrcp.pop %v1271
      %v1292 = vrcp.pop %v1274
      %v1293 = vrcp.pop %v1277
      %v1294 = vrcp.pop %v1280
      %v1295 = vrcp.pop %v1283
      %v1296 = vrcp.pop %v1286
      %v1297 = vrcp.pop %v1289
      %v1298 = vmul.f32 %v1251, %v1290
      %v1299 = vmul.f32 %v1253, %v1291
      %v1300 = vmul.f32 %v1255, %v1292
      %v1301 = vmul.f32 %v1257, %v1293
      %v1302 = vmul.f32 %v1259, %v1294
      %v1303 = vmul.f32 %v1261, %v1295
      %v1304 = vmul.f32 %v1263, %v1296
      %v1305 = vmul.f32 %v1265, %v1297
      %vm1306 = vcmask 31744
      %v1308 = vsel %vm1306, %v1298, 0
      %vm1310 = vcmask 1043456
      %v1311 = vsel %vm1310, %v472, 0
      %1313 = vmatprep.subr.mxu0 0.0
      %1314 = vmatpush1.msra.mxu0 0.0
      %1315 = vmatprep.subr.mxu0 0.0
      %1316 = vmatpush1.msra.mxu0 0.0
      %1317 = vmatprep.subr.mxu0 0.0
      %1318 = vmatpush1.msra.mxu0 0.0
      %1319 = vmatprep.subr.mxu0 0.0
      %1320 = vmatpush1.msra.mxu0 0.0
      %1321 = vmatprep.subr.mxu0 0.0
      %1322 = vmatpush1.msra.mxu0 0.0
      %1323 = vmatprep.subr.mxu0 0.0
      %1324 = vmatpush1.msra.mxu0 0.0
      %1325 = vmatprep.subr.mxu0 0.0
      %1326 = vmatpush1.msra.mxu0 0.0
      %1327 = vmatprep.subr.mxu0 0.0
      %1328 = vmatpush1.msra.mxu0 0.0
      %1329 = vmatprep.subr.mxu0 0.0
      %1330 = vmatpush1.msra.mxu0 0.0
      %1331 = vmatprep.subr.mxu0 0.0
      %1332 = vmatpush1.msra.mxu0 0.0
      %1333 = vmatprep.subr.mxu0 0.0
      %1334 = vmatpush1.msra.mxu0 0.0
      %1335 = vmatprep.subr.mxu0 0.0
      %1336 = vmatpush1.msra.mxu0 0.0
      %1337 = vmatprep.subr.mxu0 0.0
      %1338 = vmatpush1.msra.mxu0 0.0
      %1339 = vmatprep.subr.mxu0 0.0
      %1340 = vmatpush1.msra.mxu0 0.0
      %1341 = vmatprep.subr.mxu0 0.0
      %1342 = vmatpush1.msra.mxu0 0.0
      %1343 = vmatprep.subr.mxu0 0.0
      %1344 = vmatpush1.msra.mxu0 %v1311
      %1345 = vmatprep.subr.mxu0 0.0
      %1346 = vmatpush2.msra.mxu0 0.0
      %1347 = vmatprep.subr.mxu0 0.0
      %1348 = vmatpush2.msra.mxu0 0.0
      %1349 = vmatprep.subr.mxu0 0.0
      %1350 = vmatpush2.msra.mxu0 0.0
      %1351 = vmatprep.subr.mxu0 0.0
      %1352 = vmatpush2.msra.mxu0 0.0
      %1353 = vmatprep.subr.mxu0 0.0
      %1354 = vmatpush2.msra.mxu0 0.0
      %1355 = vmatprep.subr.mxu0 0.0
      %1356 = vmatpush2.msra.mxu0 0.0
      %1357 = vmatprep.subr.mxu0 0.0
      %1358 = vmatpush2.msra.mxu0 0.0
      %1359 = vmatprep.subr.mxu0 0.0
      %1360 = vmatpush2.msra.mxu0 0.0
      %1361 = vmatprep.subr.mxu0 0.0
      %1362 = vmatpush2.msra.mxu0 0.0
      %1363 = vmatprep.subr.mxu0 0.0
      %1364 = vmatpush2.msra.mxu0 0.0
      %1365 = vmatprep.subr.mxu0 0.0
      %1366 = vmatpush2.msra.mxu0 0.0
      %1367 = vmatprep.subr.mxu0 0.0
      %1368 = vmatpush2.msra.mxu0 0.0
      %1369 = vmatprep.subr.mxu0 0.0
      %1370 = vmatpush2.msra.mxu0 0.0
      %1371 = vmatprep.subr.mxu0 0.0
      %1372 = vmatpush2.msra.mxu0 0.0
      %1373 = vmatprep.subr.mxu0 0.0
      %1374 = vmatpush2.msra.mxu0 0.0
      %1375 = vmatprep.subr.mxu0 0.0
      %1376 = vmatpush2.msra.mxu0 0.0
      %1377 = vmatprep.mubr.f32.mxu0 0.0
      %1378 = vmatmul.mubr.f32.gmra.mxu0 %v1308
      %v1379 = vpop.f32.mrf.mxu0
      %v1380 = vadd.f32 0.0, %v1379
      %v1381 = vpop.f32.mrf.mxu0
      %1382 = vdwg.mxu0
      %v1384 = vsel %vm1306, %v1299, 0
      %v1386 = vsel %vm1310, %v473, 0
      %1388 = vmatprep.subr.mxu0 0.0
      %1389 = vmatpush1.msra.mxu0 0.0
      %1390 = vmatprep.subr.mxu0 0.0
      %1391 = vmatpush1.msra.mxu0 0.0
      %1392 = vmatprep.subr.mxu0 0.0
      %1393 = vmatpush1.msra.mxu0 0.0
      %1394 = vmatprep.subr.mxu0 0.0
      %1395 = vmatpush1.msra.mxu0 0.0
      %1396 = vmatprep.subr.mxu0 0.0
      %1397 = vmatpush1.msra.mxu0 0.0
      %1398 = vmatprep.subr.mxu0 0.0
      %1399 = vmatpush1.msra.mxu0 0.0
      %1400 = vmatprep.subr.mxu0 0.0
      %1401 = vmatpush1.msra.mxu0 0.0
      %1402 = vmatprep.subr.mxu0 0.0
      %1403 = vmatpush1.msra.mxu0 0.0
      %1404 = vmatprep.subr.mxu0 0.0
      %1405 = vmatpush1.msra.mxu0 0.0
      %1406 = vmatprep.subr.mxu0 0.0
      %1407 = vmatpush1.msra.mxu0 0.0
      %1408 = vmatprep.subr.mxu0 0.0
      %1409 = vmatpush1.msra.mxu0 0.0
      %1410 = vmatprep.subr.mxu0 0.0
      %1411 = vmatpush1.msra.mxu0 0.0
      %1412 = vmatprep.subr.mxu0 0.0
      %1413 = vmatpush1.msra.mxu0 0.0
      %1414 = vmatprep.subr.mxu0 0.0
      %1415 = vmatpush1.msra.mxu0 0.0
      %1416 = vmatprep.subr.mxu0 0.0
      %1417 = vmatpush1.msra.mxu0 0.0
      %1418 = vmatprep.subr.mxu0 0.0
      %1419 = vmatpush1.msra.mxu0 %v1386
      %1420 = vmatprep.subr.mxu0 0.0
      %1421 = vmatpush2.msra.mxu0 0.0
      %1422 = vmatprep.subr.mxu0 0.0
      %1423 = vmatpush2.msra.mxu0 0.0
      %1424 = vmatprep.subr.mxu0 0.0
      %1425 = vmatpush2.msra.mxu0 0.0
      %1426 = vmatprep.subr.mxu0 0.0
      %1427 = vmatpush2.msra.mxu0 0.0
      %1428 = vmatprep.subr.mxu0 0.0
      %1429 = vmatpush2.msra.mxu0 0.0
      %1430 = vmatprep.subr.mxu0 0.0
      %1431 = vmatpush2.msra.mxu0 0.0
      %1432 = vmatprep.subr.mxu0 0.0
      %1433 = vmatpush2.msra.mxu0 0.0
      %1434 = vmatprep.subr.mxu0 0.0
      %1435 = vmatpush2.msra.mxu0 0.0
      %1436 = vmatprep.subr.mxu0 0.0
      %1437 = vmatpush2.msra.mxu0 0.0
      %1438 = vmatprep.subr.mxu0 0.0
      %1439 = vmatpush2.msra.mxu0 0.0
      %1440 = vmatprep.subr.mxu0 0.0
      %1441 = vmatpush2.msra.mxu0 0.0
      %1442 = vmatprep.subr.mxu0 0.0
      %1443 = vmatpush2.msra.mxu0 0.0
      %1444 = vmatprep.subr.mxu0 0.0
      %1445 = vmatpush2.msra.mxu0 0.0
      %1446 = vmatprep.subr.mxu0 0.0
      %1447 = vmatpush2.msra.mxu0 0.0
      %1448 = vmatprep.subr.mxu0 0.0
      %1449 = vmatpush2.msra.mxu0 0.0
      %1450 = vmatprep.subr.mxu0 0.0
      %1451 = vmatpush2.msra.mxu0 0.0
      %1452 = vmatprep.mubr.f32.mxu0 0.0
      %1453 = vmatmul.mubr.f32.gmra.mxu0 %v1384
      %v1454 = vpop.f32.mrf.mxu0
      %v1455 = vadd.f32 0.0, %v1454
      %v1456 = vpop.f32.mrf.mxu0
      %1457 = vdwg.mxu0
      %v1459 = vsel %vm1306, %v1300, 0
      %v1461 = vsel %vm1310, %v474, 0
      %1463 = vmatprep.subr.mxu0 0.0
      %1464 = vmatpush1.msra.mxu0 0.0
      %1465 = vmatprep.subr.mxu0 0.0
      %1466 = vmatpush1.msra.mxu0 0.0
      %1467 = vmatprep.subr.mxu0 0.0
      %1468 = vmatpush1.msra.mxu0 0.0
      %1469 = vmatprep.subr.mxu0 0.0
      %1470 = vmatpush1.msra.mxu0 0.0
      %1471 = vmatprep.subr.mxu0 0.0
      %1472 = vmatpush1.msra.mxu0 0.0
      %1473 = vmatprep.subr.mxu0 0.0
      %1474 = vmatpush1.msra.mxu0 0.0
      %1475 = vmatprep.subr.mxu0 0.0
      %1476 = vmatpush1.msra.mxu0 0.0
      %1477 = vmatprep.subr.mxu0 0.0
      %1478 = vmatpush1.msra.mxu0 0.0
      %1479 = vmatprep.subr.mxu0 0.0
      %1480 = vmatpush1.msra.mxu0 0.0
      %1481 = vmatprep.subr.mxu0 0.0
      %1482 = vmatpush1.msra.mxu0 0.0
      %1483 = vmatprep.subr.mxu0 0.0
      %1484 = vmatpush1.msra.mxu0 0.0
      %1485 = vmatprep.subr.mxu0 0.0
      %1486 = vmatpush1.msra.mxu0 0.0
      %1487 = vmatprep.subr.mxu0 0.0
      %1488 = vmatpush1.msra.mxu0 0.0
      %1489 = vmatprep.subr.mxu0 0.0
      %1490 = vmatpush1.msra.mxu0 0.0
      %1491 = vmatprep.subr.mxu0 0.0
      %1492 = vmatpush1.msra.mxu0 0.0
      %1493 = vmatprep.subr.mxu0 0.0
      %1494 = vmatpush1.msra.mxu0 %v1461
      %1495 = vmatprep.subr.mxu0 0.0
      %1496 = vmatpush2.msra.mxu0 0.0
      %1497 = vmatprep.subr.mxu0 0.0
      %1498 = vmatpush2.msra.mxu0 0.0
      %1499 = vmatprep.subr.mxu0 0.0
      %1500 = vmatpush2.msra.mxu0 0.0
      %1501 = vmatprep.subr.mxu0 0.0
      %1502 = vmatpush2.msra.mxu0 0.0
      %1503 = vmatprep.subr.mxu0 0.0
      %1504 = vmatpush2.msra.mxu0 0.0
      %1505 = vmatprep.subr.mxu0 0.0
      %1506 = vmatpush2.msra.mxu0 0.0
      %1507 = vmatprep.subr.mxu0 0.0
      %1508 = vmatpush2.msra.mxu0 0.0
      %1509 = vmatprep.subr.mxu0 0.0
      %1510 = vmatpush2.msra.mxu0 0.0
      %1511 = vmatprep.subr.mxu0 0.0
      %1512 = vmatpush2.msra.mxu0 0.0
      %1513 = vmatprep.subr.mxu0 0.0
      %1514 = vmatpush2.msra.mxu0 0.0
      %1515 = vmatprep.subr.mxu0 0.0
      %1516 = vmatpush2.msra.mxu0 0.0
      %1517 = vmatprep.subr.mxu0 0.0
      %1518 = vmatpush2.msra.mxu0 0.0
      %1519 = vmatprep.subr.mxu0 0.0
      %1520 = vmatpush2.msra.mxu0 0.0
      %1521 = vmatprep.subr.mxu0 0.0
      %1522 = vmatpush2.msra.mxu0 0.0
      %1523 = vmatprep.subr.mxu0 0.0
      %1524 = vmatpush2.msra.mxu0 0.0
      %1525 = vmatprep.subr.mxu0 0.0
      %1526 = vmatpush2.msra.mxu0 0.0
      %1527 = vmatprep.mubr.f32.mxu0 0.0
      %1528 = vmatmul.mubr.f32.gmra.mxu0 %v1459
      %v1529 = vpop.f32.mrf.mxu0
      %v1530 = vadd.f32 0.0, %v1529
      %v1531 = vpop.f32.mrf.mxu0
      %1532 = vdwg.mxu0
      %v1534 = vsel %vm1306, %v1301, 0
      %v1536 = vsel %vm1310, %v475, 0
      %1538 = vmatprep.subr.mxu0 0.0
      %1539 = vmatpush1.msra.mxu0 0.0
      %1540 = vmatprep.subr.mxu0 0.0
      %1541 = vmatpush1.msra.mxu0 0.0
      %1542 = vmatprep.subr.mxu0 0.0
      %1543 = vmatpush1.msra.mxu0 0.0
      %1544 = vmatprep.subr.mxu0 0.0
      %1545 = vmatpush1.msra.mxu0 0.0
      %1546 = vmatprep.subr.mxu0 0.0
      %1547 = vmatpush1.msra.mxu0 0.0
      %1548 = vmatprep.subr.mxu0 0.0
      %1549 = vmatpush1.msra.mxu0 0.0
      %1550 = vmatprep.subr.mxu0 0.0
      %1551 = vmatpush1.msra.mxu0 0.0
      %1552 = vmatprep.subr.mxu0 0.0
      %1553 = vmatpush1.msra.mxu0 0.0
      %1554 = vmatprep.subr.mxu0 0.0
      %1555 = vmatpush1.msra.mxu0 0.0
      %1556 = vmatprep.subr.mxu0 0.0
      %1557 = vmatpush1.msra.mxu0 0.0
      %1558 = vmatprep.subr.mxu0 0.0
      %1559 = vmatpush1.msra.mxu0 0.0
      %1560 = vmatprep.subr.mxu0 0.0
      %1561 = vmatpush1.msra.mxu0 0.0
      %1562 = vmatprep.subr.mxu0 0.0
      %1563 = vmatpush1.msra.mxu0 0.0
      %1564 = vmatprep.subr.mxu0 0.0
      %1565 = vmatpush1.msra.mxu0 0.0
      %1566 = vmatprep.subr.mxu0 0.0
      %1567 = vmatpush1.msra.mxu0 0.0
      %1568 = vmatprep.subr.mxu0 0.0
      %1569 = vmatpush1.msra.mxu0 %v1536
      %1570 = vmatprep.subr.mxu0 0.0
      %1571 = vmatpush2.msra.mxu0 0.0
      %1572 = vmatprep.subr.mxu0 0.0
      %1573 = vmatpush2.msra.mxu0 0.0
      %1574 = vmatprep.subr.mxu0 0.0
      %1575 = vmatpush2.msra.mxu0 0.0
      %1576 = vmatprep.subr.mxu0 0.0
      %1577 = vmatpush2.msra.mxu0 0.0
      %1578 = vmatprep.subr.mxu0 0.0
      %1579 = vmatpush2.msra.mxu0 0.0
      %1580 = vmatprep.subr.mxu0 0.0
      %1581 = vmatpush2.msra.mxu0 0.0
      %1582 = vmatprep.subr.mxu0 0.0
      %1583 = vmatpush2.msra.mxu0 0.0
      %1584 = vmatprep.subr.mxu0 0.0
      %1585 = vmatpush2.msra.mxu0 0.0
      %1586 = vmatprep.subr.mxu0 0.0
      %1587 = vmatpush2.msra.mxu0 0.0
      %1588 = vmatprep.subr.mxu0 0.0
      %1589 = vmatpush2.msra.mxu0 0.0
      %1590 = vmatprep.subr.mxu0 0.0
      %1591 = vmatpush2.msra.mxu0 0.0
      %1592 = vmatprep.subr.mxu0 0.0
      %1593 = vmatpush2.msra.mxu0 0.0
      %1594 = vmatprep.subr.mxu0 0.0
      %1595 = vmatpush2.msra.mxu0 0.0
      %1596 = vmatprep.subr.mxu0 0.0
      %1597 = vmatpush2.msra.mxu0 0.0
      %1598 = vmatprep.subr.mxu0 0.0
      %1599 = vmatpush2.msra.mxu0 0.0
      %1600 = vmatprep.subr.mxu0 0.0
      %1601 = vmatpush2.msra.mxu0 0.0
      %1602 = vmatprep.mubr.f32.mxu0 0.0
      %1603 = vmatmul.mubr.f32.gmra.mxu0 %v1534
      %v1604 = vpop.f32.mrf.mxu0
      %v1605 = vadd.f32 0.0, %v1604
      %v1606 = vpop.f32.mrf.mxu0
      %1607 = vdwg.mxu0
      %v1609 = vsel %vm1306, %v1302, 0
      %v1611 = vsel %vm1310, %v476, 0
      %1613 = vmatprep.subr.mxu0 0.0
      %1614 = vmatpush1.msra.mxu0 0.0
      %1615 = vmatprep.subr.mxu0 0.0
      %1616 = vmatpush1.msra.mxu0 0.0
      %1617 = vmatprep.subr.mxu0 0.0
      %1618 = vmatpush1.msra.mxu0 0.0
      %1619 = vmatprep.subr.mxu0 0.0
      %1620 = vmatpush1.msra.mxu0 0.0
      %1621 = vmatprep.subr.mxu0 0.0
      %1622 = vmatpush1.msra.mxu0 0.0
      %1623 = vmatprep.subr.mxu0 0.0
      %1624 = vmatpush1.msra.mxu0 0.0
      %1625 = vmatprep.subr.mxu0 0.0
      %1626 = vmatpush1.msra.mxu0 0.0
      %1627 = vmatprep.subr.mxu0 0.0
      %1628 = vmatpush1.msra.mxu0 0.0
      %1629 = vmatprep.subr.mxu0 0.0
      %1630 = vmatpush1.msra.mxu0 0.0
      %1631 = vmatprep.subr.mxu0 0.0
      %1632 = vmatpush1.msra.mxu0 0.0
      %1633 = vmatprep.subr.mxu0 0.0
      %1634 = vmatpush1.msra.mxu0 0.0
      %1635 = vmatprep.subr.mxu0 0.0
      %1636 = vmatpush1.msra.mxu0 0.0
      %1637 = vmatprep.subr.mxu0 0.0
      %1638 = vmatpush1.msra.mxu0 0.0
      %1639 = vmatprep.subr.mxu0 0.0
      %1640 = vmatpush1.msra.mxu0 0.0
      %1641 = vmatprep.subr.mxu0 0.0
      %1642 = vmatpush1.msra.mxu0 0.0
      %1643 = vmatprep.subr.mxu0 0.0
      %1644 = vmatpush1.msra.mxu0 %v1611
      %1645 = vmatprep.subr.mxu0 0.0
      %1646 = vmatpush2.msra.mxu0 0.0
      %1647 = vmatprep.subr.mxu0 0.0
      %1648 = vmatpush2.msra.mxu0 0.0
      %1649 = vmatprep.subr.mxu0 0.0
      %1650 = vmatpush2.msra.mxu0 0.0
      %1651 = vmatprep.subr.mxu0 0.0
      %1652 = vmatpush2.msra.mxu0 0.0
      %1653 = vmatprep.subr.mxu0 0.0
      %1654 = vmatpush2.msra.mxu0 0.0
      %1655 = vmatprep.subr.mxu0 0.0
      %1656 = vmatpush2.msra.mxu0 0.0
      %1657 = vmatprep.subr.mxu0 0.0
      %1658 = vmatpush2.msra.mxu0 0.0
      %1659 = vmatprep.subr.mxu0 0.0
      %1660 = vmatpush2.msra.mxu0 0.0
      %1661 = vmatprep.subr.mxu0 0.0
      %1662 = vmatpush2.msra.mxu0 0.0
      %1663 = vmatprep.subr.mxu0 0.0
      %1664 = vmatpush2.msra.mxu0 0.0
      %1665 = vmatprep.subr.mxu0 0.0
      %1666 = vmatpush2.msra.mxu0 0.0
      %1667 = vmatprep.subr.mxu0 0.0
      %1668 = vmatpush2.msra.mxu0 0.0
      %1669 = vmatprep.subr.mxu0 0.0
      %1670 = vmatpush2.msra.mxu0 0.0
      %1671 = vmatprep.subr.mxu0 0.0
      %1672 = vmatpush2.msra.mxu0 0.0
      %1673 = vmatprep.subr.mxu0 0.0
      %1674 = vmatpush2.msra.mxu0 0.0
      %1675 = vmatprep.subr.mxu0 0.0
      %1676 = vmatpush2.msra.mxu0 0.0
      %1677 = vmatprep.mubr.f32.mxu0 0.0
      %1678 = vmatmul.mubr.f32.gmra.mxu0 %v1609
      %v1679 = vpop.f32.mrf.mxu0
      %v1680 = vadd.f32 0.0, %v1679
      %v1681 = vpop.f32.mrf.mxu0
      %1682 = vdwg.mxu0
      %v1684 = vsel %vm1306, %v1303, 0
      %v1686 = vsel %vm1310, %v477, 0
      %1688 = vmatprep.subr.mxu0 0.0
      %1689 = vmatpush1.msra.mxu0 0.0
      %1690 = vmatprep.subr.mxu0 0.0
      %1691 = vmatpush1.msra.mxu0 0.0
      %1692 = vmatprep.subr.mxu0 0.0
      %1693 = vmatpush1.msra.mxu0 0.0
      %1694 = vmatprep.subr.mxu0 0.0
      %1695 = vmatpush1.msra.mxu0 0.0
      %1696 = vmatprep.subr.mxu0 0.0
      %1697 = vmatpush1.msra.mxu0 0.0
      %1698 = vmatprep.subr.mxu0 0.0
      %1699 = vmatpush1.msra.mxu0 0.0
      %1700 = vmatprep.subr.mxu0 0.0
      %1701 = vmatpush1.msra.mxu0 0.0
      %1702 = vmatprep.subr.mxu0 0.0
      %1703 = vmatpush1.msra.mxu0 0.0
      %1704 = vmatprep.subr.mxu0 0.0
      %1705 = vmatpush1.msra.mxu0 0.0
      %1706 = vmatprep.subr.mxu0 0.0
      %1707 = vmatpush1.msra.mxu0 0.0
      %1708 = vmatprep.subr.mxu0 0.0
      %1709 = vmatpush1.msra.mxu0 0.0
      %1710 = vmatprep.subr.mxu0 0.0
      %1711 = vmatpush1.msra.mxu0 0.0
      %1712 = vmatprep.subr.mxu0 0.0
      %1713 = vmatpush1.msra.mxu0 0.0
      %1714 = vmatprep.subr.mxu0 0.0
      %1715 = vmatpush1.msra.mxu0 0.0
      %1716 = vmatprep.subr.mxu0 0.0
      %1717 = vmatpush1.msra.mxu0 0.0
      %1718 = vmatprep.subr.mxu0 0.0
      %1719 = vmatpush1.msra.mxu0 %v1686
      %1720 = vmatprep.subr.mxu0 0.0
      %1721 = vmatpush2.msra.mxu0 0.0
      %1722 = vmatprep.subr.mxu0 0.0
      %1723 = vmatpush2.msra.mxu0 0.0
      %1724 = vmatprep.subr.mxu0 0.0
      %1725 = vmatpush2.msra.mxu0 0.0
      %1726 = vmatprep.subr.mxu0 0.0
      %1727 = vmatpush2.msra.mxu0 0.0
      %1728 = vmatprep.subr.mxu0 0.0
      %1729 = vmatpush2.msra.mxu0 0.0
      %1730 = vmatprep.subr.mxu0 0.0
      %1731 = vmatpush2.msra.mxu0 0.0
      %1732 = vmatprep.subr.mxu0 0.0
      %1733 = vmatpush2.msra.mxu0 0.0
      %1734 = vmatprep.subr.mxu0 0.0
      %1735 = vmatpush2.msra.mxu0 0.0
      %1736 = vmatprep.subr.mxu0 0.0
      %1737 = vmatpush2.msra.mxu0 0.0
      %1738 = vmatprep.subr.mxu0 0.0
      %1739 = vmatpush2.msra.mxu0 0.0
      %1740 = vmatprep.subr.mxu0 0.0
      %1741 = vmatpush2.msra.mxu0 0.0
      %1742 = vmatprep.subr.mxu0 0.0
      %1743 = vmatpush2.msra.mxu0 0.0
      %1744 = vmatprep.subr.mxu0 0.0
      %1745 = vmatpush2.msra.mxu0 0.0
      %1746 = vmatprep.subr.mxu0 0.0
      %1747 = vmatpush2.msra.mxu0 0.0
      %1748 = vmatprep.subr.mxu0 0.0
      %1749 = vmatpush2.msra.mxu0 0.0
      %1750 = vmatprep.subr.mxu0 0.0
      %1751 = vmatpush2.msra.mxu0 0.0
      %1752 = vmatprep.mubr.f32.mxu0 0.0
      %1753 = vmatmul.mubr.f32.gmra.mxu0 %v1684
      %v1754 = vpop.f32.mrf.mxu0
      %v1755 = vadd.f32 0.0, %v1754
      %v1756 = vpop.f32.mrf.mxu0
      %1757 = vdwg.mxu0
      %v1759 = vsel %vm1306, %v1304, 0
      %v1761 = vsel %vm1310, %v478, 0
      %1763 = vmatprep.subr.mxu0 0.0
      %1764 = vmatpush1.msra.mxu0 0.0
      %1765 = vmatprep.subr.mxu0 0.0
      %1766 = vmatpush1.msra.mxu0 0.0
      %1767 = vmatprep.subr.mxu0 0.0
      %1768 = vmatpush1.msra.mxu0 0.0
      %1769 = vmatprep.subr.mxu0 0.0
      %1770 = vmatpush1.msra.mxu0 0.0
      %1771 = vmatprep.subr.mxu0 0.0
      %1772 = vmatpush1.msra.mxu0 0.0
      %1773 = vmatprep.subr.mxu0 0.0
      %1774 = vmatpush1.msra.mxu0 0.0
      %1775 = vmatprep.subr.mxu0 0.0
      %1776 = vmatpush1.msra.mxu0 0.0
      %1777 = vmatprep.subr.mxu0 0.0
      %1778 = vmatpush1.msra.mxu0 0.0
      %1779 = vmatprep.subr.mxu0 0.0
      %1780 = vmatpush1.msra.mxu0 0.0
      %1781 = vmatprep.subr.mxu0 0.0
      %1782 = vmatpush1.msra.mxu0 0.0
      %1783 = vmatprep.subr.mxu0 0.0
      %1784 = vmatpush1.msra.mxu0 0.0
      %1785 = vmatprep.subr.mxu0 0.0
      %1786 = vmatpush1.msra.mxu0 0.0
      %1787 = vmatprep.subr.mxu0 0.0
      %1788 = vmatpush1.msra.mxu0 0.0
      %1789 = vmatprep.subr.mxu0 0.0
      %1790 = vmatpush1.msra.mxu0 0.0
      %1791 = vmatprep.subr.mxu0 0.0
      %1792 = vmatpush1.msra.mxu0 0.0
      %1793 = vmatprep.subr.mxu0 0.0
      %1794 = vmatpush1.msra.mxu0 %v1761
      %1795 = vmatprep.subr.mxu0 0.0
      %1796 = vmatpush2.msra.mxu0 0.0
      %1797 = vmatprep.subr.mxu0 0.0
      %1798 = vmatpush2.msra.mxu0 0.0
      %1799 = vmatprep.subr.mxu0 0.0
      %1800 = vmatpush2.msra.mxu0 0.0
      %1801 = vmatprep.subr.mxu0 0.0
      %1802 = vmatpush2.msra.mxu0 0.0
      %1803 = vmatprep.subr.mxu0 0.0
      %1804 = vmatpush2.msra.mxu0 0.0
      %1805 = vmatprep.subr.mxu0 0.0
      %1806 = vmatpush2.msra.mxu0 0.0
      %1807 = vmatprep.subr.mxu0 0.0
      %1808 = vmatpush2.msra.mxu0 0.0
      %1809 = vmatprep.subr.mxu0 0.0
      %1810 = vmatpush2.msra.mxu0 0.0
      %1811 = vmatprep.subr.mxu0 0.0
      %1812 = vmatpush2.msra.mxu0 0.0
      %1813 = vmatprep.subr.mxu0 0.0
      %1814 = vmatpush2.msra.mxu0 0.0
      %1815 = vmatprep.subr.mxu0 0.0
      %1816 = vmatpush2.msra.mxu0 0.0
      %1817 = vmatprep.subr.mxu0 0.0
      %1818 = vmatpush2.msra.mxu0 0.0
      %1819 = vmatprep.subr.mxu0 0.0
      %1820 = vmatpush2.msra.mxu0 0.0
      %1821 = vmatprep.subr.mxu0 0.0
      %1822 = vmatpush2.msra.mxu0 0.0
      %1823 = vmatprep.subr.mxu0 0.0
      %1824 = vmatpush2.msra.mxu0 0.0
      %1825 = vmatprep.subr.mxu0 0.0
      %1826 = vmatpush2.msra.mxu0 0.0
      %1827 = vmatprep.mubr.f32.mxu0 0.0
      %1828 = vmatmul.mubr.f32.gmra.mxu0 %v1759
      %v1829 = vpop.f32.mrf.mxu0
      %v1830 = vadd.f32 0.0, %v1829
      %v1831 = vpop.f32.mrf.mxu0
      %1832 = vdwg.mxu0
      %v1834 = vsel %vm1306, %v1305, 0
      %v1836 = vsel %vm1310, %v479, 0
      %1838 = vmatprep.subr.mxu0 0.0
      %1839 = vmatpush1.msra.mxu0 0.0
      %1840 = vmatprep.subr.mxu0 0.0
      %1841 = vmatpush1.msra.mxu0 0.0
      %1842 = vmatprep.subr.mxu0 0.0
      %1843 = vmatpush1.msra.mxu0 0.0
      %1844 = vmatprep.subr.mxu0 0.0
      %1845 = vmatpush1.msra.mxu0 0.0
      %1846 = vmatprep.subr.mxu0 0.0
      %1847 = vmatpush1.msra.mxu0 0.0
      %1848 = vmatprep.subr.mxu0 0.0
      %1849 = vmatpush1.msra.mxu0 0.0
      %1850 = vmatprep.subr.mxu0 0.0
      %1851 = vmatpush1.msra.mxu0 0.0
      %1852 = vmatprep.subr.mxu0 0.0
      %1853 = vmatpush1.msra.mxu0 0.0
      %1854 = vmatprep.subr.mxu0 0.0
      %1855 = vmatpush1.msra.mxu0 0.0
      %1856 = vmatprep.subr.mxu0 0.0
      %1857 = vmatpush1.msra.mxu0 0.0
      %1858 = vmatprep.subr.mxu0 0.0
      %1859 = vmatpush1.msra.mxu0 0.0
      %1860 = vmatprep.subr.mxu0 0.0
      %1861 = vmatpush1.msra.mxu0 0.0
      %1862 = vmatprep.subr.mxu0 0.0
      %1863 = vmatpush1.msra.mxu0 0.0
      %1864 = vmatprep.subr.mxu0 0.0
      %1865 = vmatpush1.msra.mxu0 0.0
      %1866 = vmatprep.subr.mxu0 0.0
      %1867 = vmatpush1.msra.mxu0 0.0
      %1868 = vmatprep.subr.mxu0 0.0
      %1869 = vmatpush1.msra.mxu0 %v1836
      %1870 = vmatprep.subr.mxu0 0.0
      %1871 = vmatpush2.msra.mxu0 0.0
      %1872 = vmatprep.subr.mxu0 0.0
      %1873 = vmatpush2.msra.mxu0 0.0
      %1874 = vmatprep.subr.mxu0 0.0
      %1875 = vmatpush2.msra.mxu0 0.0
      %1876 = vmatprep.subr.mxu0 0.0
      %1877 = vmatpush2.msra.mxu0 0.0
      %1878 = vmatprep.subr.mxu0 0.0
      %1879 = vmatpush2.msra.mxu0 0.0
      %1880 = vmatprep.subr.mxu0 0.0
      %1881 = vmatpush2.msra.mxu0 0.0
      %1882 = vmatprep.subr.mxu0 0.0
      %1883 = vmatpush2.msra.mxu0 0.0
      %1884 = vmatprep.subr.mxu0 0.0
      %1885 = vmatpush2.msra.mxu0 0.0
      %1886 = vmatprep.subr.mxu0 0.0
      %1887 = vmatpush2.msra.mxu0 0.0
      %1888 = vmatprep.subr.mxu0 0.0
      %1889 = vmatpush2.msra.mxu0 0.0
      %1890 = vmatprep.subr.mxu0 0.0
      %1891 = vmatpush2.msra.mxu0 0.0
      %1892 = vmatprep.subr.mxu0 0.0
      %1893 = vmatpush2.msra.mxu0 0.0
      %1894 = vmatprep.subr.mxu0 0.0
      %1895 = vmatpush2.msra.mxu0 0.0
      %1896 = vmatprep.subr.mxu0 0.0
      %1897 = vmatpush2.msra.mxu0 0.0
      %1898 = vmatprep.subr.mxu0 0.0
      %1899 = vmatpush2.msra.mxu0 0.0
      %1900 = vmatprep.subr.mxu0 0.0
      %1901 = vmatpush2.msra.mxu0 0.0
      %1902 = vmatprep.mubr.f32.mxu0 0.0
      %1903 = vmatmul.mubr.f32.gmra.mxu0 %v1834
      %v1904 = vpop.f32.mrf.mxu0
      %v1905 = vadd.f32 0.0, %v1904
      %v1906 = vpop.f32.mrf.mxu0
      %1907 = vdwg.mxu0
      %v1908 = vld [vmem:[%s4] sm:$0xff]
      %v1909 = vld [vmem:[%s4 + $0x8] sm:$0xff]
      %v1910 = vld [vmem:[%s4 + $0x10] sm:$0xff]
      %v1911 = vld [vmem:[%s4 + $0x18] sm:$0xff]
      %v1912 = vld [vmem:[%s4 + $0x20] sm:$0xff]
      %v1913 = vld [vmem:[%s4 + $0x28] sm:$0xff]
      %v1914 = vld [vmem:[%s4 + $0x30] sm:$0xff]
      %v1915 = vld [vmem:[%s4 + $0x38] sm:$0xff]
      %v1916 = vld [vmem:[%s5] sm:$0x1]
      %v1918 = vlaneseq
      %v1919 = vshrl.u32 %v1918, 7
      %v1920 = vsub.s32 0, %v1919
      %v1921 = vrot.slane %v1916, %v1920
      %v1931 = vrot.slane %v1455, 7
      %vm1932 = vcmask 1041409
      %v1933 = vsel %vm1932, %v1931, %v1380
      %v1934 = vrot.slane %v1530, 6
      %vm1935 = vcmask 1042434
      %v1936 = vsel %vm1935, %v1934, %v1933
      %v1937 = vrot.slane %v1605, 5
      %vm1938 = vcmask 1043459
      %v1939 = vsel %vm1938, %v1937, %v1936
      %v1940 = vrot.slane %v1680, 4
      %vm1941 = vcmask 1044484
      %v1942 = vsel %vm1941, %v1940, %v1939
      %v1943 = vrot.slane %v1755, 3
      %vm1944 = vcmask 1045509
      %v1945 = vsel %vm1944, %v1943, %v1942
      %v1946 = vrot.slane %v1830, 2
      %vm1947 = vcmask 1046534
      %v1948 = vsel %vm1947, %v1946, %v1945
      %v1949 = vrot.slane %v1905, 1
      %vm1950 = vcmask 1047559
      %v1951 = vsel %vm1950, %v1949, %v1948
      %v1952 = vsel %vm616, %v1951, 0
      %1954 = vmatprep.subr.mxu0 0.0
      %1955 = vmatpush1.msra.mxu0 0.0
      %1956 = vmatprep.subr.mxu0 0.0
      %1957 = vmatpush1.msra.mxu0 0.0
      %1958 = vmatprep.subr.mxu0 0.0
      %1959 = vmatpush1.msra.mxu0 0.0
      %1960 = vmatprep.subr.mxu0 0.0
      %1961 = vmatpush1.msra.mxu0 0.0
      %1962 = vmatprep.subr.mxu0 0.0
      %1963 = vmatpush1.msra.mxu0 0.0
      %1964 = vmatprep.subr.mxu0 0.0
      %1965 = vmatpush1.msra.mxu0 0.0
      %1966 = vmatprep.subr.mxu0 0.0
      %1967 = vmatpush1.msra.mxu0 0.0
      %1968 = vmatprep.subr.mxu0 0.0
      %1969 = vmatpush1.msra.mxu0 0.0
      %1970 = vmatprep.subr.mxu0 0.0
      %1971 = vmatpush1.msra.mxu0 %v1915
      %1972 = vmatprep.subr.mxu0 0.0
      %1973 = vmatpush1.msra.mxu0 %v1914
      %1974 = vmatprep.subr.mxu0 0.0
      %1975 = vmatpush1.msra.mxu0 %v1913
      %1976 = vmatprep.subr.mxu0 0.0
      %1977 = vmatpush1.msra.mxu0 %v1912
      %1978 = vmatprep.subr.mxu0 0.0
      %1979 = vmatpush1.msra.mxu0 %v1911
      %1980 = vmatprep.subr.mxu0 0.0
      %1981 = vmatpush1.msra.mxu0 %v1910
      %1982 = vmatprep.subr.mxu0 0.0
      %1983 = vmatpush1.msra.mxu0 %v1909
      %1984 = vmatprep.subr.mxu0 0.0
      %1985 = vmatpush1.msra.mxu0 %v1908
      %1986 = vmatprep.subr.mxu0 0.0
      %1987 = vmatpush2.msra.mxu0 0.0
      %1988 = vmatprep.subr.mxu0 0.0
      %1989 = vmatpush2.msra.mxu0 0.0
      %1990 = vmatprep.subr.mxu0 0.0
      %1991 = vmatpush2.msra.mxu0 0.0
      %1992 = vmatprep.subr.mxu0 0.0
      %1993 = vmatpush2.msra.mxu0 0.0
      %1994 = vmatprep.subr.mxu0 0.0
      %1995 = vmatpush2.msra.mxu0 0.0
      %1996 = vmatprep.subr.mxu0 0.0
      %1997 = vmatpush2.msra.mxu0 0.0
      %1998 = vmatprep.subr.mxu0 0.0
      %1999 = vmatpush2.msra.mxu0 0.0
      %2000 = vmatprep.subr.mxu0 0.0
      %2001 = vmatpush2.msra.mxu0 0.0
      %2002 = vmatprep.subr.mxu0 0.0
      %2003 = vmatpush2.msra.mxu0 0.0
      %2004 = vmatprep.subr.mxu0 0.0
      %2005 = vmatpush2.msra.mxu0 0.0
      %2006 = vmatprep.subr.mxu0 0.0
      %2007 = vmatpush2.msra.mxu0 0.0
      %2008 = vmatprep.subr.mxu0 0.0
      %2009 = vmatpush2.msra.mxu0 0.0
      %2010 = vmatprep.subr.mxu0 0.0
      %2011 = vmatpush2.msra.mxu0 0.0
      %2012 = vmatprep.subr.mxu0 0.0
      %2013 = vmatpush2.msra.mxu0 0.0
      %2014 = vmatprep.subr.mxu0 0.0
      %2015 = vmatpush2.msra.mxu0 0.0
      %2016 = vmatprep.subr.mxu0 0.0
      %2017 = vmatpush2.msra.mxu0 0.0
      %2018 = vmatprep.mubr.f32.mxu0 0.0
      %2019 = vmatmul.mubr.f32.gmra.mxu0 %v1952
      %v2020 = vpop.f32.mrf.mxu0
      %v2021 = vadd.f32 %v1921, %v2020
      %v2022 = vpop.f32.mrf.mxu0
      %2023 = vdwg.mxu0
      %v2024 = vld [vmem:[%s458] sm:$0xff]
      %v2025 = vld [vmem:[%s6] sm:$0xff]
      %v2026 = vld [vmem:[%s6 + $0x8] sm:$0xff]
      %v2027 = vld [vmem:[%s6 + $0x10] sm:$0xff]
      %v2028 = vld [vmem:[%s6 + $0x18] sm:$0xff]
      %v2029 = vld [vmem:[%s6 + $0x20] sm:$0xff]
      %v2030 = vld [vmem:[%s6 + $0x28] sm:$0xff]
      %v2031 = vld [vmem:[%s6 + $0x30] sm:$0xff]
      %v2032 = vld [vmem:[%s6 + $0x38] sm:$0xff]
      %v2034 = vsel %vm616, %v2021, 0
      %2036 = vmatprep.subr.mxu0 0.0
      %2037 = vmatpush1.msra.mxu0 0.0
      %2038 = vmatprep.subr.mxu0 0.0
      %2039 = vmatpush1.msra.mxu0 0.0
      %2040 = vmatprep.subr.mxu0 0.0
      %2041 = vmatpush1.msra.mxu0 0.0
      %2042 = vmatprep.subr.mxu0 0.0
      %2043 = vmatpush1.msra.mxu0 0.0
      %2044 = vmatprep.subr.mxu0 0.0
      %2045 = vmatpush1.msra.mxu0 0.0
      %2046 = vmatprep.subr.mxu0 0.0
      %2047 = vmatpush1.msra.mxu0 0.0
      %2048 = vmatprep.subr.mxu0 0.0
      %2049 = vmatpush1.msra.mxu0 0.0
      %2050 = vmatprep.subr.mxu0 0.0
      %2051 = vmatpush1.msra.mxu0 0.0
      %2052 = vmatprep.subr.mxu0 0.0
      %2053 = vmatpush1.msra.mxu0 %v2032
      %2054 = vmatprep.subr.mxu0 0.0
      %2055 = vmatpush1.msra.mxu0 %v2031
      %2056 = vmatprep.subr.mxu0 0.0
      %2057 = vmatpush1.msra.mxu0 %v2030
      %2058 = vmatprep.subr.mxu0 0.0
      %2059 = vmatpush1.msra.mxu0 %v2029
      %2060 = vmatprep.subr.mxu0 0.0
      %2061 = vmatpush1.msra.mxu0 %v2028
      %2062 = vmatprep.subr.mxu0 0.0
      %2063 = vmatpush1.msra.mxu0 %v2027
      %2064 = vmatprep.subr.mxu0 0.0
      %2065 = vmatpush1.msra.mxu0 %v2026
      %2066 = vmatprep.subr.mxu0 0.0
      %2067 = vmatpush1.msra.mxu0 %v2025
      %2068 = vmatprep.subr.mxu0 0.0
      %2069 = vmatpush2.msra.mxu0 0.0
      %2070 = vmatprep.subr.mxu0 0.0
      %2071 = vmatpush2.msra.mxu0 0.0
      %2072 = vmatprep.subr.mxu0 0.0
      %2073 = vmatpush2.msra.mxu0 0.0
      %2074 = vmatprep.subr.mxu0 0.0
      %2075 = vmatpush2.msra.mxu0 0.0
      %2076 = vmatprep.subr.mxu0 0.0
      %2077 = vmatpush2.msra.mxu0 0.0
      %2078 = vmatprep.subr.mxu0 0.0
      %2079 = vmatpush2.msra.mxu0 0.0
      %2080 = vmatprep.subr.mxu0 0.0
      %2081 = vmatpush2.msra.mxu0 0.0
      %2082 = vmatprep.subr.mxu0 0.0
      %2083 = vmatpush2.msra.mxu0 0.0
      %2084 = vmatprep.subr.mxu0 0.0
      %2085 = vmatpush2.msra.mxu0 0.0
      %2086 = vmatprep.subr.mxu0 0.0
      %2087 = vmatpush2.msra.mxu0 0.0
      %2088 = vmatprep.subr.mxu0 0.0
      %2089 = vmatpush2.msra.mxu0 0.0
      %2090 = vmatprep.subr.mxu0 0.0
      %2091 = vmatpush2.msra.mxu0 0.0
      %2092 = vmatprep.subr.mxu0 0.0
      %2093 = vmatpush2.msra.mxu0 0.0
      %2094 = vmatprep.subr.mxu0 0.0
      %2095 = vmatpush2.msra.mxu0 0.0
      %2096 = vmatprep.subr.mxu0 0.0
      %2097 = vmatpush2.msra.mxu0 0.0
      %2098 = vmatprep.subr.mxu0 0.0
      %2099 = vmatpush2.msra.mxu0 0.0
      %2100 = vmatprep.mubr.f32.mxu0 0.0
      %2101 = vmatmul.mubr.f32.gmra.mxu0 %v2034
      %v2102 = vpop.f32.mrf.mxu0
      %v2103 = vadd.f32 0.0, %v2102
      %v2104 = vpop.f32.mrf.mxu0
      %2105 = vdwg.mxu0
      %v2106 = vadd.f32 %v2024, %v2103
      %v2107 = vld [vmem:[#allocation2] sm:$0xff]
      %v2108 = vld [vmem:[%s7] sm:$0xff]
      %v2109 = vld [vmem:[%s7 + $0x8] sm:$0xff]
      %v2110 = vld [vmem:[%s7 + $0x10] sm:$0xff]
      %v2111 = vld [vmem:[%s7 + $0x18] sm:$0xff]
      %v2113 = vsel %vm492, %v2107, 0
      %2115 = vmatprep.subr.mxu0 0.0
      %2116 = vmatpush1.msra.mxu0 0.0
      %2117 = vmatprep.subr.mxu0 0.0
      %2118 = vmatpush1.msra.mxu0 0.0
      %2119 = vmatprep.subr.mxu0 0.0
      %2120 = vmatpush1.msra.mxu0 0.0
      %2121 = vmatprep.subr.mxu0 0.0
      %2122 = vmatpush1.msra.mxu0 0.0
      %2123 = vmatprep.subr.mxu0 0.0
      %2124 = vmatpush1.msra.mxu0 0.0
      %2125 = vmatprep.subr.mxu0 0.0
      %2126 = vmatpush1.msra.mxu0 0.0
      %2127 = vmatprep.subr.mxu0 0.0
      %2128 = vmatpush1.msra.mxu0 0.0
      %2129 = vmatprep.subr.mxu0 0.0
      %2130 = vmatpush1.msra.mxu0 0.0
      %2131 = vmatprep.subr.mxu0 0.0
      %2132 = vmatpush1.msra.mxu0 0.0
      %2133 = vmatprep.subr.mxu0 0.0
      %2134 = vmatpush1.msra.mxu0 0.0
      %2135 = vmatprep.subr.mxu0 0.0
      %2136 = vmatpush1.msra.mxu0 0.0
      %2137 = vmatprep.subr.mxu0 0.0
      %2138 = vmatpush1.msra.mxu0 0.0
      %2139 = vmatprep.subr.mxu0 0.0
      %2140 = vmatpush1.msra.mxu0 %v2111
      %2141 = vmatprep.subr.mxu0 0.0
      %2142 = vmatpush1.msra.mxu0 %v2110
      %2143 = vmatprep.subr.mxu0 0.0
      %2144 = vmatpush1.msra.mxu0 %v2109
      %2145 = vmatprep.subr.mxu0 0.0
      %2146 = vmatpush1.msra.mxu0 %v2108
      %2147 = vmatprep.subr.mxu0 0.0
      %2148 = vmatpush2.msra.mxu0 0.0
      %2149 = vmatprep.subr.mxu0 0.0
      %2150 = vmatpush2.msra.mxu0 0.0
      %2151 = vmatprep.subr.mxu0 0.0
      %2152 = vmatpush2.msra.mxu0 0.0
      %2153 = vmatprep.subr.mxu0 0.0
      %2154 = vmatpush2.msra.mxu0 0.0
      %2155 = vmatprep.subr.mxu0 0.0
      %2156 = vmatpush2.msra.mxu0 0.0
      %2157 = vmatprep.subr.mxu0 0.0
      %2158 = vmatpush2.msra.mxu0 0.0
      %2159 = vmatprep.subr.mxu0 0.0
      %2160 = vmatpush2.msra.mxu0 0.0
      %2161 = vmatprep.subr.mxu0 0.0
      %2162 = vmatpush2.msra.mxu0 0.0
      %2163 = vmatprep.subr.mxu0 0.0
      %2164 = vmatpush2.msra.mxu0 0.0
      %2165 = vmatprep.subr.mxu0 0.0
      %2166 = vmatpush2.msra.mxu0 0.0
      %2167 = vmatprep.subr.mxu0 0.0
      %2168 = vmatpush2.msra.mxu0 0.0
      %2169 = vmatprep.subr.mxu0 0.0
      %2170 = vmatpush2.msra.mxu0 0.0
      %2171 = vmatprep.subr.mxu0 0.0
      %2172 = vmatpush2.msra.mxu0 0.0
      %2173 = vmatprep.subr.mxu0 0.0
      %2174 = vmatpush2.msra.mxu0 0.0
      %2175 = vmatprep.subr.mxu0 0.0
      %2176 = vmatpush2.msra.mxu0 0.0
      %2177 = vmatprep.subr.mxu0 0.0
      %2178 = vmatpush2.msra.mxu0 0.0
      %2179 = vmatprep.mubr.f32.mxu0 0.0
      %2180 = vmatmul.mubr.f32.gmra.mxu0 %v2113
      %v2181 = vpop.f32.mrf.mxu0
      %v2182 = vadd.f32 0.0, %v2181
      %v2183 = vpop.f32.mrf.mxu0
      %2184 = vdwg.mxu0
      %v2185 = vadd.f32 %v2106, %v2182
      %v2186 = vld [vmem:[#allocation3] sm:$0xff]
      %v2187 = vxor.u32 %v2185, 2147483648
      %v2188 = vmul.f32 %v2187, 1.442695
      %v2189 = vpow.pop %v2188
      %v2190 = vadd.f32 %v2189, 1.0
      %v2191 = vrcp.pop %v2190
      %v2192 = vmul.f32 1.0, %v2191
      %v2193 = vtanh.pop %v2185
      %2195 = vrot.lane.b32.xlu0 %v2186, 32
      %v2196 = vpop.permute.xlu0 %2195
      %v2198 = vmul.f32 %v2192, %v2196
      %2200 = vrot.lane.b32.xlu0 %v2193, 64
      %v2201 = vpop.permute.xlu0 %2200
      %v2203 = vmul.f32 %v2192, %v2201
      %2205 = vrot.lane.b32.xlu0 %v2203, 32
      %v2206 = vpop.permute.xlu0 %2205
      %v2208 = vadd.f32 %v2198, %v2206
      %v2209 = vtanh.pop %v2208
      %2211 = vrot.lane.b32.xlu0 %v2209, 64
      %v2212 = vpop.permute.xlu0 %2211
      %v2214 = vmul.f32 %v2192, %v2212
      %v2215 = vld [vmem:[%s8] sm:$0xff]
      %v2216 = vld [vmem:[%s8 + $0x8] sm:$0xff]
      %v2217 = vld [vmem:[%s8 + $0x10] sm:$0xff]
      %v2218 = vld [vmem:[%s8 + $0x18] sm:$0xff]
      %v2219 = vld [vmem:[#allocation4] sm:$0xff]
      %v2220 = vld [vmem:[%s9] sm:$0xff]
      %v2221 = vld [vmem:[%s9 + $0x8] sm:$0xff]
      %v2222 = vld [vmem:[%s9 + $0x10] sm:$0xff]
      %v2223 = vld [vmem:[%s9 + $0x18] sm:$0xff]
      %v2225 = vsel %vm492, %v2219, 0
      %2227 = vmatprep.subr.mxu0 0.0
      %2228 = vmatpush1.msra.mxu0 0.0
      %2229 = vmatprep.subr.mxu0 0.0
      %2230 = vmatpush1.msra.mxu0 0.0
      %2231 = vmatprep.subr.mxu0 0.0
      %2232 = vmatpush1.msra.mxu0 0.0
      %2233 = vmatprep.subr.mxu0 0.0
      %2234 = vmatpush1.msra.mxu0 0.0
      %2235 = vmatprep.subr.mxu0 0.0
      %2236 = vmatpush1.msra.mxu0 0.0
      %2237 = vmatprep.subr.mxu0 0.0
      %2238 = vmatpush1.msra.mxu0 0.0
      %2239 = vmatprep.subr.mxu0 0.0
      %2240 = vmatpush1.msra.mxu0 0.0
      %2241 = vmatprep.subr.mxu0 0.0
      %2242 = vmatpush1.msra.mxu0 0.0
      %2243 = vmatprep.subr.mxu0 0.0
      %2244 = vmatpush1.msra.mxu0 0.0
      %2245 = vmatprep.subr.mxu0 0.0
      %2246 = vmatpush1.msra.mxu0 0.0
      %2247 = vmatprep.subr.mxu0 0.0
      %2248 = vmatpush1.msra.mxu0 0.0
      %2249 = vmatprep.subr.mxu0 0.0
      %2250 = vmatpush1.msra.mxu0 0.0
      %2251 = vmatprep.subr.mxu0 0.0
      %2252 = vmatpush1.msra.mxu0 %v2223
      %2253 = vmatprep.subr.mxu0 0.0
      %2254 = vmatpush1.msra.mxu0 %v2222
      %2255 = vmatprep.subr.mxu0 0.0
      %2256 = vmatpush1.msra.mxu0 %v2221
      %2257 = vmatprep.subr.mxu0 0.0
      %2258 = vmatpush1.msra.mxu0 %v2220
      %2259 = vmatprep.subr.mxu0 0.0
      %2260 = vmatpush2.msra.mxu0 0.0
      %2261 = vmatprep.subr.mxu0 0.0
      %2262 = vmatpush2.msra.mxu0 0.0
      %2263 = vmatprep.subr.mxu0 0.0
      %2264 = vmatpush2.msra.mxu0 0.0
      %2265 = vmatprep.subr.mxu0 0.0
      %2266 = vmatpush2.msra.mxu0 0.0
      %2267 = vmatprep.subr.mxu0 0.0
      %2268 = vmatpush2.msra.mxu0 0.0
      %2269 = vmatprep.subr.mxu0 0.0
      %2270 = vmatpush2.msra.mxu0 0.0
      %2271 = vmatprep.subr.mxu0 0.0
      %2272 = vmatpush2.msra.mxu0 0.0
      %2273 = vmatprep.subr.mxu0 0.0
      %2274 = vmatpush2.msra.mxu0 0.0
      %2275 = vmatprep.subr.mxu0 0.0
      %2276 = vmatpush2.msra.mxu0 0.0
      %2277 = vmatprep.subr.mxu0 0.0
      %2278 = vmatpush2.msra.mxu0 0.0
      %2279 = vmatprep.subr.mxu0 0.0
      %2280 = vmatpush2.msra.mxu0 0.0
      %2281 = vmatprep.subr.mxu0 0.0
      %2282 = vmatpush2.msra.mxu0 0.0
      %2283 = vmatprep.subr.mxu0 0.0
      %2284 = vmatpush2.msra.mxu0 0.0
      %2285 = vmatprep.subr.mxu0 0.0
      %2286 = vmatpush2.msra.mxu0 0.0
      %2287 = vmatprep.subr.mxu0 0.0
      %2288 = vmatpush2.msra.mxu0 0.0
      %2289 = vmatprep.subr.mxu0 0.0
      %2290 = vmatpush2.msra.mxu0 0.0
      %2291 = vmatprep.mubr.f32.mxu0 0.0
      %2292 = vmatmul.mubr.f32.gmra.mxu0 %v2225
      %v2293 = vpop.f32.mrf.mxu0
      %v2294 = vadd.f32 0.0, %v2293
      %v2295 = vpop.f32.mrf.mxu0
      %2296 = vdwg.mxu0
      %2298 = vrot.lane.b32.xlu0 %v2214, 32
      %v2299 = vpop.permute.xlu0 %2298
      %v2300 = vsel %vm492, %v2299, 0
      %2302 = vmatprep.subr.mxu0 0.0
      %2303 = vmatpush1.msra.mxu0 0.0
      %2304 = vmatprep.subr.mxu0 0.0
      %2305 = vmatpush1.msra.mxu0 0.0
      %2306 = vmatprep.subr.mxu0 0.0
      %2307 = vmatpush1.msra.mxu0 0.0
      %2308 = vmatprep.subr.mxu0 0.0
      %2309 = vmatpush1.msra.mxu0 0.0
      %2310 = vmatprep.subr.mxu0 0.0
      %2311 = vmatpush1.msra.mxu0 0.0
      %2312 = vmatprep.subr.mxu0 0.0
      %2313 = vmatpush1.msra.mxu0 0.0
      %2314 = vmatprep.subr.mxu0 0.0
      %2315 = vmatpush1.msra.mxu0 0.0
      %2316 = vmatprep.subr.mxu0 0.0
      %2317 = vmatpush1.msra.mxu0 0.0
      %2318 = vmatprep.subr.mxu0 0.0
      %2319 = vmatpush1.msra.mxu0 0.0
      %2320 = vmatprep.subr.mxu0 0.0
      %2321 = vmatpush1.msra.mxu0 0.0
      %2322 = vmatprep.subr.mxu0 0.0
      %2323 = vmatpush1.msra.mxu0 0.0
      %2324 = vmatprep.subr.mxu0 0.0
      %2325 = vmatpush1.msra.mxu0 0.0
      %2326 = vmatprep.subr.mxu0 0.0
      %2327 = vmatpush1.msra.mxu0 %v2218
      %2328 = vmatprep.subr.mxu0 0.0
      %2329 = vmatpush1.msra.mxu0 %v2217
      %2330 = vmatprep.subr.mxu0 0.0
      %2331 = vmatpush1.msra.mxu0 %v2216
      %2332 = vmatprep.subr.mxu0 0.0
      %2333 = vmatpush1.msra.mxu0 %v2215
      %2334 = vmatprep.subr.mxu0 0.0
      %2335 = vmatpush2.msra.mxu0 0.0
      %2336 = vmatprep.subr.mxu0 0.0
      %2337 = vmatpush2.msra.mxu0 0.0
      %2338 = vmatprep.subr.mxu0 0.0
      %2339 = vmatpush2.msra.mxu0 0.0
      %2340 = vmatprep.subr.mxu0 0.0
      %2341 = vmatpush2.msra.mxu0 0.0
      %2342 = vmatprep.subr.mxu0 0.0
      %2343 = vmatpush2.msra.mxu0 0.0
      %2344 = vmatprep.subr.mxu0 0.0
      %2345 = vmatpush2.msra.mxu0 0.0
      %2346 = vmatprep.subr.mxu0 0.0
      %2347 = vmatpush2.msra.mxu0 0.0
      %2348 = vmatprep.subr.mxu0 0.0
      %2349 = vmatpush2.msra.mxu0 0.0
      %2350 = vmatprep.subr.mxu0 0.0
      %2351 = vmatpush2.msra.mxu0 0.0
      %2352 = vmatprep.subr.mxu0 0.0
      %2353 = vmatpush2.msra.mxu0 0.0
      %2354 = vmatprep.subr.mxu0 0.0
      %2355 = vmatpush2.msra.mxu0 0.0
      %2356 = vmatprep.subr.mxu0 0.0
      %2357 = vmatpush2.msra.mxu0 0.0
      %2358 = vmatprep.subr.mxu0 0.0
      %2359 = vmatpush2.msra.mxu0 0.0
      %2360 = vmatprep.subr.mxu0 0.0
      %2361 = vmatpush2.msra.mxu0 0.0
      %2362 = vmatprep.subr.mxu0 0.0
      %2363 = vmatpush2.msra.mxu0 0.0
      %2364 = vmatprep.subr.mxu0 0.0
      %2365 = vmatpush2.msra.mxu0 0.0
      %2366 = vmatprep.mubr.f32.mxu0 0.0
      %2367 = vmatmul.mubr.f32.gmra.mxu0 %v2300
      %v2368 = vpop.f32.mrf.mxu0
      %v2369 = vadd.f32 %v2294, %v2368
      %v2370 = vpop.f32.mrf.mxu0
      %2371 = vdwg.mxu0
      %v2372 = vld [vmem:[%s10] sm:$0x1]
      %v2374 = vlaneseq
      %v2375 = vshrl.u32 %v2374, 7
      %v2376 = vsub.s32 0, %v2375
      %v2377 = vrot.slane %v2372, %v2376
      %v2379 = vadd.f32 %v2369, %v2377
      %v2380 = vld [vmem:[#allocation5] sm:$0xff]
      %v2381 = vxor.u32 %v2379, 2147483648
      %v2382 = vmul.f32 %v2381, 1.442695
      %v2383 = vpow.pop %v2382
      %v2384 = vadd.f32 %v2383, 1.0
      %v2385 = vrcp.pop %v2384
      %v2386 = vmul.f32 1.0, %v2385
      %v2387 = vtanh.pop %v2379
      %2389 = vrot.lane.b32.xlu0 %v2380, 32
      %v2390 = vpop.permute.xlu0 %2389
      %v2392 = vmul.f32 %v2386, %v2390
      %2394 = vrot.lane.b32.xlu0 %v2387, 64
      %v2395 = vpop.permute.xlu0 %2394
      %v2397 = vmul.f32 %v2386, %v2395
      %2399 = vrot.lane.b32.xlu0 %v2397, 32
      %v2400 = vpop.permute.xlu0 %2399
      %v2402 = vadd.f32 %v2392, %v2400
      %v2403 = vtanh.pop %v2402
      %2405 = vrot.lane.b32.xlu0 %v2403, 64
      %v2406 = vpop.permute.xlu0 %2405
      %v2408 = vmul.f32 %v2386, %v2406
      %2410 = vst.msk [vmem:[#allocation2] sm:$0xff] %vm492, %v2299
      %2412 = vrot.lane.b32.xlu0 %v2208, 96
      %v2413 = vpop.permute.xlu0 %2412
      %2415 = vst.msk [vmem:[#allocation3] sm:$0xff] %vm492, %v2413
      %2417 = vrot.lane.b32.xlu0 %v2408, 32
      %v2418 = vpop.permute.xlu0 %2417
      %2420 = vst.msk [vmem:[#allocation4] sm:$0xff] %vm492, %v2418
      %2422 = vrot.lane.b32.xlu0 %v2402, 96
      %v2423 = vpop.permute.xlu0 %2422
      %2425 = vst.msk [vmem:[#allocation5] sm:$0xff] %vm492, %v2423
      %v2426 = vld [vmem:[%s11] sm:$0xff]
      %v2427 = vld [vmem:[%s11 + $0x8] sm:$0xff]
      %v2428 = vld [vmem:[%s11 + $0x10] sm:$0xff]
      %v2429 = vld [vmem:[%s11 + $0x18] sm:$0xff]
      %v2430 = vld [vmem:[%s12] sm:$0xff]
      %v2431 = vld [vmem:[%s12 + $0x8] sm:$0xff]
      %v2432 = vld [vmem:[%s12 + $0x10] sm:$0xff]
      %v2433 = vld [vmem:[%s12 + $0x18] sm:$0xff]
      %v2434 = vld [vmem:[%s12 + $0x20] sm:$0xff]
      %v2435 = vld [vmem:[%s12 + $0x28] sm:$0xff]
      %v2436 = vld [vmem:[%s12 + $0x30] sm:$0xff]
      %v2437 = vld [vmem:[%s12 + $0x38] sm:$0xff]
      %2438 = vmatprep.subr.mxu0 0.0
      %2439 = vmatpush1.msra.mxu0 0.0
      %2440 = vmatprep.subr.mxu0 0.0
      %2441 = vmatpush1.msra.mxu0 0.0
      %2442 = vmatprep.subr.mxu0 0.0
      %2443 = vmatpush1.msra.mxu0 0.0
      %2444 = vmatprep.subr.mxu0 0.0
      %2445 = vmatpush1.msra.mxu0 0.0
      %2446 = vmatprep.subr.mxu0 0.0
      %2447 = vmatpush1.msra.mxu0 0.0
      %2448 = vmatprep.subr.mxu0 0.0
      %2449 = vmatpush1.msra.mxu0 0.0
      %2450 = vmatprep.subr.mxu0 0.0
      %2451 = vmatpush1.msra.mxu0 0.0
      %2452 = vmatprep.subr.mxu0 0.0
      %2453 = vmatpush1.msra.mxu0 0.0
      %2454 = vmatprep.subr.mxu0 0.0
      %2455 = vmatpush1.msra.mxu0 %v2437
      %2456 = vmatprep.subr.mxu0 0.0
      %2457 = vmatpush1.msra.mxu0 %v2436
      %2458 = vmatprep.subr.mxu0 0.0
      %2459 = vmatpush1.msra.mxu0 %v2435
      %2460 = vmatprep.subr.mxu0 0.0
      %2461 = vmatpush1.msra.mxu0 %v2434
      %2462 = vmatprep.subr.mxu0 0.0
      %2463 = vmatpush1.msra.mxu0 %v2433
      %2464 = vmatprep.subr.mxu0 0.0
      %2465 = vmatpush1.msra.mxu0 %v2432
      %2466 = vmatprep.subr.mxu0 0.0
      %2467 = vmatpush1.msra.mxu0 %v2431
      %2468 = vmatprep.subr.mxu0 0.0
      %2469 = vmatpush1.msra.mxu0 %v2430
      %2470 = vmatprep.subr.mxu0 0.0
      %2471 = vmatpush2.msra.mxu0 0.0
      %2472 = vmatprep.subr.mxu0 0.0
      %2473 = vmatpush2.msra.mxu0 0.0
      %2474 = vmatprep.subr.mxu0 0.0
      %2475 = vmatpush2.msra.mxu0 0.0
      %2476 = vmatprep.subr.mxu0 0.0
      %2477 = vmatpush2.msra.mxu0 0.0
      %2478 = vmatprep.subr.mxu0 0.0
      %2479 = vmatpush2.msra.mxu0 0.0
      %2480 = vmatprep.subr.mxu0 0.0
      %2481 = vmatpush2.msra.mxu0 0.0
      %2482 = vmatprep.subr.mxu0 0.0
      %2483 = vmatpush2.msra.mxu0 0.0
      %2484 = vmatprep.subr.mxu0 0.0
      %2485 = vmatpush2.msra.mxu0 0.0
      %2486 = vmatprep.subr.mxu0 0.0
      %2487 = vmatpush2.msra.mxu0 0.0
      %2488 = vmatprep.subr.mxu0 0.0
      %2489 = vmatpush2.msra.mxu0 0.0
      %2490 = vmatprep.subr.mxu0 0.0
      %2491 = vmatpush2.msra.mxu0 0.0
      %2492 = vmatprep.subr.mxu0 0.0
      %2493 = vmatpush2.msra.mxu0 0.0
      %2494 = vmatprep.subr.mxu0 0.0
      %2495 = vmatpush2.msra.mxu0 0.0
      %2496 = vmatprep.subr.mxu0 0.0
      %2497 = vmatpush2.msra.mxu0 0.0
      %2498 = vmatprep.subr.mxu0 0.0
      %2499 = vmatpush2.msra.mxu0 0.0
      %2500 = vmatprep.subr.mxu0 0.0
      %2501 = vmatpush2.msra.mxu0 0.0
      %2502 = vmatprep.mubr.f32.mxu0 0.0
      %2503 = vmatmul.mubr.f32.gmra.mxu0 %v2034
      %v2504 = vpop.f32.mrf.mxu0
      %v2505 = vadd.f32 0.0, %v2504
      %v2506 = vpop.f32.mrf.mxu0
      %2507 = vdwg.mxu0
      %v2508 = vsel %vm492, %v2418, 0
      %2510 = vmatprep.subr.mxu0 0.0
      %2511 = vmatpush1.msra.mxu0 0.0
      %2512 = vmatprep.subr.mxu0 0.0
      %2513 = vmatpush1.msra.mxu0 0.0
      %2514 = vmatprep.subr.mxu0 0.0
      %2515 = vmatpush1.msra.mxu0 0.0
      %2516 = vmatprep.subr.mxu0 0.0
      %2517 = vmatpush1.msra.mxu0 0.0
      %2518 = vmatprep.subr.mxu0 0.0
      %2519 = vmatpush1.msra.mxu0 0.0
      %2520 = vmatprep.subr.mxu0 0.0
      %2521 = vmatpush1.msra.mxu0 0.0
      %2522 = vmatprep.subr.mxu0 0.0
      %2523 = vmatpush1.msra.mxu0 0.0
      %2524 = vmatprep.subr.mxu0 0.0
      %2525 = vmatpush1.msra.mxu0 0.0
      %2526 = vmatprep.subr.mxu0 0.0
      %2527 = vmatpush1.msra.mxu0 0.0
      %2528 = vmatprep.subr.mxu0 0.0
      %2529 = vmatpush1.msra.mxu0 0.0
      %2530 = vmatprep.subr.mxu0 0.0
      %2531 = vmatpush1.msra.mxu0 0.0
      %2532 = vmatprep.subr.mxu0 0.0
      %2533 = vmatpush1.msra.mxu0 0.0
      %2534 = vmatprep.subr.mxu0 0.0
      %2535 = vmatpush1.msra.mxu0 %v2429
      %2536 = vmatprep.subr.mxu0 0.0
      %2537 = vmatpush1.msra.mxu0 %v2428
      %2538 = vmatprep.subr.mxu0 0.0
      %2539 = vmatpush1.msra.mxu0 %v2427
      %2540 = vmatprep.subr.mxu0 0.0
      %2541 = vmatpush1.msra.mxu0 %v2426
      %2542 = vmatprep.subr.mxu0 0.0
      %2543 = vmatpush2.msra.mxu0 0.0
      %2544 = vmatprep.subr.mxu0 0.0
      %2545 = vmatpush2.msra.mxu0 0.0
      %2546 = vmatprep.subr.mxu0 0.0
      %2547 = vmatpush2.msra.mxu0 0.0
      %2548 = vmatprep.subr.mxu0 0.0
      %2549 = vmatpush2.msra.mxu0 0.0
      %2550 = vmatprep.subr.mxu0 0.0
      %2551 = vmatpush2.msra.mxu0 0.0
      %2552 = vmatprep.subr.mxu0 0.0
      %2553 = vmatpush2.msra.mxu0 0.0
      %2554 = vmatprep.subr.mxu0 0.0
      %2555 = vmatpush2.msra.mxu0 0.0
      %2556 = vmatprep.subr.mxu0 0.0
      %2557 = vmatpush2.msra.mxu0 0.0
      %2558 = vmatprep.subr.mxu0 0.0
      %2559 = vmatpush2.msra.mxu0 0.0
      %2560 = vmatprep.subr.mxu0 0.0
      %2561 = vmatpush2.msra.mxu0 0.0
      %2562 = vmatprep.subr.mxu0 0.0
      %2563 = vmatpush2.msra.mxu0 0.0
      %2564 = vmatprep.subr.mxu0 0.0
      %2565 = vmatpush2.msra.mxu0 0.0
      %2566 = vmatprep.subr.mxu0 0.0
      %2567 = vmatpush2.msra.mxu0 0.0
      %2568 = vmatprep.subr.mxu0 0.0
      %2569 = vmatpush2.msra.mxu0 0.0
      %2570 = vmatprep.subr.mxu0 0.0
      %2571 = vmatpush2.msra.mxu0 0.0
      %2572 = vmatprep.subr.mxu0 0.0
      %2573 = vmatpush2.msra.mxu0 0.0
      %2574 = vmatprep.mubr.f32.mxu0 0.0
      %2575 = vmatmul.mubr.f32.gmra.mxu0 %v2508
      %v2576 = vpop.f32.mrf.mxu0
      %v2577 = vadd.f32 %v2505, %v2576
      %v2578 = vpop.f32.mrf.mxu0
      %2579 = vdwg.mxu0
      %v2580 = vld [vmem:[%s13] sm:$0x1]
      %v2582 = vlaneseq
      %v2583 = vshrl.u32 %v2582, 7
      %v2584 = vsub.s32 0, %v2583
      %v2585 = vrot.slane %v2580, %v2584
      %v2587 = vadd.f32 %v2577, %v2585
      %2588 = vst [vmem:[%s462] sm:$0xff] %v2587
      %p2589 = scmp.lt.s32.totalorder %s25, 7
      %s2590 = scalar_select %p2589, %s25, 7
      %s2591 = smul.addr %s2590, 8
      %s2592 = scalar_lea.vmem %s14, %s2591
      // Predicated region
      $region81: #{punc_las_forward.7} parent=75 // pred_check
        %p2593 = pneg %p342
      $region82: #{punc_las_forward.7} parent=75 // pred_check_branch
        %2595 = sbr.rel (%p2593) target = $region84
      $region83: #{punc_las_forward.7} parent=75 // pred_region
        _
      $region84: #{punc_las_forward.7} parent=75 // pred_fallthru
        _
    $region76: #{punc_las_forward.7} parent=5 // pred_fallthru
      _
    %p2596 = scmp.le.s32.totalorder 2, %s20
    // Predicated region
    $region85: #{punc_las_forward.7} parent=5 // pred_check
      %p2597 = pneg %p2596
    $region86: #{punc_las_forward.7} parent=5 // pred_check_branch
      %2599 = sbr.rel (%p2597) target = $region88
    $region87: #{punc_las_forward.7} parent=5 // pred_region
      %s2600 = ssub.s32 %s20, 2
      // Predicated region
      $region89: #{punc_las_forward.7} parent=87 // pred_check
        %p2601 = pneg %p348
      $region90: #{punc_las_forward.7} parent=87 // pred_check_branch
        %2603 = sbr.rel (%p2601) target = $region92
      $region91: #{punc_las_forward.7} parent=87 // pred_region
        %p2604 = scmp.lt.s32.totalorder %s26, 7
        %s2605 = scalar_select %p2604, %s26, 7
        %s2606 = smul.addr %s2605, 8
        %s2607 = scalar_lea.vmem %s14, %s2606
      $region92: #{punc_las_forward.7} parent=87 // pred_fallthru
        _
    $region88: #{punc_las_forward.7} parent=5 // pred_fallthru
      _
  $region6: #{punc_las_forward.7} parent=0 // loop_footer
    %s24 = sadd.s32 1, %s20
  $region7: #{punc_las_forward.7} parent=0 // loop_footer_branch
    %19 = sbr.rel target = $region3
  $region8: #{punc_las_forward.7} parent=0 // loop_exit
    _

</llo_original>
